<compile_context>
chip_gen: v5e
topology: v5e:2x2
jax: 0.10.0
libtpu: 0.0.40
codegen_flags: <defaults>
</compile_context>

<pallas_src>
import numpy as np
import jax
import jax.numpy as jnp
from jax import lax
from jax.experimental import pallas as pl
from jax.experimental.pallas import tpu as pltpu

F32 = jnp.float32
BF16 = jnp.bfloat16
BATCH_TILE = 32   # images per grid step (>=8, multiple of 8)


# ----------------------------------------------------------------------------
# Fused kernel: conv1 -> pool1 -> conv2 -> pool2 -> composed fc   (no RMW accs)
# ----------------------------------------------------------------------------
def _lenet_fused_kernel(x_ref, r1_ref, r2_ref, rfc_ref, bfc_ref, out_ref):
    TB = out_ref.shape[0]

    # ---- conv1 (+bias, +const channel) : one MXU matmul, K=128, N=512.
    # x_ref rows = (b, ii) with ii the pooled row; lanes pack the 4 padded
    # image rows 2*ii+di (di=0..3) needed by the 2x2 output block.
    y1 = jnp.dot(x_ref[...], r1_ref[...],
                 preferred_element_type=jnp.float32)           # (TB*14, 512)

    # ---- pool1: the 4 pooling candidates live in 4 aligned 128-lane quarters.
    p1 = jnp.maximum(jnp.maximum(y1[:, 0:128], y1[:, 128:256]),
                     jnp.maximum(y1[:, 256:384], y1[:, 384:512]))
    p1 = p1.astype(BF16).reshape(TB, 14, 128)                  # lane = 8*jj + c

    # ---- conv2 (+bias): im2col over the 5 kernel rows concatenated along K,
    # then ONE matmul (MXU accumulates over K=640 internally).
    lhs2 = jnp.concatenate([p1[:, ki:ki + 10, :] for ki in range(5)],
                           axis=-1)                            # (TB, 10, 640)
    y2 = jnp.dot(lhs2.reshape(TB * 10, 640), r2_ref[...],
                 preferred_element_type=jnp.float32)           # (TB*10, 256)

    # ---- pool2: row pairs via a tiny reshape-max, column pairs are packed
    # into the two aligned 128-lane halves of the conv2 output.
    m = jnp.max(y2.reshape(TB, 5, 2, 256), axis=2)             # (TB, 5, 256)
    p2 = jnp.maximum(m[..., 0:128], m[..., 128:256]).astype(BF16)  # (TB,5,128)

    # ---- fc1∘fc2∘fc3 composed offline -> single matmul (400 -> 10).
    lhsf = jnp.concatenate([p2[:, i, :] for i in range(5)], axis=-1)  # (TB,640)
    h = jnp.dot(lhsf, rfc_ref[...],
                preferred_element_type=jnp.float32)            # (TB, 128)
    out_ref[...] = (h + bfc_ref[...]).astype(out_ref.dtype)


# ----------------------------------------------------------------------------
# One-time weight repacking (banded matmul weights, biases folded, fc composed)
# ----------------------------------------------------------------------------
def prepare_params(params):
    w1 = np.asarray(params["w_conv1"], np.float32)    # (6,1,3,3)
    b1 = np.asarray(params["b_conv1"], np.float32)    # (6,)
    w2 = np.asarray(params["w_conv2"], np.float32)    # (16,6,5,5)
    b2 = np.asarray(params["b_conv2"], np.float32)    # (16,)
    wf1 = np.asarray(params["w_fc1"], np.float32); bf1 = np.asarray(params["b_fc1"], np.float32)
    wf2 = np.asarray(params["w_fc2"], np.float32); bf2 = np.asarray(params["b_fc2"], np.float32)
    wf3 = np.asarray(params["w_fc3"], np.float32); bf3 = np.asarray(params["b_fc3"], np.float32)

    # conv1 banded weight: rows = LHS lane (di*32 + j', const at lane 30),
    # cols = ip*256 + jp*128 + jj*8 + o  (output (2*ii+ip, 2*jj+jp, o)).
    R1 = np.zeros((128, 512), np.float32)
    for ip in range(2):
        for jp in range(2):
            base = ip * 256 + jp * 128
            for jj in range(14):
                j = 2 * jj + jp
                for o in range(6):
                    col = base + jj * 8 + o
                    for ki in range(3):
                        di = ki + ip
                        for dj in range(3):
                            R1[di * 32 + (j + dj), col] = w1[o, 0, ki, dj]
                    R1[30, col] = b1[o]            # bias via constant-1 lane
                R1[30, base + jj * 8 + 6] = 1.0    # constant-1 output channel

    # conv2 banded weight: rows = ki*128 + 8*jj + c (c=6 is the const channel),
    # cols = jp2*128 + J2*16 + o  (output column j2 = 2*J2 + jp2).
    R2 = np.zeros((640, 256), np.float32)
    for jp2 in range(2):
        for J2 in range(5):
            j2 = 2 * J2 + jp2
            for o in range(16):
                col = jp2 * 128 + J2 * 16 + o
                for ki in range(5):
                    for kj in range(5):
                        jj = j2 + kj
                        for c in range(6):
                            R2[ki * 128 + 8 * jj + c, col] = w2[o, c, ki, kj]
                R2[8 * j2 + 6, col] = b2[o]        # bias via constant channel

    # Composed fc (no activations in the reference): W = wf3 @ wf2 @ wf1.
    Wc = wf3 @ wf2 @ wf1                            # (10, 400)
    bc = wf3 @ (wf2 @ bf1 + bf2) + bf3              # (10,)
    Rfc = np.zeros((640, 128), np.float32)
    for i in range(5):
        for j in range(5):
            for c in range(16):
                # torch NCHW flatten: f = c*25 + i*5 + j ; our lane = i*128+16*j+c
                Rfc[i * 128 + 16 * j + c, :10] = Wc[:, c * 25 + i * 5 + j]
    bfc = np.zeros((1, 128), np.float32)
    bfc[0, :10] = bc

    return dict(
        r1=jnp.asarray(R1, dtype=BF16),
        r2=jnp.asarray(R2, dtype=BF16),
        rfc=jnp.asarray(Rfc, dtype=BF16),
        bfc=jnp.asarray(bfc, dtype=F32),
    )


# ----------------------------------------------------------------------------
# Wrapper-side conv1 im2col (pure layout plumbing, done by XLA once per batch)
# ----------------------------------------------------------------------------
def _build_conv1_lhs(x, N_pad):
    N = x.shape[0]
    img = jnp.squeeze(x, axis=1)                                  # (N,28,28)
    img = jnp.pad(img, ((0, N_pad - N), (1, 1), (1, 1)))          # (N_pad,30,30)
    blocks = []
    for di in range(4):
        blk = img[:, di:di + 27:2, :]                             # rows 2*ii+di -> (N_pad,14,30)
        if di == 0:
            pad = jnp.concatenate(
                [jnp.ones((N_pad, 14, 1), img.dtype),             # constant-1 lane (bias)
                 jnp.zeros((N_pad, 14, 1), img.dtype)], axis=-1)
        else:
            pad = jnp.zeros((N_pad, 14, 2), img.dtype)
        blocks.append(jnp.concatenate([blk, pad], axis=-1))       # (N_pad,14,32)
    lhs = jnp.concatenate(blocks, axis=-1).astype(BF16)           # (N_pad,14,128)
    return lhs.reshape(N_pad * 14, 128)


# ----------------------------------------------------------------------------
# Forward pass: one pallas_call, grid tiled over the batch.
# ----------------------------------------------------------------------------
def lenet_forward(prepared, x):
    N = x.shape[0]
    TB = min(BATCH_TILE, ((N + 7) // 8) * 8)
    N_pad = ((N + TB - 1) // TB) * TB

    lhs1 = _build_conv1_lhs(x, N_pad)          # (N_pad*14, 128) bf16

    p = prepared
    full2 = lambda a: pl.BlockSpec(a.shape, lambda i: (0, 0))

    out = pl.pallas_call(
        _lenet_fused_kernel,
        out_shape=jax.ShapeDtypeStruct((N_pad, 128), jnp.float32),
        grid=(N_pad // TB,),
        in_specs=[
            pl.BlockSpec((TB * 14, 128), lambda i: (i, 0)),
            full2(p["r1"]), full2(p["r2"]), full2(p["rfc"]), full2(p["bfc"]),
        ],
        out_specs=pl.BlockSpec((TB, 128), lambda i: (i, 0)),
        compiler_params=pltpu.CompilerParams(
            dimension_semantics=("parallel",),
            vmem_limit_bytes=48 * 1024 * 1024,   # fits v7x's 64 MiB/TC
        ),
    )(lhs1, p["r1"], p["r2"], p["rfc"], p["bfc"])

    return out[:N, :10]


# ----------------------------------------------------------------------------
# Parameter init (deterministic, PyTorch-default-like uniform(-1/sqrt(fan_in)))
# ----------------------------------------------------------------------------
def init_params(key):
    def u(key, shape, fan_in):
        bound = 1.0 / jnp.sqrt(float(fan_in))
        return jax.random.uniform(key, shape, F32, -bound, bound)

    ks = jax.random.split(key, 10)
    return {
        "w_conv1": u(ks[0], (6, 1, 3, 3), 9),    "b_conv1": u(ks[1], (6,), 9),
        "w_conv2": u(ks[2], (16, 6, 5, 5), 150), "b_conv2": u(ks[3], (16,), 150),
        "w_fc1": u(ks[4], (120, 400), 400),      "b_fc1": u(ks[5], (120,), 400),
        "w_fc2": u(ks[6], (84, 120), 120),       "b_fc2": u(ks[7], (84,), 120),
        "w_fc3": u(ks[8], (10, 84), 84),         "b_fc3": u(ks[9], (10,), 84),
    }


# Pure-JAX f32 reference for the correctness cross-check.
def lenet_reference(params, x):
    dn = ("NCHW", "OIHW", "NCHW")
    y = lax.conv_general_dilated(x, params["w_conv1"], (1, 1), [(1, 1), (1, 1)],
                                 dimension_numbers=dn)
    y = y + params["b_conv1"].reshape(1, -1, 1, 1)
    y = lax.reduce_window(y, -jnp.inf, lax.max, (1, 1, 2, 2), (1, 1, 2, 2), "VALID")
    y = lax.conv_general_dilated(y, params["w_conv2"], (1, 1), "VALID",
                                 dimension_numbers=dn)
    y = y + params["b_conv2"].reshape(1, -1, 1, 1)
    y = lax.reduce_window(y, -jnp.inf, lax.max, (1, 1, 2, 2), (1, 1, 2, 2), "VALID")
    y = y.reshape(y.shape[0], -1)
    y = y @ params["w_fc1"].T + params["b_fc1"]
    y = y @ params["w_fc2"].T + params["b_fc2"]
    y = y @ params["w_fc3"].T + params["b_fc3"]
    return y


if __name__ == "__main__":
    key = jax.random.PRNGKey(0)
    k_param, k_x = jax.random.split(key)
    params = init_params(k_param)
    # fc1 expects 400 = 16*5*5 features => input is (N, 1, 28, 28).
    x = jax.random.normal(k_x, (2, 1, 28, 28), dtype=F32)

    prepared = prepare_params(params)        # one-time weight repack / fc composition
    fwd = jax.jit(lenet_forward)
    out = jax.block_until_ready(fwd(prepared, x))
    assert out.shape == (2, 10), out.shape

    ref = jax.block_until_ready(lenet_reference(params, x))
    max_err = float(jnp.max(jnp.abs(out - ref)))
    # bf16 MXU operands with f32 accumulation: a few e-3 absolute error expected.
    assert jnp.allclose(out, ref, atol=5e-2, rtol=5e-2), ("mismatch vs reference", max_err)

    print("KERNEL_OK")
</pallas_src>

<mosaic_0001>
module attributes {stable_mosaic.version = 11 : i64} {
  func.func @_lenet_fused_kernel(%arg0: i32, %arg1: memref<112x128xbf16, #tpu.memory_space<vmem>>, %arg2: memref<128x512xbf16, #tpu.memory_space<vmem>>, %arg3: memref<640x256xbf16, #tpu.memory_space<vmem>>, %arg4: memref<640x128xbf16, #tpu.memory_space<vmem>>, %arg5: memref<1x128xf32, #tpu.memory_space<vmem>>, %arg6: memref<8x128xf32, #tpu.memory_space<vmem>>) attributes {dimension_semantics = [#tpu.dimension_semantics<parallel>], iteration_bounds = array<i64: 1>, scalar_prefetch = 0 : i64, scratch_operands = 0 : i64, tpu.core_type = #tpu.core_type<tc>, window_params = [{transform_indices = @transform_0, window_bounds = array<i64: 112, 128>}, {pipeline_mode = #tpu.pipeline_mode<synchronous>, transform_indices = @transform_1, window_bounds = array<i64: 128, 512>}, {pipeline_mode = #tpu.pipeline_mode<synchronous>, transform_indices = @transform_2, window_bounds = array<i64: 640, 256>}, {pipeline_mode = #tpu.pipeline_mode<synchronous>, transform_indices = @transform_3, window_bounds = array<i64: 640, 128>}, {pipeline_mode = #tpu.pipeline_mode<synchronous>, transform_indices = @transform_4, window_bounds = array<i64: 1, 128>}, {transform_indices = @transform_5, window_bounds = array<i64: 8, 128>}]} {
    %c0 = arith.constant 0 : index
    %c0_0 = arith.constant 0 : index
    %0 = vector.load %arg1[%c0, %c0_0] : memref<112x128xbf16, #tpu.memory_space<vmem>>, vector<112x128xbf16>
    %c0_1 = arith.constant 0 : index
    %c0_2 = arith.constant 0 : index
    %1 = vector.load %arg2[%c0_1, %c0_2] : memref<128x512xbf16, #tpu.memory_space<vmem>>, vector<128x512xbf16>
    %cst = arith.constant dense<0.000000e+00> : vector<112x512xf32>
    %2 = tpu.matmul %0, %1, %cst {dimension_numbers = #tpu.dot_dimension_numbers<[1], [0], [0], [1], [0, 0, 1, 1], [], []>} : vector<112x128xbf16>, vector<128x512xbf16>, vector<112x512xf32> -> vector<112x512xf32>
    %3 = vector.extract_strided_slice %2 {offsets = [0, 0], sizes = [112, 128], strides = [1, 1]} : vector<112x512xf32> to vector<112x128xf32>
    %4 = vector.extract_strided_slice %2 {offsets = [0, 128], sizes = [112, 128], strides = [1, 1]} : vector<112x512xf32> to vector<112x128xf32>
    %5 = arith.maximumf %3, %4 : vector<112x128xf32>
    %6 = vector.extract_strided_slice %2 {offsets = [0, 256], sizes = [112, 128], strides = [1, 1]} : vector<112x512xf32> to vector<112x128xf32>
    %7 = vector.extract_strided_slice %2 {offsets = [0, 384], sizes = [112, 128], strides = [1, 1]} : vector<112x512xf32> to vector<112x128xf32>
    %8 = arith.maximumf %6, %7 : vector<112x128xf32>
    %9 = arith.maximumf %5, %8 : vector<112x128xf32>
    %10 = arith.truncf %9 : vector<112x128xf32> to vector<112x128xbf16>
    %11 = vector.shape_cast %10 : vector<112x128xbf16> to vector<8x14x128xbf16>
    %12 = vector.extract_strided_slice %11 {offsets = [0, 0, 0], sizes = [8, 10, 128], strides = [1, 1, 1]} : vector<8x14x128xbf16> to vector<8x10x128xbf16>
    %13 = vector.extract_strided_slice %11 {offsets = [0, 1, 0], sizes = [8, 10, 128], strides = [1, 1, 1]} : vector<8x14x128xbf16> to vector<8x10x128xbf16>
    %14 = vector.extract_strided_slice %11 {offsets = [0, 2, 0], sizes = [8, 10, 128], strides = [1, 1, 1]} : vector<8x14x128xbf16> to vector<8x10x128xbf16>
    %15 = vector.extract_strided_slice %11 {offsets = [0, 3, 0], sizes = [8, 10, 128], strides = [1, 1, 1]} : vector<8x14x128xbf16> to vector<8x10x128xbf16>
    %16 = vector.extract_strided_slice %11 {offsets = [0, 4, 0], sizes = [8, 10, 128], strides = [1, 1, 1]} : vector<8x14x128xbf16> to vector<8x10x128xbf16>
    %17 = tpu.concatenate %12, %13, %14, %15, %16 in 2 : vector<8x10x128xbf16>, vector<8x10x128xbf16>, vector<8x10x128xbf16>, vector<8x10x128xbf16>, vector<8x10x128xbf16> -> vector<8x10x640xbf16>
    %18 = vector.shape_cast %17 : vector<8x10x640xbf16> to vector<80x640xbf16>
    %c0_3 = arith.constant 0 : index
    %c0_4 = arith.constant 0 : index
    %19 = vector.load %arg3[%c0_3, %c0_4] : memref<640x256xbf16, #tpu.memory_space<vmem>>, vector<640x256xbf16>
    %cst_5 = arith.constant dense<0.000000e+00> : vector<80x256xf32>
    %20 = tpu.matmul %18, %19, %cst_5 {dimension_numbers = #tpu.dot_dimension_numbers<[1], [0], [0], [1], [0, 0, 1, 1], [], []>} : vector<80x640xbf16>, vector<640x256xbf16>, vector<80x256xf32> -> vector<80x256xf32>
    %21 = vector.shape_cast %20 : vector<80x256xf32> to vector<8x5x2x256xf32>
    %cst_6 = arith.constant dense<0xFF800000> : vector<8x5x256xf32>
    %22 = vector.multi_reduction <maximumf>, %21, %cst_6 [2] : vector<8x5x2x256xf32> to vector<8x5x256xf32>
    %23 = vector.extract_strided_slice %22 {offsets = [0, 0, 0], sizes = [8, 5, 128], strides = [1, 1, 1]} : vector<8x5x256xf32> to vector<8x5x128xf32>
    %24 = vector.extract_strided_slice %22 {offsets = [0, 0, 128], sizes = [8, 5, 128], strides = [1, 1, 1]} : vector<8x5x256xf32> to vector<8x5x128xf32>
    %25 = arith.maximumf %23, %24 : vector<8x5x128xf32>
    %26 = arith.truncf %25 : vector<8x5x128xf32> to vector<8x5x128xbf16>
    %27 = vector.extract_strided_slice %26 {offsets = [0, 0, 0], sizes = [8, 1, 128], strides = [1, 1, 1]} : vector<8x5x128xbf16> to vector<8x1x128xbf16>
    %28 = vector.shape_cast %27 : vector<8x1x128xbf16> to vector<8x128xbf16>
    %29 = vector.extract_strided_slice %26 {offsets = [0, 1, 0], sizes = [8, 1, 128], strides = [1, 1, 1]} : vector<8x5x128xbf16> to vector<8x1x128xbf16>
    %30 = vector.shape_cast %29 : vector<8x1x128xbf16> to vector<8x128xbf16>
    %31 = vector.extract_strided_slice %26 {offsets = [0, 2, 0], sizes = [8, 1, 128], strides = [1, 1, 1]} : vector<8x5x128xbf16> to vector<8x1x128xbf16>
    %32 = vector.shape_cast %31 : vector<8x1x128xbf16> to vector<8x128xbf16>
    %33 = vector.extract_strided_slice %26 {offsets = [0, 3, 0], sizes = [8, 1, 128], strides = [1, 1, 1]} : vector<8x5x128xbf16> to vector<8x1x128xbf16>
    %34 = vector.shape_cast %33 : vector<8x1x128xbf16> to vector<8x128xbf16>
    %35 = vector.extract_strided_slice %26 {offsets = [0, 4, 0], sizes = [8, 1, 128], strides = [1, 1, 1]} : vector<8x5x128xbf16> to vector<8x1x128xbf16>
    %36 = vector.shape_cast %35 : vector<8x1x128xbf16> to vector<8x128xbf16>
    %37 = tpu.concatenate %28, %30, %32, %34, %36 in 1 : vector<8x128xbf16>, vector<8x128xbf16>, vector<8x128xbf16>, vector<8x128xbf16>, vector<8x128xbf16> -> vector<8x640xbf16>
    %c0_7 = arith.constant 0 : index
    %c0_8 = arith.constant 0 : index
    %38 = vector.load %arg4[%c0_7, %c0_8] : memref<640x128xbf16, #tpu.memory_space<vmem>>, vector<640x128xbf16>
    %cst_9 = arith.constant dense<0.000000e+00> : vector<8x128xf32>
    %39 = tpu.matmul %37, %38, %cst_9 {dimension_numbers = #tpu.dot_dimension_numbers<[1], [0], [0], [1], [0, 0, 1, 1], [], []>} : vector<8x640xbf16>, vector<640x128xbf16>, vector<8x128xf32> -> vector<8x128xf32>
    %c0_10 = arith.constant 0 : index
    %c0_11 = arith.constant 0 : index
    %40 = vector.load %arg5[%c0_10, %c0_11] : memref<1x128xf32, #tpu.memory_space<vmem>>, vector<1x128xf32>
    %41 = vector.broadcast %40 : vector<1x128xf32> to vector<8x128xf32>
    %42 = arith.addf %39, %41 : vector<8x128xf32>
    %c0_12 = arith.constant 0 : index
    %c0_13 = arith.constant 0 : index
    %43 = vector.load %arg6[%c0_12, %c0_13] : memref<8x128xf32, #tpu.memory_space<vmem>>, vector<8x128xf32>
    tpu.vector_store %arg6[%c0_12, %c0_13], %42 {strides = array<i32>} : memref<8x128xf32, #tpu.memory_space<vmem>>, vector<8x128xf32>,
    return
  }
  func.func @transform_0(%arg0: i32) -> (i32, i32) {
    %c0_i32 = arith.constant 0 : i32
    %c0_i32_0 = arith.constant 0 : i32
    return %arg0, %c0_i32 : i32, i32
  }
  func.func @transform_1(%arg0: i32) -> (i32, i32) {
    %c0_i32 = arith.constant 0 : i32
    %c0_i32_0 = arith.constant 0 : i32
    %c0_i32_1 = arith.constant 0 : i32
    return %c0_i32, %c0_i32_0 : i32, i32
  }
  func.func @transform_2(%arg0: i32) -> (i32, i32) {
    %c0_i32 = arith.constant 0 : i32
    %c0_i32_0 = arith.constant 0 : i32
    %c0_i32_1 = arith.constant 0 : i32
    return %c0_i32, %c0_i32_0 : i32, i32
  }
  func.func @transform_3(%arg0: i32) -> (i32, i32) {
    %c0_i32 = arith.constant 0 : i32
    %c0_i32_0 = arith.constant 0 : i32
    %c0_i32_1 = arith.constant 0 : i32
    return %c0_i32, %c0_i32_0 : i32, i32
  }
  func.func @transform_4(%arg0: i32) -> (i32, i32) {
    %c0_i32 = arith.constant 0 : i32
    %c0_i32_0 = arith.constant 0 : i32
    %c0_i32_1 = arith.constant 0 : i32
    return %c0_i32, %c0_i32_0 : i32, i32
  }
  func.func @transform_5(%arg0: i32) -> (i32, i32) {
    %c0_i32 = arith.constant 0 : i32
    %c0_i32_0 = arith.constant 0 : i32
    return %arg0, %c0_i32 : i32, i32
  }
}

</mosaic_0001>

<llo_original>
// kernel: lenet_forward.1
$region0: #{lenet_forward.1}
  #allocation0 [shape = 'u32[]', space=smem, size = 0x4, offset = 0x4, fixed_abs, tag = 'smem constant byte address 0x4 - core index']
  #allocation1 [shape = 'u32[72,128]{1,0:T(1,128)}', space=vmem, size = 0x9000, scoped, tag = 'internal scratch']
  %s0 = inlined_call_operand.vmem [shape: bf16[112,128], index: 0, kind: input, shape index: {}]
  %s1 = inlined_call_operand.vmem [shape: bf16[128,512], index: 1, kind: input, shape index: {}]
  %s2 = inlined_call_operand.vmem [shape: bf16[640,256], index: 2, kind: input, shape index: {}]
  %s3 = inlined_call_operand.vmem [shape: bf16[640,128], index: 3, kind: input, shape index: {}]
  %s4 = inlined_call_operand.vmem [shape: f32[1,128], index: 4, kind: input, shape index: {}]
  %s5 = inlined_call_operand.vmem [shape: f32[8,128], index: 5, kind: output, shape index: {}]
  %s6 = sld [smem:[#allocation0]]
  $region30: #{lenet_forward.1} parent=0
    _
  %s8 = ssub.s32 1, %s6
  %s9 = scalar_select 0, %s8, %s6
  // Predicated region
  $region2: #{lenet_forward.1} parent=0 // pred_check
    _
  $region3: #{lenet_forward.1} parent=0 // pred_check_branch
    %11 = sbr.rel (0) target = $region5
  $region4: #{lenet_forward.1} parent=0 // pred_region
    _
  $region5: #{lenet_forward.1} parent=0 // pred_fallthru
    _
  // Predicated region
  $region6: #{lenet_forward.1} parent=0 // pred_check
    _
  $region7: #{lenet_forward.1} parent=0 // pred_check_branch
    %13 = sbr.rel (0) target = $region9
  $region8: #{lenet_forward.1} parent=0 // pred_region
    _
  $region9: #{lenet_forward.1} parent=0 // pred_fallthru
    _
  // Predicated region
  $region10: #{lenet_forward.1} parent=0 // pred_check
    _
  $region11: #{lenet_forward.1} parent=0 // pred_check_branch
    %15 = sbr.rel (0) target = $region13
  $region12: #{lenet_forward.1} parent=0 // pred_region
    _
  $region13: #{lenet_forward.1} parent=0 // pred_fallthru
    _
  // Predicated region
  $region14: #{lenet_forward.1} parent=0 // pred_check
    _
  $region15: #{lenet_forward.1} parent=0 // pred_check_branch
    %17 = sbr.rel (0) target = $region17
  $region16: #{lenet_forward.1} parent=0 // pred_region
    _
  $region17: #{lenet_forward.1} parent=0 // pred_fallthru
    _
  // Predicated region
  $region18: #{lenet_forward.1} parent=0 // pred_check
    _
  $region19: #{lenet_forward.1} parent=0 // pred_check_branch
    %19 = sbr.rel (0) target = $region21
  $region20: #{lenet_forward.1} parent=0 // pred_region
    _
  $region21: #{lenet_forward.1} parent=0 // pred_fallthru
    _
  %v20 = vld [vmem:[%s0] sm:$0xf]
  %v21 = vld [vmem:[%s0 + $0x4] sm:$0xf]
  %v22 = vld [vmem:[%s0 + $0x8] sm:$0xf]
  %v23 = vld [vmem:[%s0 + $0xc] sm:$0xf]
  %v24 = vld [vmem:[%s0 + $0x10] sm:$0xf]
  %v25 = vld [vmem:[%s0 + $0x14] sm:$0xf]
  %v26 = vld [vmem:[%s0 + $0x18] sm:$0xf]
  %v27 = vld [vmem:[%s0 + $0x1c] sm:$0xf]
  %v28 = vld [vmem:[%s0 + $0x20] sm:$0xf]
  %v29 = vld [vmem:[%s0 + $0x24] sm:$0xf]
  %v30 = vld [vmem:[%s0 + $0x28] sm:$0xf]
  %v31 = vld [vmem:[%s0 + $0x2c] sm:$0xf]
  %v32 = vld [vmem:[%s0 + $0x30] sm:$0xf]
  %v33 = vld [vmem:[%s0 + $0x34] sm:$0xf]
  %v34 = vld [vmem:[%s1] sm:$0xff]
  %v35 = vld [vmem:[%s1 + $0x8] sm:$0xff]
  %v36 = vld [vmem:[%s1 + $0x10] sm:$0xff]
  %v37 = vld [vmem:[%s1 + $0x18] sm:$0xff]
  %v38 = vld [vmem:[%s1 + $0x20] sm:$0xff]
  %v39 = vld [vmem:[%s1 + $0x28] sm:$0xff]
  %v40 = vld [vmem:[%s1 + $0x30] sm:$0xff]
  %v41 = vld [vmem:[%s1 + $0x38] sm:$0xff]
  %v42 = vld [vmem:[%s1 + $0x40] sm:$0xff]
  %v43 = vld [vmem:[%s1 + $0x48] sm:$0xff]
  %v44 = vld [vmem:[%s1 + $0x50] sm:$0xff]
  %v45 = vld [vmem:[%s1 + $0x58] sm:$0xff]
  %v46 = vld [vmem:[%s1 + $0x60] sm:$0xff]
  %v47 = vld [vmem:[%s1 + $0x68] sm:$0xff]
  %v48 = vld [vmem:[%s1 + $0x70] sm:$0xff]
  %v49 = vld [vmem:[%s1 + $0x78] sm:$0xff]
  %v50 = vld [vmem:[%s1 + $0x80] sm:$0xff]
  %v51 = vld [vmem:[%s1 + $0x88] sm:$0xff]
  %v52 = vld [vmem:[%s1 + $0x90] sm:$0xff]
  %v53 = vld [vmem:[%s1 + $0x98] sm:$0xff]
  %v54 = vld [vmem:[%s1 + $0xa0] sm:$0xff]
  %v55 = vld [vmem:[%s1 + $0xa8] sm:$0xff]
  %v56 = vld [vmem:[%s1 + $0xb0] sm:$0xff]
  %v57 = vld [vmem:[%s1 + $0xb8] sm:$0xff]
  %v58 = vld [vmem:[%s1 + $0xc0] sm:$0xff]
  %v59 = vld [vmem:[%s1 + $0xc8] sm:$0xff]
  %v60 = vld [vmem:[%s1 + $0xd0] sm:$0xff]
  %v61 = vld [vmem:[%s1 + $0xd8] sm:$0xff]
  %v62 = vld [vmem:[%s1 + $0xe0] sm:$0xff]
  %v63 = vld [vmem:[%s1 + $0xe8] sm:$0xff]
  %v64 = vld [vmem:[%s1 + $0xf0] sm:$0xff]
  %v65 = vld [vmem:[%s1 + $0xf8] sm:$0xff]
  %v80 = vunpack.c.l.b16 %v20
  %v81 = vunpack.c.l.b16 %v21
  %v82 = vunpack.c.l.b16 %v22
  %v83 = vunpack.c.l.b16 %v23
  %v84 = vunpack.c.l.b16 %v24
  %v85 = vunpack.c.l.b16 %v25
  %v86 = vunpack.c.l.b16 %v26
  %v87 = vunpack.c.l.b16 %v27
  %v88 = vunpack.c.l.b16 %v28
  %v89 = vunpack.c.l.b16 %v29
  %v90 = vunpack.c.l.b16 %v30
  %v91 = vunpack.c.l.b16 %v31
  %v92 = vunpack.c.l.b16 %v32
  %v93 = vunpack.c.l.b16 %v33
  %v94 = vpack.c.b16 %v81, %v80
  %v95 = vpack.c.b16 %v83, %v82
  %v96 = vpack.c.b16 %v85, %v84
  %v97 = vpack.c.b16 %v87, %v86
  %v98 = vpack.c.b16 %v89, %v88
  %v99 = vpack.c.b16 %v91, %v90
  %v100 = vpack.c.b16 %v93, %v92
  %v140 = vunpack.c.l.b16 %v34
  %v141 = vunpack.c.h.b16 %v34
  %v142 = vunpack.c.l.b16 %v35
  %v143 = vunpack.c.h.b16 %v35
  %v144 = vunpack.c.l.b16 %v36
  %v145 = vunpack.c.h.b16 %v36
  %v146 = vunpack.c.l.b16 %v37
  %v147 = vunpack.c.h.b16 %v37
  %v148 = vunpack.c.l.b16 %v38
  %v149 = vunpack.c.h.b16 %v38
  %v150 = vunpack.c.l.b16 %v39
  %v151 = vunpack.c.h.b16 %v39
  %v152 = vunpack.c.l.b16 %v40
  %v153 = vunpack.c.h.b16 %v40
  %v154 = vunpack.c.l.b16 %v41
  %v155 = vunpack.c.h.b16 %v41
  %v156 = vunpack.c.l.b16 %v42
  %v157 = vunpack.c.h.b16 %v42
  %v158 = vunpack.c.l.b16 %v43
  %v159 = vunpack.c.h.b16 %v43
  %v160 = vunpack.c.l.b16 %v44
  %v161 = vunpack.c.h.b16 %v44
  %v162 = vunpack.c.l.b16 %v45
  %v163 = vunpack.c.h.b16 %v45
  %v164 = vunpack.c.l.b16 %v46
  %v165 = vunpack.c.h.b16 %v46
  %v166 = vunpack.c.l.b16 %v47
  %v167 = vunpack.c.h.b16 %v47
  %v168 = vunpack.c.l.b16 %v48
  %v169 = vunpack.c.h.b16 %v48
  %v170 = vunpack.c.l.b16 %v49
  %v171 = vunpack.c.h.b16 %v49
  %v172 = vunpack.c.l.b16 %v50
  %v173 = vunpack.c.h.b16 %v50
  %v174 = vunpack.c.l.b16 %v51
  %v175 = vunpack.c.h.b16 %v51
  %v176 = vunpack.c.l.b16 %v52
  %v177 = vunpack.c.h.b16 %v52
  %v178 = vunpack.c.l.b16 %v53
  %v179 = vunpack.c.h.b16 %v53
  %v180 = vunpack.c.l.b16 %v54
  %v181 = vunpack.c.h.b16 %v54
  %v182 = vunpack.c.l.b16 %v55
  %v183 = vunpack.c.h.b16 %v55
  %v184 = vunpack.c.l.b16 %v56
  %v185 = vunpack.c.h.b16 %v56
  %v186 = vunpack.c.l.b16 %v57
  %v187 = vunpack.c.h.b16 %v57
  %v188 = vunpack.c.l.b16 %v58
  %v189 = vunpack.c.h.b16 %v58
  %v190 = vunpack.c.l.b16 %v59
  %v191 = vunpack.c.h.b16 %v59
  %v192 = vunpack.c.l.b16 %v60
  %v193 = vunpack.c.h.b16 %v60
  %v194 = vunpack.c.l.b16 %v61
  %v195 = vunpack.c.h.b16 %v61
  %v196 = vunpack.c.l.b16 %v62
  %v197 = vunpack.c.h.b16 %v62
  %v198 = vunpack.c.l.b16 %v63
  %v199 = vunpack.c.h.b16 %v63
  %v200 = vunpack.c.l.b16 %v64
  %v201 = vunpack.c.h.b16 %v64
  %v202 = vunpack.c.l.b16 %v65
  %v203 = vunpack.c.h.b16 %v65
  %v204 = vpack.c.b16 %v144, %v140
  %v205 = vpack.c.b16 %v145, %v141
  %v206 = vpack.c.b16 %v146, %v142
  %v207 = vpack.c.b16 %v147, %v143
  %v208 = vpack.c.b16 %v152, %v148
  %v209 = vpack.c.b16 %v153, %v149
  %v210 = vpack.c.b16 %v154, %v150
  %v211 = vpack.c.b16 %v155, %v151
  %v212 = vpack.c.b16 %v160, %v156
  %v213 = vpack.c.b16 %v161, %v157
  %v214 = vpack.c.b16 %v162, %v158
  %v215 = vpack.c.b16 %v163, %v159
  %v216 = vpack.c.b16 %v168, %v164
  %v217 = vpack.c.b16 %v169, %v165
  %v218 = vpack.c.b16 %v170, %v166
  %v219 = vpack.c.b16 %v171, %v167
  %v220 = vpack.c.b16 %v176, %v172
  %v221 = vpack.c.b16 %v177, %v173
  %v222 = vpack.c.b16 %v178, %v174
  %v223 = vpack.c.b16 %v179, %v175
  %v224 = vpack.c.b16 %v184, %v180
  %v225 = vpack.c.b16 %v185, %v181
  %v226 = vpack.c.b16 %v186, %v182
  %v227 = vpack.c.b16 %v187, %v183
  %v228 = vpack.c.b16 %v192, %v188
  %v229 = vpack.c.b16 %v193, %v189
  %v230 = vpack.c.b16 %v194, %v190
  %v231 = vpack.c.b16 %v195, %v191
  %v232 = vpack.c.b16 %v200, %v196
  %v233 = vpack.c.b16 %v201, %v197
  %v234 = vpack.c.b16 %v202, %v198
  %v235 = vpack.c.b16 %v203, %v199
  %268 = vmatpush.bf16.msra.mxu0 %v232
  %269 = vmatpush.bf16.msra.mxu0 %v228
  %270 = vmatpush.bf16.msra.mxu0 %v224
  %271 = vmatpush.bf16.msra.mxu0 %v220
  %272 = vmatpush.bf16.msra.mxu0 %v216
  %273 = vmatpush.bf16.msra.mxu0 %v212
  %274 = vmatpush.bf16.msra.mxu0 %v208
  %275 = vmatpush.bf16.msra.mxu0 %v204
  %276 = vmatmul.bf16.gmra.mxu0 %v94
  %v277 = vpop.f32.mrf.mxu0
  %v278 = vadd.f32 0.0, %v277
  %v279 = vpop.f32.mrf.mxu0
  %v280 = vadd.f32 0.0, %v279
  %281 = vmatmul.bf16.gmra.mxu0 %v95
  %v282 = vpop.f32.mrf.mxu0
  %v283 = vadd.f32 0.0, %v282
  %v284 = vpop.f32.mrf.mxu0
  %v285 = vadd.f32 0.0, %v284
  %286 = vmatmul.bf16.gmra.mxu0 %v96
  %v287 = vpop.f32.mrf.mxu0
  %v288 = vadd.f32 0.0, %v287
  %v289 = vpop.f32.mrf.mxu0
  %v290 = vadd.f32 0.0, %v289
  %291 = vmatmul.bf16.gmra.mxu0 %v97
  %v292 = vpop.f32.mrf.mxu0
  %v293 = vadd.f32 0.0, %v292
  %v294 = vpop.f32.mrf.mxu0
  %v295 = vadd.f32 0.0, %v294
  %296 = vmatmul.bf16.gmra.mxu0 %v98
  %v297 = vpop.f32.mrf.mxu0
  %v298 = vadd.f32 0.0, %v297
  %v299 = vpop.f32.mrf.mxu0
  %v300 = vadd.f32 0.0, %v299
  %301 = vmatmul.bf16.gmra.mxu0 %v99
  %v302 = vpop.f32.mrf.mxu0
  %v303 = vadd.f32 0.0, %v302
  %v304 = vpop.f32.mrf.mxu0
  %v305 = vadd.f32 0.0, %v304
  %306 = vmatmul.bf16.gmra.mxu0 %v100
  %v307 = vpop.f32.mrf.mxu0
  %v308 = vadd.f32 0.0, %v307
  %v309 = vpop.f32.mrf.mxu0
  %v310 = vadd.f32 0.0, %v309
  %311 = vdwg.mxu0
  %312 = vmatpush.bf16.msra.mxu0 %v233
  %313 = vmatpush.bf16.msra.mxu0 %v229
  %314 = vmatpush.bf16.msra.mxu0 %v225
  %315 = vmatpush.bf16.msra.mxu0 %v221
  %316 = vmatpush.bf16.msra.mxu0 %v217
  %317 = vmatpush.bf16.msra.mxu0 %v213
  %318 = vmatpush.bf16.msra.mxu0 %v209
  %319 = vmatpush.bf16.msra.mxu0 %v205
  %320 = vmatmul.bf16.gmra.mxu0 %v94
  %v321 = vpop.f32.mrf.mxu0
  %v322 = vadd.f32 0.0, %v321
  %v323 = vpop.f32.mrf.mxu0
  %v324 = vadd.f32 0.0, %v323
  %325 = vmatmul.bf16.gmra.mxu0 %v95
  %v326 = vpop.f32.mrf.mxu0
  %v327 = vadd.f32 0.0, %v326
  %v328 = vpop.f32.mrf.mxu0
  %v329 = vadd.f32 0.0, %v328
  %330 = vmatmul.bf16.gmra.mxu0 %v96
  %v331 = vpop.f32.mrf.mxu0
  %v332 = vadd.f32 0.0, %v331
  %v333 = vpop.f32.mrf.mxu0
  %v334 = vadd.f32 0.0, %v333
  %335 = vmatmul.bf16.gmra.mxu0 %v97
  %v336 = vpop.f32.mrf.mxu0
  %v337 = vadd.f32 0.0, %v336
  %v338 = vpop.f32.mrf.mxu0
  %v339 = vadd.f32 0.0, %v338
  %340 = vmatmul.bf16.gmra.mxu0 %v98
  %v341 = vpop.f32.mrf.mxu0
  %v342 = vadd.f32 0.0, %v341
  %v343 = vpop.f32.mrf.mxu0
  %v344 = vadd.f32 0.0, %v343
  %345 = vmatmul.bf16.gmra.mxu0 %v99
  %v346 = vpop.f32.mrf.mxu0
  %v347 = vadd.f32 0.0, %v346
  %v348 = vpop.f32.mrf.mxu0
  %v349 = vadd.f32 0.0, %v348
  %350 = vmatmul.bf16.gmra.mxu0 %v100
  %v351 = vpop.f32.mrf.mxu0
  %v352 = vadd.f32 0.0, %v351
  %v353 = vpop.f32.mrf.mxu0
  %v354 = vadd.f32 0.0, %v353
  %355 = vdwg.mxu0
  %356 = vmatpush.bf16.msra.mxu0 %v234
  %357 = vmatpush.bf16.msra.mxu0 %v230
  %358 = vmatpush.bf16.msra.mxu0 %v226
  %359 = vmatpush.bf16.msra.mxu0 %v222
  %360 = vmatpush.bf16.msra.mxu0 %v218
  %361 = vmatpush.bf16.msra.mxu0 %v214
  %362 = vmatpush.bf16.msra.mxu0 %v210
  %363 = vmatpush.bf16.msra.mxu0 %v206
  %364 = vmatmul.bf16.gmra.mxu0 %v94
  %v365 = vpop.f32.mrf.mxu0
  %v366 = vadd.f32 0.0, %v365
  %v367 = vpop.f32.mrf.mxu0
  %v368 = vadd.f32 0.0, %v367
  %369 = vmatmul.bf16.gmra.mxu0 %v95
  %v370 = vpop.f32.mrf.mxu0
  %v371 = vadd.f32 0.0, %v370
  %v372 = vpop.f32.mrf.mxu0
  %v373 = vadd.f32 0.0, %v372
  %374 = vmatmul.bf16.gmra.mxu0 %v96
  %v375 = vpop.f32.mrf.mxu0
  %v376 = vadd.f32 0.0, %v375
  %v377 = vpop.f32.mrf.mxu0
  %v378 = vadd.f32 0.0, %v377
  %379 = vmatmul.bf16.gmra.mxu0 %v97
  %v380 = vpop.f32.mrf.mxu0
  %v381 = vadd.f32 0.0, %v380
  %v382 = vpop.f32.mrf.mxu0
  %v383 = vadd.f32 0.0, %v382
  %384 = vmatmul.bf16.gmra.mxu0 %v98
  %v385 = vpop.f32.mrf.mxu0
  %v386 = vadd.f32 0.0, %v385
  %v387 = vpop.f32.mrf.mxu0
  %v388 = vadd.f32 0.0, %v387
  %389 = vmatmul.bf16.gmra.mxu0 %v99
  %v390 = vpop.f32.mrf.mxu0
  %v391 = vadd.f32 0.0, %v390
  %v392 = vpop.f32.mrf.mxu0
  %v393 = vadd.f32 0.0, %v392
  %394 = vmatmul.bf16.gmra.mxu0 %v100
  %v395 = vpop.f32.mrf.mxu0
  %v396 = vadd.f32 0.0, %v395
  %v397 = vpop.f32.mrf.mxu0
  %v398 = vadd.f32 0.0, %v397
  %399 = vdwg.mxu0
  %400 = vmatpush.bf16.msra.mxu0 %v235
  %401 = vmatpush.bf16.msra.mxu0 %v231
  %402 = vmatpush.bf16.msra.mxu0 %v227
  %403 = vmatpush.bf16.msra.mxu0 %v223
  %404 = vmatpush.bf16.msra.mxu0 %v219
  %405 = vmatpush.bf16.msra.mxu0 %v215
  %406 = vmatpush.bf16.msra.mxu0 %v211
  %407 = vmatpush.bf16.msra.mxu0 %v207
  %408 = vmatmul.bf16.gmra.mxu0 %v94
  %v409 = vpop.f32.mrf.mxu0
  %v410 = vadd.f32 0.0, %v409
  %v411 = vpop.f32.mrf.mxu0
  %v412 = vadd.f32 0.0, %v411
  %413 = vmatmul.bf16.gmra.mxu0 %v95
  %v414 = vpop.f32.mrf.mxu0
  %v415 = vadd.f32 0.0, %v414
  %v416 = vpop.f32.mrf.mxu0
  %v417 = vadd.f32 0.0, %v416
  %418 = vmatmul.bf16.gmra.mxu0 %v96
  %v419 = vpop.f32.mrf.mxu0
  %v420 = vadd.f32 0.0, %v419
  %v421 = vpop.f32.mrf.mxu0
  %v422 = vadd.f32 0.0, %v421
  %423 = vmatmul.bf16.gmra.mxu0 %v97
  %v424 = vpop.f32.mrf.mxu0
  %v425 = vadd.f32 0.0, %v424
  %v426 = vpop.f32.mrf.mxu0
  %v427 = vadd.f32 0.0, %v426
  %428 = vmatmul.bf16.gmra.mxu0 %v98
  %v429 = vpop.f32.mrf.mxu0
  %v430 = vadd.f32 0.0, %v429
  %v431 = vpop.f32.mrf.mxu0
  %v432 = vadd.f32 0.0, %v431
  %433 = vmatmul.bf16.gmra.mxu0 %v99
  %v434 = vpop.f32.mrf.mxu0
  %v435 = vadd.f32 0.0, %v434
  %v436 = vpop.f32.mrf.mxu0
  %v437 = vadd.f32 0.0, %v436
  %438 = vmatmul.bf16.gmra.mxu0 %v100
  %v439 = vpop.f32.mrf.mxu0
  %v440 = vadd.f32 0.0, %v439
  %v441 = vpop.f32.mrf.mxu0
  %v442 = vadd.f32 0.0, %v441
  %443 = vdwg.mxu0
  %v444 = vmax.f32 %v278, %v322
  %v445 = vmax.f32 %v280, %v324
  %v446 = vmax.f32 %v283, %v327
  %v447 = vmax.f32 %v285, %v329
  %v448 = vmax.f32 %v288, %v332
  %v449 = vmax.f32 %v290, %v334
  %v450 = vmax.f32 %v293, %v337
  %v451 = vmax.f32 %v295, %v339
  %v452 = vmax.f32 %v298, %v342
  %v453 = vmax.f32 %v300, %v344
  %v454 = vmax.f32 %v303, %v347
  %v455 = vmax.f32 %v305, %v349
  %v456 = vmax.f32 %v308, %v352
  %v457 = vmax.f32 %v310, %v354
  %v458 = vmax.f32 %v366, %v410
  %v459 = vmax.f32 %v368, %v412
  %v460 = vmax.f32 %v371, %v415
  %v461 = vmax.f32 %v373, %v417
  %v462 = vmax.f32 %v376, %v420
  %v463 = vmax.f32 %v378, %v422
  %v464 = vmax.f32 %v381, %v425
  %v465 = vmax.f32 %v383, %v427
  %v466 = vmax.f32 %v386, %v430
  %v467 = vmax.f32 %v388, %v432
  %v468 = vmax.f32 %v391, %v435
  %v469 = vmax.f32 %v393, %v437
  %v470 = vmax.f32 %v396, %v440
  %v471 = vmax.f32 %v398, %v442
  %v472 = vmax.f32 %v444, %v458
  %v473 = vmax.f32 %v445, %v459
  %v474 = vmax.f32 %v446, %v460
  %v475 = vmax.f32 %v447, %v461
  %v476 = vmax.f32 %v448, %v462
  %v477 = vmax.f32 %v449, %v463
  %v478 = vmax.f32 %v450, %v464
  %v479 = vmax.f32 %v451, %v465
  %v480 = vmax.f32 %v452, %v466
  %v481 = vmax.f32 %v453, %v467
  %v482 = vmax.f32 %v454, %v468
  %v483 = vmax.f32 %v455, %v469
  %v484 = vmax.f32 %v456, %v470
  %v485 = vmax.f32 %v457, %v471
  %v486 = vpack.c.bf16 %v472, %v472
  %v487 = vpack.c.bf16 %v473, %v473
  %v488 = vpack.c.bf16 %v474, %v474
  %v489 = vpack.c.bf16 %v475, %v475
  %v490 = vpack.c.bf16 %v476, %v476
  %v491 = vpack.c.bf16 %v477, %v477
  %v492 = vpack.c.bf16 %v478, %v478
  %v493 = vpack.c.bf16 %v479, %v479
  %v494 = vpack.c.bf16 %v480, %v480
  %v495 = vpack.c.bf16 %v481, %v481
  %v496 = vpack.c.bf16 %v482, %v482
  %v497 = vpack.c.bf16 %v483, %v483
  %v498 = vpack.c.bf16 %v484, %v484
  %v499 = vpack.c.bf16 %v485, %v485
  %v514 = vrot.slane %v486, 3
  %v515 = vrot.slane %v487, 3
  %v516 = vrot.slane %v488, 3
  %v517 = vrot.slane %v489, 3
  %v518 = vrot.slane %v490, 3
  %v519 = vrot.slane %v491, 3
  %v520 = vrot.slane %v492, 3
  %v521 = vrot.slane %v493, 3
  %v522 = vrot.slane %v494, 3
  %v523 = vrot.slane %v495, 3
  %v524 = vrot.slane %v496, 3
  %v525 = vrot.slane %v497, 3
  %v526 = vrot.slane %v498, 3
  %v527 = vrot.slane %v499, 3
  %vm528 = vcmask 1040384
  %v531 = vsel %vm528, %v486, %v514
  %vm532 = vcmask 1041409
  %v533 = vsel %vm532, %v486, %v514
  %v535 = vrot.slane %v533, 1
  %vm536 = vcmask 1042434
  %v537 = vsel %vm536, %v486, %v514
  %v539 = vrot.slane %v537, 2
  %vm540 = vcmask 1043459
  %v541 = vsel %vm540, %v486, %v514
  %v543 = vrot.slane %v541, 3
  %v546 = vsel %vm528, %v487, %v515
  %v547 = vsel %vm532, %v487, %v515
  %v549 = vrot.slane %v547, 1
  %v550 = vsel %vm536, %v487, %v515
  %v552 = vrot.slane %v550, 2
  %v553 = vsel %vm540, %v487, %v515
  %v555 = vrot.slane %v553, 3
  %v558 = vsel %vm528, %v488, %v516
  %v559 = vsel %vm532, %v488, %v516
  %v561 = vrot.slane %v559, 1
  %v562 = vsel %vm536, %v488, %v516
  %v564 = vrot.slane %v562, 2
  %v565 = vsel %vm540, %v488, %v516
  %v567 = vrot.slane %v565, 3
  %v570 = vsel %vm528, %v489, %v517
  %v571 = vsel %vm532, %v489, %v517
  %v573 = vrot.slane %v571, 1
  %v574 = vsel %vm536, %v489, %v517
  %v576 = vrot.slane %v574, 2
  %v577 = vsel %vm540, %v489, %v517
  %v579 = vrot.slane %v577, 3
  %v582 = vsel %vm528, %v490, %v518
  %v583 = vsel %vm532, %v490, %v518
  %v585 = vrot.slane %v583, 1
  %v586 = vsel %vm536, %v490, %v518
  %v588 = vrot.slane %v586, 2
  %v589 = vsel %vm540, %v490, %v518
  %v591 = vrot.slane %v589, 3
  %v594 = vsel %vm528, %v491, %v519
  %v595 = vsel %vm532, %v491, %v519
  %v597 = vrot.slane %v595, 1
  %v598 = vsel %vm536, %v491, %v519
  %v600 = vrot.slane %v598, 2
  %v601 = vsel %vm540, %v491, %v519
  %v603 = vrot.slane %v601, 3
  %v606 = vsel %vm528, %v492, %v520
  %v607 = vsel %vm532, %v492, %v520
  %v609 = vrot.slane %v607, 1
  %v610 = vsel %vm536, %v492, %v520
  %v612 = vrot.slane %v610, 2
  %v613 = vsel %vm540, %v492, %v520
  %v615 = vrot.slane %v613, 3
  %v618 = vsel %vm528, %v493, %v521
  %v619 = vsel %vm532, %v493, %v521
  %v621 = vrot.slane %v619, 1
  %v622 = vsel %vm536, %v493, %v521
  %v624 = vrot.slane %v622, 2
  %v625 = vsel %vm540, %v493, %v521
  %v627 = vrot.slane %v625, 3
  %v630 = vsel %vm528, %v494, %v522
  %v631 = vsel %vm532, %v494, %v522
  %v633 = vrot.slane %v631, 1
  %v634 = vsel %vm536, %v494, %v522
  %v636 = vrot.slane %v634, 2
  %v637 = vsel %vm540, %v494, %v522
  %v639 = vrot.slane %v637, 3
  %v642 = vsel %vm528, %v495, %v523
  %v643 = vsel %vm532, %v495, %v523
  %v645 = vrot.slane %v643, 1
  %v646 = vsel %vm536, %v495, %v523
  %v648 = vrot.slane %v646, 2
  %v649 = vsel %vm540, %v495, %v523
  %v651 = vrot.slane %v649, 3
  %v654 = vsel %vm528, %v496, %v524
  %v655 = vsel %vm532, %v496, %v524
  %v657 = vrot.slane %v655, 1
  %v658 = vsel %vm536, %v496, %v524
  %v660 = vrot.slane %v658, 2
  %v661 = vsel %vm540, %v496, %v524
  %v663 = vrot.slane %v661, 3
  %v666 = vsel %vm528, %v497, %v525
  %v667 = vsel %vm532, %v497, %v525
  %v669 = vrot.slane %v667, 1
  %v670 = vsel %vm536, %v497, %v525
  %v672 = vrot.slane %v670, 2
  %v673 = vsel %vm540, %v497, %v525
  %v675 = vrot.slane %v673, 3
  %v678 = vsel %vm528, %v498, %v526
  %v679 = vsel %vm532, %v498, %v526
  %v681 = vrot.slane %v679, 1
  %v682 = vsel %vm536, %v498, %v526
  %v684 = vrot.slane %v682, 2
  %v685 = vsel %vm540, %v498, %v526
  %v687 = vrot.slane %v685, 3
  %v690 = vsel %vm528, %v499, %v527
  %v691 = vsel %vm532, %v499, %v527
  %v693 = vrot.slane %v691, 1
  %v694 = vsel %vm536, %v499, %v527
  %v696 = vrot.slane %v694, 2
  %v697 = vsel %vm540, %v499, %v527
  %v699 = vrot.slane %v697, 3
  %700 = vst [vmem:[#allocation1] ss:$9 sm:$0xff] %v531
  %s702 = scalar_lea.vmem [#allocation1], 1
  %703 = vst [vmem:[%s702] ss:$9 sm:$0xff] %v535
  %s705 = scalar_lea.vmem [#allocation1], 2
  %706 = vst [vmem:[%s705] ss:$9 sm:$0xff] %v539
  %s708 = scalar_lea.vmem [#allocation1], 3
  %709 = vst [vmem:[%s708] ss:$9 sm:$0xff] %v543
  %s710 = scalar_lea.vmem [#allocation1], 4
  %711 = vst [vmem:[%s710] ss:$9 sm:$0xff] %v546
  %v712 = vld [vmem:[#allocation1] sm:$0xff]
  %714 = vst [vmem:[#allocation1] ss:$9 sm:$0xff] %v555
  %715 = vst [vmem:[%s702] ss:$9 sm:$0xff] %v558
  %717 = vst [vmem:[%s705] ss:$9 sm:$0xff] %v561
  %719 = vst [vmem:[%s708] ss:$9 sm:$0xff] %v564
  %721 = vst [vmem:[%s710] ss:$9 sm:$0xff] %v567
  %v722 = vld [vmem:[#allocation1] sm:$0xff]
  %724 = vst [vmem:[#allocation1] ss:$9 sm:$0xff] %v576
  %726 = vst [vmem:[%s702] ss:$9 sm:$0xff] %v579
  %727 = vst [vmem:[%s705] ss:$9 sm:$0xff] %v582
  %729 = vst [vmem:[%s708] ss:$9 sm:$0xff] %v585
  %731 = vst [vmem:[%s710] ss:$9 sm:$0xff] %v588
  %v732 = vld [vmem:[#allocation1] sm:$0xff]
  %734 = vst [vmem:[#allocation1] ss:$9 sm:$0xff] %v597
  %736 = vst [vmem:[%s702] ss:$9 sm:$0xff] %v600
  %738 = vst [vmem:[%s705] ss:$9 sm:$0xff] %v603
  %739 = vst [vmem:[%s708] ss:$9 sm:$0xff] %v606
  %741 = vst [vmem:[%s710] ss:$9 sm:$0xff] %v609
  %v742 = vld [vmem:[#allocation1] sm:$0xff]
  %743 = vst [vmem:[#allocation1] ss:$9 sm:$0xff] %v618
  %745 = vst [vmem:[%s702] ss:$9 sm:$0xff] %v621
  %747 = vst [vmem:[%s705] ss:$9 sm:$0xff] %v624
  %749 = vst [vmem:[%s708] ss:$9 sm:$0xff] %v627
  %750 = vst [vmem:[%s710] ss:$9 sm:$0xff] %v630
  %v751 = vld [vmem:[#allocation1] sm:$0xff]
  %753 = vst [vmem:[#allocation1] ss:$9 sm:$0xff] %v639
  %754 = vst [vmem:[%s702] ss:$9 sm:$0xff] %v642
  %756 = vst [vmem:[%s705] ss:$9 sm:$0xff] %v645
  %758 = vst [vmem:[%s708] ss:$9 sm:$0xff] %v648
  %760 = vst [vmem:[%s710] ss:$9 sm:$0xff] %v651
  %v761 = vld [vmem:[#allocation1] sm:$0xff]
  %763 = vst [vmem:[#allocation1] ss:$9 sm:$0xff] %v660
  %765 = vst [vmem:[%s702] ss:$9 sm:$0xff] %v663
  %766 = vst [vmem:[%s705] ss:$9 sm:$0xff] %v666
  %768 = vst [vmem:[%s708] ss:$9 sm:$0xff] %v669
  %770 = vst [vmem:[%s710] ss:$9 sm:$0xff] %v672
  %v771 = vld [vmem:[#allocation1] sm:$0xff]
  %773 = vst [vmem:[#allocation1] ss:$9 sm:$0xff] %v681
  %775 = vst [vmem:[%s702] ss:$9 sm:$0xff] %v684
  %777 = vst [vmem:[%s705] ss:$9 sm:$0xff] %v687
  %778 = vst [vmem:[%s708] ss:$9 sm:$0xff] %v690
  %780 = vst [vmem:[%s710] ss:$9 sm:$0xff] %v693
  %v781 = vld [vmem:[#allocation1] sm:$0xff]
  %782 = vst [vmem:[#allocation1] ss:$9 sm:$0xff] %v531
  %s783 = scalar_lea.vmem [#allocation1], 1
  %784 = vst [vmem:[%s783] ss:$9 sm:$0xff] %v535
  %s785 = scalar_lea.vmem [#allocation1], 2
  %786 = vst [vmem:[%s785] ss:$9 sm:$0xff] %v539
  %s787 = scalar_lea.vmem [#allocation1], 3
  %788 = vst [vmem:[%s787] ss:$9 sm:$0xff] %v543
  %s789 = scalar_lea.vmem [#allocation1], 4
  %790 = vst [vmem:[%s789] ss:$9 sm:$0xff] %v546
  %s792 = scalar_lea.vmem [#allocation1], 5
  %793 = vst [vmem:[%s792] ss:$9 sm:$0xff] %v549
  %v794 = vld [vmem:[#allocation1] sm:$0xff]
  %795 = vst [vmem:[#allocation1] ss:$9 sm:$0xff] %v555
  %796 = vst [vmem:[%s783] ss:$9 sm:$0xff] %v558
  %797 = vst [vmem:[%s785] ss:$9 sm:$0xff] %v561
  %798 = vst [vmem:[%s787] ss:$9 sm:$0xff] %v564
  %799 = vst [vmem:[%s789] ss:$9 sm:$0xff] %v567
  %800 = vst [vmem:[%s792] ss:$9 sm:$0xff] %v570
  %v801 = vld [vmem:[#allocation1] sm:$0xff]
  %802 = vst [vmem:[#allocation1] ss:$9 sm:$0xff] %v576
  %803 = vst [vmem:[%s783] ss:$9 sm:$0xff] %v579
  %804 = vst [vmem:[%s785] ss:$9 sm:$0xff] %v582
  %805 = vst [vmem:[%s787] ss:$9 sm:$0xff] %v585
  %806 = vst [vmem:[%s789] ss:$9 sm:$0xff] %v588
  %808 = vst [vmem:[%s792] ss:$9 sm:$0xff] %v591
  %v809 = vld [vmem:[#allocation1] sm:$0xff]
  %810 = vst [vmem:[#allocation1] ss:$9 sm:$0xff] %v597
  %811 = vst [vmem:[%s783] ss:$9 sm:$0xff] %v600
  %812 = vst [vmem:[%s785] ss:$9 sm:$0xff] %v603
  %813 = vst [vmem:[%s787] ss:$9 sm:$0xff] %v606
  %814 = vst [vmem:[%s789] ss:$9 sm:$0xff] %v609
  %816 = vst [vmem:[%s792] ss:$9 sm:$0xff] %v612
  %v817 = vld [vmem:[#allocation1] sm:$0xff]
  %818 = vst [vmem:[#allocation1] ss:$9 sm:$0xff] %v618
  %819 = vst [vmem:[%s783] ss:$9 sm:$0xff] %v621
  %820 = vst [vmem:[%s785] ss:$9 sm:$0xff] %v624
  %821 = vst [vmem:[%s787] ss:$9 sm:$0xff] %v627
  %822 = vst [vmem:[%s789] ss:$9 sm:$0xff] %v630
  %824 = vst [vmem:[%s792] ss:$9 sm:$0xff] %v633
  %v825 = vld [vmem:[#allocation1] sm:$0xff]
  %826 = vst [vmem:[#allocation1] ss:$9 sm:$0xff] %v639
  %827 = vst [vmem:[%s783] ss:$9 sm:$0xff] %v642
  %828 = vst [vmem:[%s785] ss:$9 sm:$0xff] %v645
  %829 = vst [vmem:[%s787] ss:$9 sm:$0xff] %v648
  %830 = vst [vmem:[%s789] ss:$9 sm:$0xff] %v651
  %831 = vst [vmem:[%s792] ss:$9 sm:$0xff] %v654
  %v832 = vld [vmem:[#allocation1] sm:$0xff]
  %833 = vst [vmem:[#allocation1] ss:$9 sm:$0xff] %v660
  %834 = vst [vmem:[%s783] ss:$9 sm:$0xff] %v663
  %835 = vst [vmem:[%s785] ss:$9 sm:$0xff] %v666
  %836 = vst [vmem:[%s787] ss:$9 sm:$0xff] %v669
  %837 = vst [vmem:[%s789] ss:$9 sm:$0xff] %v672
  %839 = vst [vmem:[%s792] ss:$9 sm:$0xff] %v675
  %v840 = vld [vmem:[#allocation1] sm:$0xff]
  %841 = vst [vmem:[#allocation1] ss:$9 sm:$0xff] %v681
  %842 = vst [vmem:[%s783] ss:$9 sm:$0xff] %v684
  %843 = vst [vmem:[%s785] ss:$9 sm:$0xff] %v687
  %844 = vst [vmem:[%s787] ss:$9 sm:$0xff] %v690
  %845 = vst [vmem:[%s789] ss:$9 sm:$0xff] %v693
  %847 = vst [vmem:[%s792] ss:$9 sm:$0xff] %v696
  %v848 = vld [vmem:[#allocation1] sm:$0xff]
  %v849 = vshrl.u32 %v794, 16
  %v851 = vshll.u32 %v794, 16
  %v853 = vrot.slane %v851, 1
  %v854 = vor.u32 %v849, %v853
  %v855 = vshrl.u32 %v801, 16
  %v857 = vshll.u32 %v801, 16
  %v859 = vrot.slane %v857, 1
  %v860 = vor.u32 %v855, %v859
  %v861 = vshrl.u32 %v809, 16
  %v863 = vshll.u32 %v809, 16
  %v865 = vrot.slane %v863, 1
  %v866 = vor.u32 %v861, %v865
  %v867 = vshrl.u32 %v817, 16
  %v869 = vshll.u32 %v817, 16
  %v871 = vrot.slane %v869, 1
  %v872 = vor.u32 %v867, %v871
  %v873 = vshrl.u32 %v825, 16
  %v875 = vshll.u32 %v825, 16
  %v877 = vrot.slane %v875, 1
  %v878 = vor.u32 %v873, %v877
  %v879 = vshrl.u32 %v832, 16
  %v881 = vshll.u32 %v832, 16
  %v883 = vrot.slane %v881, 1
  %v884 = vor.u32 %v879, %v883
  %v885 = vshrl.u32 %v840, 16
  %v887 = vshll.u32 %v840, 16
  %v889 = vrot.slane %v887, 1
  %v890 = vor.u32 %v885, %v889
  %v891 = vshrl.u32 %v848, 16
  %v893 = vshll.u32 %v848, 16
  %v895 = vrot.slane %v893, 1
  %v896 = vor.u32 %v891, %v895
  %897 = vst [vmem:[#allocation1] ss:$9 sm:$0xff] %v535
  %s898 = scalar_lea.vmem [#allocation1], 1
  %899 = vst [vmem:[%s898] ss:$9 sm:$0xff] %v539
  %s900 = scalar_lea.vmem [#allocation1], 2
  %901 = vst [vmem:[%s900] ss:$9 sm:$0xff] %v543
  %s902 = scalar_lea.vmem [#allocation1], 3
  %903 = vst [vmem:[%s902] ss:$9 sm:$0xff] %v546
  %s904 = scalar_lea.vmem [#allocation1], 4
  %905 = vst [vmem:[%s904] ss:$9 sm:$0xff] %v549
  %v906 = vld [vmem:[#allocation1] sm:$0xff]
  %908 = vst [vmem:[#allocation1] ss:$9 sm:$0xff] %v558
  %909 = vst [vmem:[%s898] ss:$9 sm:$0xff] %v561
  %910 = vst [vmem:[%s900] ss:$9 sm:$0xff] %v564
  %911 = vst [vmem:[%s902] ss:$9 sm:$0xff] %v567
  %912 = vst [vmem:[%s904] ss:$9 sm:$0xff] %v570
  %v913 = vld [vmem:[#allocation1] sm:$0xff]
  %915 = vst [vmem:[#allocation1] ss:$9 sm:$0xff] %v579
  %916 = vst [vmem:[%s898] ss:$9 sm:$0xff] %v582
  %917 = vst [vmem:[%s900] ss:$9 sm:$0xff] %v585
  %918 = vst [vmem:[%s902] ss:$9 sm:$0xff] %v588
  %919 = vst [vmem:[%s904] ss:$9 sm:$0xff] %v591
  %v920 = vld [vmem:[#allocation1] sm:$0xff]
  %922 = vst [vmem:[#allocation1] ss:$9 sm:$0xff] %v600
  %923 = vst [vmem:[%s898] ss:$9 sm:$0xff] %v603
  %924 = vst [vmem:[%s900] ss:$9 sm:$0xff] %v606
  %925 = vst [vmem:[%s902] ss:$9 sm:$0xff] %v609
  %926 = vst [vmem:[%s904] ss:$9 sm:$0xff] %v612
  %v927 = vld [vmem:[#allocation1] sm:$0xff]
  %929 = vst [vmem:[#allocation1] ss:$9 sm:$0xff] %v621
  %930 = vst [vmem:[%s898] ss:$9 sm:$0xff] %v624
  %931 = vst [vmem:[%s900] ss:$9 sm:$0xff] %v627
  %932 = vst [vmem:[%s902] ss:$9 sm:$0xff] %v630
  %933 = vst [vmem:[%s904] ss:$9 sm:$0xff] %v633
  %v934 = vld [vmem:[#allocation1] sm:$0xff]
  %936 = vst [vmem:[#allocation1] ss:$9 sm:$0xff] %v642
  %937 = vst [vmem:[%s898] ss:$9 sm:$0xff] %v645
  %938 = vst [vmem:[%s900] ss:$9 sm:$0xff] %v648
  %939 = vst [vmem:[%s902] ss:$9 sm:$0xff] %v651
  %940 = vst [vmem:[%s904] ss:$9 sm:$0xff] %v654
  %v941 = vld [vmem:[#allocation1] sm:$0xff]
  %943 = vst [vmem:[#allocation1] ss:$9 sm:$0xff] %v663
  %944 = vst [vmem:[%s898] ss:$9 sm:$0xff] %v666
  %945 = vst [vmem:[%s900] ss:$9 sm:$0xff] %v669
  %946 = vst [vmem:[%s902] ss:$9 sm:$0xff] %v672
  %947 = vst [vmem:[%s904] ss:$9 sm:$0xff] %v675
  %v948 = vld [vmem:[#allocation1] sm:$0xff]
  %950 = vst [vmem:[#allocation1] ss:$9 sm:$0xff] %v684
  %951 = vst [vmem:[%s898] ss:$9 sm:$0xff] %v687
  %952 = vst [vmem:[%s900] ss:$9 sm:$0xff] %v690
  %953 = vst [vmem:[%s902] ss:$9 sm:$0xff] %v693
  %954 = vst [vmem:[%s904] ss:$9 sm:$0xff] %v696
  %v955 = vld [vmem:[#allocation1] sm:$0xff]
  %957 = vst [vmem:[#allocation1] ss:$9 sm:$0xff] %v535
  %s958 = scalar_lea.vmem [#allocation1], 1
  %959 = vst [vmem:[%s958] ss:$9 sm:$0xff] %v539
  %s960 = scalar_lea.vmem [#allocation1], 2
  %961 = vst [vmem:[%s960] ss:$9 sm:$0xff] %v543
  %s962 = scalar_lea.vmem [#allocation1], 3
  %963 = vst [vmem:[%s962] ss:$9 sm:$0xff] %v546
  %s964 = scalar_lea.vmem [#allocation1], 4
  %965 = vst [vmem:[%s964] ss:$9 sm:$0xff] %v549
  %s967 = scalar_lea.vmem [#allocation1], 5
  %968 = vst [vmem:[%s967] ss:$9 sm:$0xff] %v552
  %v969 = vld [vmem:[#allocation1] sm:$0xff]
  %970 = vst [vmem:[#allocation1] ss:$9 sm:$0xff] %v558
  %971 = vst [vmem:[%s958] ss:$9 sm:$0xff] %v561
  %972 = vst [vmem:[%s960] ss:$9 sm:$0xff] %v564
  %973 = vst [vmem:[%s962] ss:$9 sm:$0xff] %v567
  %974 = vst [vmem:[%s964] ss:$9 sm:$0xff] %v570
  %976 = vst [vmem:[%s967] ss:$9 sm:$0xff] %v573
  %v977 = vld [vmem:[#allocation1] sm:$0xff]
  %978 = vst [vmem:[#allocation1] ss:$9 sm:$0xff] %v579
  %979 = vst [vmem:[%s958] ss:$9 sm:$0xff] %v582
  %980 = vst [vmem:[%s960] ss:$9 sm:$0xff] %v585
  %981 = vst [vmem:[%s962] ss:$9 sm:$0xff] %v588
  %982 = vst [vmem:[%s964] ss:$9 sm:$0xff] %v591
  %983 = vst [vmem:[%s967] ss:$9 sm:$0xff] %v594
  %v984 = vld [vmem:[#allocation1] sm:$0xff]
  %985 = vst [vmem:[#allocation1] ss:$9 sm:$0xff] %v600
  %986 = vst [vmem:[%s958] ss:$9 sm:$0xff] %v603
  %987 = vst [vmem:[%s960] ss:$9 sm:$0xff] %v606
  %988 = vst [vmem:[%s962] ss:$9 sm:$0xff] %v609
  %989 = vst [vmem:[%s964] ss:$9 sm:$0xff] %v612
  %991 = vst [vmem:[%s967] ss:$9 sm:$0xff] %v615
  %v992 = vld [vmem:[#allocation1] sm:$0xff]
  %993 = vst [vmem:[#allocation1] ss:$9 sm:$0xff] %v621
  %994 = vst [vmem:[%s958] ss:$9 sm:$0xff] %v624
  %995 = vst [vmem:[%s960] ss:$9 sm:$0xff] %v627
  %996 = vst [vmem:[%s962] ss:$9 sm:$0xff] %v630
  %997 = vst [vmem:[%s964] ss:$9 sm:$0xff] %v633
  %999 = vst [vmem:[%s967] ss:$9 sm:$0xff] %v636
  %v1000 = vld [vmem:[#allocation1] sm:$0xff]
  %1001 = vst [vmem:[#allocation1] ss:$9 sm:$0xff] %v642
  %1002 = vst [vmem:[%s958] ss:$9 sm:$0xff] %v645
  %1003 = vst [vmem:[%s960] ss:$9 sm:$0xff] %v648
  %1004 = vst [vmem:[%s962] ss:$9 sm:$0xff] %v651
  %1005 = vst [vmem:[%s964] ss:$9 sm:$0xff] %v654
  %1007 = vst [vmem:[%s967] ss:$9 sm:$0xff] %v657
  %v1008 = vld [vmem:[#allocation1] sm:$0xff]
  %1009 = vst [vmem:[#allocation1] ss:$9 sm:$0xff] %v663
  %1010 = vst [vmem:[%s958] ss:$9 sm:$0xff] %v666
  %1011 = vst [vmem:[%s960] ss:$9 sm:$0xff] %v669
  %1012 = vst [vmem:[%s962] ss:$9 sm:$0xff] %v672
  %1013 = vst [vmem:[%s964] ss:$9 sm:$0xff] %v675
  %1014 = vst [vmem:[%s967] ss:$9 sm:$0xff] %v678
  %v1015 = vld [vmem:[#allocation1] sm:$0xff]
  %1016 = vst [vmem:[#allocation1] ss:$9 sm:$0xff] %v684
  %1017 = vst [vmem:[%s958] ss:$9 sm:$0xff] %v687
  %1018 = vst [vmem:[%s960] ss:$9 sm:$0xff] %v690
  %1019 = vst [vmem:[%s962] ss:$9 sm:$0xff] %v693
  %1020 = vst [vmem:[%s964] ss:$9 sm:$0xff] %v696
  %1022 = vst [vmem:[%s967] ss:$9 sm:$0xff] %v699
  %v1023 = vld [vmem:[#allocation1] sm:$0xff]
  %v1024 = vshrl.u32 %v969, 16
  %v1026 = vshll.u32 %v969, 16
  %v1028 = vrot.slane %v1026, 1
  %v1029 = vor.u32 %v1024, %v1028
  %v1030 = vshrl.u32 %v977, 16
  %v1032 = vshll.u32 %v977, 16
  %v1034 = vrot.slane %v1032, 1
  %v1035 = vor.u32 %v1030, %v1034
  %v1036 = vshrl.u32 %v984, 16
  %v1038 = vshll.u32 %v984, 16
  %v1040 = vrot.slane %v1038, 1
  %v1041 = vor.u32 %v1036, %v1040
  %v1042 = vshrl.u32 %v992, 16
  %v1044 = vshll.u32 %v992, 16
  %v1046 = vrot.slane %v1044, 1
  %v1047 = vor.u32 %v1042, %v1046
  %v1048 = vshrl.u32 %v1000, 16
  %v1050 = vshll.u32 %v1000, 16
  %v1052 = vrot.slane %v1050, 1
  %v1053 = vor.u32 %v1048, %v1052
  %v1054 = vshrl.u32 %v1008, 16
  %v1056 = vshll.u32 %v1008, 16
  %v1058 = vrot.slane %v1056, 1
  %v1059 = vor.u32 %v1054, %v1058
  %v1060 = vshrl.u32 %v1015, 16
  %v1062 = vshll.u32 %v1015, 16
  %v1064 = vrot.slane %v1062, 1
  %v1065 = vor.u32 %v1060, %v1064
  %v1066 = vshrl.u32 %v1023, 16
  %v1068 = vshll.u32 %v1023, 16
  %v1070 = vrot.slane %v1068, 1
  %v1071 = vor.u32 %v1066, %v1070
  %1072 = vst [vmem:[#allocation1] ss:$9 sm:$0xff] %v539
  %s1073 = scalar_lea.vmem [#allocation1], 1
  %1074 = vst [vmem:[%s1073] ss:$9 sm:$0xff] %v543
  %s1075 = scalar_lea.vmem [#allocation1], 2
  %1076 = vst [vmem:[%s1075] ss:$9 sm:$0xff] %v546
  %s1077 = scalar_lea.vmem [#allocation1], 3
  %1078 = vst [vmem:[%s1077] ss:$9 sm:$0xff] %v549
  %s1079 = scalar_lea.vmem [#allocation1], 4
  %1080 = vst [vmem:[%s1079] ss:$9 sm:$0xff] %v552
  %v1081 = vld [vmem:[#allocation1] sm:$0xff]
  %1083 = vst [vmem:[#allocation1] ss:$9 sm:$0xff] %v561
  %1084 = vst [vmem:[%s1073] ss:$9 sm:$0xff] %v564
  %1085 = vst [vmem:[%s1075] ss:$9 sm:$0xff] %v567
  %1086 = vst [vmem:[%s1077] ss:$9 sm:$0xff] %v570
  %1087 = vst [vmem:[%s1079] ss:$9 sm:$0xff] %v573
  %v1088 = vld [vmem:[#allocation1] sm:$0xff]
  %1090 = vst [vmem:[#allocation1] ss:$9 sm:$0xff] %v582
  %1091 = vst [vmem:[%s1073] ss:$9 sm:$0xff] %v585
  %1092 = vst [vmem:[%s1075] ss:$9 sm:$0xff] %v588
  %1093 = vst [vmem:[%s1077] ss:$9 sm:$0xff] %v591
  %1094 = vst [vmem:[%s1079] ss:$9 sm:$0xff] %v594
  %v1095 = vld [vmem:[#allocation1] sm:$0xff]
  %1097 = vst [vmem:[#allocation1] ss:$9 sm:$0xff] %v603
  %1098 = vst [vmem:[%s1073] ss:$9 sm:$0xff] %v606
  %1099 = vst [vmem:[%s1075] ss:$9 sm:$0xff] %v609
  %1100 = vst [vmem:[%s1077] ss:$9 sm:$0xff] %v612
  %1101 = vst [vmem:[%s1079] ss:$9 sm:$0xff] %v615
  %v1102 = vld [vmem:[#allocation1] sm:$0xff]
  %1104 = vst [vmem:[#allocation1] ss:$9 sm:$0xff] %v624
  %1105 = vst [vmem:[%s1073] ss:$9 sm:$0xff] %v627
  %1106 = vst [vmem:[%s1075] ss:$9 sm:$0xff] %v630
  %1107 = vst [vmem:[%s1077] ss:$9 sm:$0xff] %v633
  %1108 = vst [vmem:[%s1079] ss:$9 sm:$0xff] %v636
  %v1109 = vld [vmem:[#allocation1] sm:$0xff]
  %1111 = vst [vmem:[#allocation1] ss:$9 sm:$0xff] %v645
  %1112 = vst [vmem:[%s1073] ss:$9 sm:$0xff] %v648
  %1113 = vst [vmem:[%s1075] ss:$9 sm:$0xff] %v651
  %1114 = vst [vmem:[%s1077] ss:$9 sm:$0xff] %v654
  %1115 = vst [vmem:[%s1079] ss:$9 sm:$0xff] %v657
  %v1116 = vld [vmem:[#allocation1] sm:$0xff]
  %1118 = vst [vmem:[#allocation1] ss:$9 sm:$0xff] %v666
  %1119 = vst [vmem:[%s1073] ss:$9 sm:$0xff] %v669
  %1120 = vst [vmem:[%s1075] ss:$9 sm:$0xff] %v672
  %1121 = vst [vmem:[%s1077] ss:$9 sm:$0xff] %v675
  %1122 = vst [vmem:[%s1079] ss:$9 sm:$0xff] %v678
  %v1123 = vld [vmem:[#allocation1] sm:$0xff]
  %1125 = vst [vmem:[#allocation1] ss:$9 sm:$0xff] %v687
  %1126 = vst [vmem:[%s1073] ss:$9 sm:$0xff] %v690
  %1127 = vst [vmem:[%s1075] ss:$9 sm:$0xff] %v693
  %1128 = vst [vmem:[%s1077] ss:$9 sm:$0xff] %v696
  %1129 = vst [vmem:[%s1079] ss:$9 sm:$0xff] %v699
  %v1130 = vld [vmem:[#allocation1] sm:$0xff]
  %v1132 = vrot.slane %v854, 7
  %v1133 = vrot.slane %v906, 6
  %v1134 = vrot.slane %v1029, 5
  %v1135 = vrot.slane %v1081, 4
  %v1136 = vrot.slane %v860, 7
  %v1137 = vrot.slane %v913, 6
  %v1138 = vrot.slane %v1035, 5
  %v1139 = vrot.slane %v1088, 4
  %v1140 = vrot.slane %v866, 7
  %v1141 = vrot.slane %v920, 6
  %v1142 = vrot.slane %v1041, 5
  %v1143 = vrot.slane %v1095, 4
  %v1144 = vrot.slane %v872, 7
  %v1145 = vrot.slane %v927, 6
  %v1146 = vrot.slane %v1047, 5
  %v1147 = vrot.slane %v1102, 4
  %v1148 = vrot.slane %v878, 7
  %v1149 = vrot.slane %v934, 6
  %v1150 = vrot.slane %v1053, 5
  %v1151 = vrot.slane %v1109, 4
  %v1152 = vrot.slane %v884, 7
  %v1153 = vrot.slane %v941, 6
  %v1154 = vrot.slane %v1059, 5
  %v1155 = vrot.slane %v1116, 4
  %v1156 = vrot.slane %v890, 7
  %v1157 = vrot.slane %v948, 6
  %v1158 = vrot.slane %v1065, 5
  %v1159 = vrot.slane %v1123, 4
  %v1160 = vrot.slane %v896, 7
  %v1161 = vrot.slane %v955, 6
  %v1162 = vrot.slane %v1071, 5
  %v1163 = vrot.slane %v1130, 4
  %v1165 = vsel %vm528, %v712, %v1132
  %vm1166 = vcmask 1041408
  %v1168 = vsel %vm1166, %v1165, %v1133
  %v1171 = vsel %vm540, %v1134, %v1135
  %vm1172 = vcmask 1042432
  %v1173 = vsel %vm1172, %v1168, %v1171
  %v1174 = vsel %vm532, %v712, %v1132
  %vm1175 = vcmask 1042433
  %v1176 = vsel %vm1175, %v1174, %v1133
  %vm1177 = vcmask 1044484
  %v1178 = vsel %vm1177, %v1134, %v1135
  %vm1179 = vcmask 1043457
  %v1180 = vsel %vm1179, %v1176, %v1178
  %v1182 = vrot.slane %v1180, 1
  %v1183 = vsel %vm536, %v712, %v1132
  %vm1184 = vcmask 1043458
  %v1185 = vsel %vm1184, %v1183, %v1133
  %vm1186 = vcmask 1045509
  %v1187 = vsel %vm1186, %v1134, %v1135
  %vm1188 = vcmask 1044482
  %v1189 = vsel %vm1188, %v1185, %v1187
  %v1191 = vrot.slane %v1189, 2
  %v1192 = vsel %vm540, %v712, %v1132
  %vm1193 = vcmask 1044483
  %v1194 = vsel %vm1193, %v1192, %v1133
  %vm1195 = vcmask 1046534
  %v1196 = vsel %vm1195, %v1134, %v1135
  %vm1197 = vcmask 1045507
  %v1198 = vsel %vm1197, %v1194, %v1196
  %v1200 = vrot.slane %v1198, 3
  %v1201 = vsel %vm1177, %v712, %v1132
  %vm1202 = vcmask 1045508
  %v1203 = vsel %vm1202, %v1201, %v1133
  %vm1204 = vcmask 1046528
  %v1205 = vsel %vm1204, %v1135, %v1134
  %vm1206 = vcmask 1046532
  %v1207 = vsel %vm1206, %v1203, %v1205
  %v1209 = vrot.slane %v1207, 4
  %v1211 = vsel %vm528, %v722, %v1136
  %v1213 = vsel %vm1166, %v1211, %v1137
  %v1216 = vsel %vm540, %v1138, %v1139
  %v1217 = vsel %vm1172, %v1213, %v1216
  %v1218 = vsel %vm532, %v722, %v1136
  %v1219 = vsel %vm1175, %v1218, %v1137
  %v1220 = vsel %vm1177, %v1138, %v1139
  %v1221 = vsel %vm1179, %v1219, %v1220
  %v1223 = vrot.slane %v1221, 1
  %v1224 = vsel %vm536, %v722, %v1136
  %v1225 = vsel %vm1184, %v1224, %v1137
  %v1226 = vsel %vm1186, %v1138, %v1139
  %v1227 = vsel %vm1188, %v1225, %v1226
  %v1229 = vrot.slane %v1227, 2
  %v1230 = vsel %vm540, %v722, %v1136
  %v1231 = vsel %vm1193, %v1230, %v1137
  %v1232 = vsel %vm1195, %v1138, %v1139
  %v1233 = vsel %vm1197, %v1231, %v1232
  %v1235 = vrot.slane %v1233, 3
  %v1236 = vsel %vm1177, %v722, %v1136
  %v1237 = vsel %vm1202, %v1236, %v1137
  %v1238 = vsel %vm1204, %v1139, %v1138
  %v1239 = vsel %vm1206, %v1237, %v1238
  %v1241 = vrot.slane %v1239, 4
  %v1243 = vsel %vm528, %v732, %v1140
  %v1245 = vsel %vm1166, %v1243, %v1141
  %v1248 = vsel %vm540, %v1142, %v1143
  %v1249 = vsel %vm1172, %v1245, %v1248
  %v1250 = vsel %vm532, %v732, %v1140
  %v1251 = vsel %vm1175, %v1250, %v1141
  %v1252 = vsel %vm1177, %v1142, %v1143
  %v1253 = vsel %vm1179, %v1251, %v1252
  %v1255 = vrot.slane %v1253, 1
  %v1256 = vsel %vm536, %v732, %v1140
  %v1257 = vsel %vm1184, %v1256, %v1141
  %v1258 = vsel %vm1186, %v1142, %v1143
  %v1259 = vsel %vm1188, %v1257, %v1258
  %v1261 = vrot.slane %v1259, 2
  %v1262 = vsel %vm540, %v732, %v1140
  %v1263 = vsel %vm1193, %v1262, %v1141
  %v1264 = vsel %vm1195, %v1142, %v1143
  %v1265 = vsel %vm1197, %v1263, %v1264
  %v1267 = vrot.slane %v1265, 3
  %v1268 = vsel %vm1177, %v732, %v1140
  %v1269 = vsel %vm1202, %v1268, %v1141
  %v1270 = vsel %vm1204, %v1143, %v1142
  %v1271 = vsel %vm1206, %v1269, %v1270
  %v1273 = vrot.slane %v1271, 4
  %v1275 = vsel %vm528, %v742, %v1144
  %v1277 = vsel %vm1166, %v1275, %v1145
  %v1280 = vsel %vm540, %v1146, %v1147
  %v1281 = vsel %vm1172, %v1277, %v1280
  %v1282 = vsel %vm532, %v742, %v1144
  %v1283 = vsel %vm1175, %v1282, %v1145
  %v1284 = vsel %vm1177, %v1146, %v1147
  %v1285 = vsel %vm1179, %v1283, %v1284
  %v1287 = vrot.slane %v1285, 1
  %v1288 = vsel %vm536, %v742, %v1144
  %v1289 = vsel %vm1184, %v1288, %v1145
  %v1290 = vsel %vm1186, %v1146, %v1147
  %v1291 = vsel %vm1188, %v1289, %v1290
  %v1293 = vrot.slane %v1291, 2
  %v1294 = vsel %vm540, %v742, %v1144
  %v1295 = vsel %vm1193, %v1294, %v1145
  %v1296 = vsel %vm1195, %v1146, %v1147
  %v1297 = vsel %vm1197, %v1295, %v1296
  %v1299 = vrot.slane %v1297, 3
  %v1300 = vsel %vm1177, %v742, %v1144
  %v1301 = vsel %vm1202, %v1300, %v1145
  %v1302 = vsel %vm1204, %v1147, %v1146
  %v1303 = vsel %vm1206, %v1301, %v1302
  %v1305 = vrot.slane %v1303, 4
  %v1307 = vsel %vm528, %v751, %v1148
  %v1309 = vsel %vm1166, %v1307, %v1149
  %v1312 = vsel %vm540, %v1150, %v1151
  %v1313 = vsel %vm1172, %v1309, %v1312
  %v1314 = vsel %vm532, %v751, %v1148
  %v1315 = vsel %vm1175, %v1314, %v1149
  %v1316 = vsel %vm1177, %v1150, %v1151
  %v1317 = vsel %vm1179, %v1315, %v1316
  %v1319 = vrot.slane %v1317, 1
  %v1320 = vsel %vm536, %v751, %v1148
  %v1321 = vsel %vm1184, %v1320, %v1149
  %v1322 = vsel %vm1186, %v1150, %v1151
  %v1323 = vsel %vm1188, %v1321, %v1322
  %v1325 = vrot.slane %v1323, 2
  %v1326 = vsel %vm540, %v751, %v1148
  %v1327 = vsel %vm1193, %v1326, %v1149
  %v1328 = vsel %vm1195, %v1150, %v1151
  %v1329 = vsel %vm1197, %v1327, %v1328
  %v1331 = vrot.slane %v1329, 3
  %v1332 = vsel %vm1177, %v751, %v1148
  %v1333 = vsel %vm1202, %v1332, %v1149
  %v1334 = vsel %vm1204, %v1151, %v1150
  %v1335 = vsel %vm1206, %v1333, %v1334
  %v1337 = vrot.slane %v1335, 4
  %v1339 = vsel %vm528, %v761, %v1152
  %v1341 = vsel %vm1166, %v1339, %v1153
  %v1344 = vsel %vm540, %v1154, %v1155
  %v1345 = vsel %vm1172, %v1341, %v1344
  %v1346 = vsel %vm532, %v761, %v1152
  %v1347 = vsel %vm1175, %v1346, %v1153
  %v1348 = vsel %vm1177, %v1154, %v1155
  %v1349 = vsel %vm1179, %v1347, %v1348
  %v1351 = vrot.slane %v1349, 1
  %v1352 = vsel %vm536, %v761, %v1152
  %v1353 = vsel %vm1184, %v1352, %v1153
  %v1354 = vsel %vm1186, %v1154, %v1155
  %v1355 = vsel %vm1188, %v1353, %v1354
  %v1357 = vrot.slane %v1355, 2
  %v1358 = vsel %vm540, %v761, %v1152
  %v1359 = vsel %vm1193, %v1358, %v1153
  %v1360 = vsel %vm1195, %v1154, %v1155
  %v1361 = vsel %vm1197, %v1359, %v1360
  %v1363 = vrot.slane %v1361, 3
  %v1364 = vsel %vm1177, %v761, %v1152
  %v1365 = vsel %vm1202, %v1364, %v1153
  %v1366 = vsel %vm1204, %v1155, %v1154
  %v1367 = vsel %vm1206, %v1365, %v1366
  %v1369 = vrot.slane %v1367, 4
  %v1371 = vsel %vm528, %v771, %v1156
  %v1373 = vsel %vm1166, %v1371, %v1157
  %v1376 = vsel %vm540, %v1158, %v1159
  %v1377 = vsel %vm1172, %v1373, %v1376
  %v1378 = vsel %vm532, %v771, %v1156
  %v1379 = vsel %vm1175, %v1378, %v1157
  %v1380 = vsel %vm1177, %v1158, %v1159
  %v1381 = vsel %vm1179, %v1379, %v1380
  %v1383 = vrot.slane %v1381, 1
  %v1384 = vsel %vm536, %v771, %v1156
  %v1385 = vsel %vm1184, %v1384, %v1157
  %v1386 = vsel %vm1186, %v1158, %v1159
  %v1387 = vsel %vm1188, %v1385, %v1386
  %v1389 = vrot.slane %v1387, 2
  %v1390 = vsel %vm540, %v771, %v1156
  %v1391 = vsel %vm1193, %v1390, %v1157
  %v1392 = vsel %vm1195, %v1158, %v1159
  %v1393 = vsel %vm1197, %v1391, %v1392
  %v1395 = vrot.slane %v1393, 3
  %v1396 = vsel %vm1177, %v771, %v1156
  %v1397 = vsel %vm1202, %v1396, %v1157
  %v1398 = vsel %vm1204, %v1159, %v1158
  %v1399 = vsel %vm1206, %v1397, %v1398
  %v1401 = vrot.slane %v1399, 4
  %v1403 = vsel %vm528, %v781, %v1160
  %v1405 = vsel %vm1166, %v1403, %v1161
  %v1408 = vsel %vm540, %v1162, %v1163
  %v1409 = vsel %vm1172, %v1405, %v1408
  %v1410 = vsel %vm532, %v781, %v1160
  %v1411 = vsel %vm1175, %v1410, %v1161
  %v1412 = vsel %vm1177, %v1162, %v1163
  %v1413 = vsel %vm1179, %v1411, %v1412
  %v1415 = vrot.slane %v1413, 1
  %v1416 = vsel %vm536, %v781, %v1160
  %v1417 = vsel %vm1184, %v1416, %v1161
  %v1418 = vsel %vm1186, %v1162, %v1163
  %v1419 = vsel %vm1188, %v1417, %v1418
  %v1421 = vrot.slane %v1419, 2
  %v1422 = vsel %vm540, %v781, %v1160
  %v1423 = vsel %vm1193, %v1422, %v1161
  %v1424 = vsel %vm1195, %v1162, %v1163
  %v1425 = vsel %vm1197, %v1423, %v1424
  %v1427 = vrot.slane %v1425, 3
  %v1428 = vsel %vm1177, %v781, %v1160
  %v1429 = vsel %vm1202, %v1428, %v1161
  %v1430 = vsel %vm1204, %v1163, %v1162
  %v1431 = vsel %vm1206, %v1429, %v1430
  %v1433 = vrot.slane %v1431, 4
  %v1434 = vld [vmem:[%s2] sm:$0xff]
  %v1435 = vld [vmem:[%s2 + $0x8] sm:$0xff]
  %v1436 = vld [vmem:[%s2 + $0x10] sm:$0xff]
  %v1437 = vld [vmem:[%s2 + $0x18] sm:$0xff]
  %v1438 = vld [vmem:[%s2 + $0x20] sm:$0xff]
  %v1439 = vld [vmem:[%s2 + $0x28] sm:$0xff]
  %v1440 = vld [vmem:[%s2 + $0x30] sm:$0xff]
  %v1441 = vld [vmem:[%s2 + $0x38] sm:$0xff]
  %v1442 = vld [vmem:[%s2 + $0x40] sm:$0xff]
  %v1443 = vld [vmem:[%s2 + $0x48] sm:$0xff]
  %v1444 = vld [vmem:[%s2 + $0x50] sm:$0xff]
  %v1445 = vld [vmem:[%s2 + $0x58] sm:$0xff]
  %v1446 = vld [vmem:[%s2 + $0x60] sm:$0xff]
  %v1447 = vld [vmem:[%s2 + $0x68] sm:$0xff]
  %v1448 = vld [vmem:[%s2 + $0x70] sm:$0xff]
  %v1449 = vld [vmem:[%s2 + $0x78] sm:$0xff]
  %v1450 = vld [vmem:[%s2 + $0x80] sm:$0xff]
  %v1451 = vld [vmem:[%s2 + $0x88] sm:$0xff]
  %v1452 = vld [vmem:[%s2 + $0x90] sm:$0xff]
  %v1453 = vld [vmem:[%s2 + $0x98] sm:$0xff]
  %v1454 = vld [vmem:[%s2 + $0xa0] sm:$0xff]
  %v1455 = vld [vmem:[%s2 + $0xa8] sm:$0xff]
  %v1456 = vld [vmem:[%s2 + $0xb0] sm:$0xff]
  %v1457 = vld [vmem:[%s2 + $0xb8] sm:$0xff]
  %v1458 = vld [vmem:[%s2 + $0xc0] sm:$0xff]
  %v1459 = vld [vmem:[%s2 + $0xc8] sm:$0xff]
  %v1460 = vld [vmem:[%s2 + $0xd0] sm:$0xff]
  %v1461 = vld [vmem:[%s2 + $0xd8] sm:$0xff]
  %v1462 = vld [vmem:[%s2 + $0xe0] sm:$0xff]
  %v1463 = vld [vmem:[%s2 + $0xe8] sm:$0xff]
  %v1464 = vld [vmem:[%s2 + $0xf0] sm:$0xff]
  %v1465 = vld [vmem:[%s2 + $0xf8] sm:$0xff]
  %v1466 = vld [vmem:[%s2 + $0x100] sm:$0xff]
  %v1467 = vld [vmem:[%s2 + $0x108] sm:$0xff]
  %v1468 = vld [vmem:[%s2 + $0x110] sm:$0xff]
  %v1469 = vld [vmem:[%s2 + $0x118] sm:$0xff]
  %v1470 = vld [vmem:[%s2 + $0x120] sm:$0xff]
  %v1471 = vld [vmem:[%s2 + $0x128] sm:$0xff]
  %v1472 = vld [vmem:[%s2 + $0x130] sm:$0xff]
  %v1473 = vld [vmem:[%s2 + $0x138] sm:$0xff]
  %v1474 = vld [vmem:[%s2 + $0x140] sm:$0xff]
  %v1475 = vld [vmem:[%s2 + $0x148] sm:$0xff]
  %v1476 = vld [vmem:[%s2 + $0x150] sm:$0xff]
  %v1477 = vld [vmem:[%s2 + $0x158] sm:$0xff]
  %v1478 = vld [vmem:[%s2 + $0x160] sm:$0xff]
  %v1479 = vld [vmem:[%s2 + $0x168] sm:$0xff]
  %v1480 = vld [vmem:[%s2 + $0x170] sm:$0xff]
  %v1481 = vld [vmem:[%s2 + $0x178] sm:$0xff]
  %v1482 = vld [vmem:[%s2 + $0x180] sm:$0xff]
  %v1483 = vld [vmem:[%s2 + $0x188] sm:$0xff]
  %v1484 = vld [vmem:[%s2 + $0x190] sm:$0xff]
  %v1485 = vld [vmem:[%s2 + $0x198] sm:$0xff]
  %v1486 = vld [vmem:[%s2 + $0x1a0] sm:$0xff]
  %v1487 = vld [vmem:[%s2 + $0x1a8] sm:$0xff]
  %v1488 = vld [vmem:[%s2 + $0x1b0] sm:$0xff]
  %v1489 = vld [vmem:[%s2 + $0x1b8] sm:$0xff]
  %v1490 = vld [vmem:[%s2 + $0x1c0] sm:$0xff]
  %v1491 = vld [vmem:[%s2 + $0x1c8] sm:$0xff]
  %v1492 = vld [vmem:[%s2 + $0x1d0] sm:$0xff]
  %v1493 = vld [vmem:[%s2 + $0x1d8] sm:$0xff]
  %v1494 = vld [vmem:[%s2 + $0x1e0] sm:$0xff]
  %v1495 = vld [vmem:[%s2 + $0x1e8] sm:$0xff]
  %v1496 = vld [vmem:[%s2 + $0x1f0] sm:$0xff]
  %v1497 = vld [vmem:[%s2 + $0x1f8] sm:$0xff]
  %v1498 = vld [vmem:[%s2 + $0x200] sm:$0xff]
  %v1499 = vld [vmem:[%s2 + $0x208] sm:$0xff]
  %v1500 = vld [vmem:[%s2 + $0x210] sm:$0xff]
  %v1501 = vld [vmem:[%s2 + $0x218] sm:$0xff]
  %v1502 = vld [vmem:[%s2 + $0x220] sm:$0xff]
  %v1503 = vld [vmem:[%s2 + $0x228] sm:$0xff]
  %v1504 = vld [vmem:[%s2 + $0x230] sm:$0xff]
  %v1505 = vld [vmem:[%s2 + $0x238] sm:$0xff]
  %v1506 = vld [vmem:[%s2 + $0x240] sm:$0xff]
  %v1507 = vld [vmem:[%s2 + $0x248] sm:$0xff]
  %v1508 = vld [vmem:[%s2 + $0x250] sm:$0xff]
  %v1509 = vld [vmem:[%s2 + $0x258] sm:$0xff]
  %v1510 = vld [vmem:[%s2 + $0x260] sm:$0xff]
  %v1511 = vld [vmem:[%s2 + $0x268] sm:$0xff]
  %v1512 = vld [vmem:[%s2 + $0x270] sm:$0xff]
  %v1513 = vld [vmem:[%s2 + $0x278] sm:$0xff]
  %1514 = vst [vmem:[#allocation1] ss:$9 sm:$0xff] %v1173
  %s1516 = scalar_lea.vmem [#allocation1], 1
  %1517 = vst [vmem:[%s1516] ss:$9 sm:$0xff] %v1182
  %s1519 = scalar_lea.vmem [#allocation1], 2
  %1520 = vst [vmem:[%s1519] ss:$9 sm:$0xff] %v1191
  %s1522 = scalar_lea.vmem [#allocation1], 3
  %1523 = vst [vmem:[%s1522] ss:$9 sm:$0xff] %v1200
  %s1525 = scalar_lea.vmem [#allocation1], 4
  %1526 = vst [vmem:[%s1525] ss:$9 sm:$0xff] %v1209
  %s1527 = scalar_lea.vmem [#allocation1], 5
  %1528 = vst [vmem:[%s1527] ss:$9 sm:$0xff] %v1217
  %s1530 = scalar_lea.vmem [#allocation1], 6
  %1531 = vst [vmem:[%s1530] ss:$9 sm:$0xff] %v1223
  %s1533 = scalar_lea.vmem [#allocation1], 7
  %1534 = vst [vmem:[%s1533] ss:$9 sm:$0xff] %v1229
  %v1535 = vld [vmem:[#allocation1] sm:$0xff]
  %v1536 = vld [vmem:[#allocation1 + $0x9] sm:$0xff]
  %v1537 = vld [vmem:[#allocation1 + $0x12] sm:$0xff]
  %v1538 = vld [vmem:[#allocation1 + $0x1b] sm:$0xff]
  %v1539 = vld [vmem:[#allocation1 + $0x24] sm:$0xff]
  %1541 = vst [vmem:[#allocation1] ss:$9 sm:$0xff] %v1235
  %1543 = vst [vmem:[%s1516] ss:$9 sm:$0xff] %v1241
  %1544 = vst [vmem:[%s1519] ss:$9 sm:$0xff] %v1249
  %1546 = vst [vmem:[%s1522] ss:$9 sm:$0xff] %v1255
  %1548 = vst [vmem:[%s1525] ss:$9 sm:$0xff] %v1261
  %1550 = vst [vmem:[%s1527] ss:$9 sm:$0xff] %v1267
  %1552 = vst [vmem:[%s1530] ss:$9 sm:$0xff] %v1273
  %1553 = vst [vmem:[%s1533] ss:$9 sm:$0xff] %v1281
  %v1554 = vld [vmem:[#allocation1] sm:$0xff]
  %v1555 = vld [vmem:[#allocation1 + $0x9] sm:$0xff]
  %v1556 = vld [vmem:[#allocation1 + $0x12] sm:$0xff]
  %v1557 = vld [vmem:[#allocation1 + $0x1b] sm:$0xff]
  %v1558 = vld [vmem:[#allocation1 + $0x24] sm:$0xff]
  %1560 = vst [vmem:[#allocation1] ss:$9 sm:$0xff] %v1287
  %1562 = vst [vmem:[%s1516] ss:$9 sm:$0xff] %v1293
  %1564 = vst [vmem:[%s1519] ss:$9 sm:$0xff] %v1299
  %1566 = vst [vmem:[%s1522] ss:$9 sm:$0xff] %v1305
  %1567 = vst [vmem:[%s1525] ss:$9 sm:$0xff] %v1313
  %1569 = vst [vmem:[%s1527] ss:$9 sm:$0xff] %v1319
  %1571 = vst [vmem:[%s1530] ss:$9 sm:$0xff] %v1325
  %1573 = vst [vmem:[%s1533] ss:$9 sm:$0xff] %v1331
  %v1574 = vld [vmem:[#allocation1] sm:$0xff]
  %v1575 = vld [vmem:[#allocation1 + $0x9] sm:$0xff]
  %v1576 = vld [vmem:[#allocation1 + $0x12] sm:$0xff]
  %v1577 = vld [vmem:[#allocation1 + $0x1b] sm:$0xff]
  %v1578 = vld [vmem:[#allocation1 + $0x24] sm:$0xff]
  %1580 = vst [vmem:[#allocation1] ss:$9 sm:$0xff] %v1337
  %1581 = vst [vmem:[%s1516] ss:$9 sm:$0xff] %v1345
  %1583 = vst [vmem:[%s1519] ss:$9 sm:$0xff] %v1351
  %1585 = vst [vmem:[%s1522] ss:$9 sm:$0xff] %v1357
  %1587 = vst [vmem:[%s1525] ss:$9 sm:$0xff] %v1363
  %1589 = vst [vmem:[%s1527] ss:$9 sm:$0xff] %v1369
  %1590 = vst [vmem:[%s1530] ss:$9 sm:$0xff] %v1377
  %1592 = vst [vmem:[%s1533] ss:$9 sm:$0xff] %v1383
  %v1593 = vld [vmem:[#allocation1] sm:$0xff]
  %v1594 = vld [vmem:[#allocation1 + $0x9] sm:$0xff]
  %v1595 = vld [vmem:[#allocation1 + $0x12] sm:$0xff]
  %v1596 = vld [vmem:[#allocation1 + $0x1b] sm:$0xff]
  %v1597 = vld [vmem:[#allocation1 + $0x24] sm:$0xff]
  %1599 = vst [vmem:[#allocation1] ss:$9 sm:$0xff] %v1389
  %1601 = vst [vmem:[%s1516] ss:$9 sm:$0xff] %v1395
  %1603 = vst [vmem:[%s1519] ss:$9 sm:$0xff] %v1401
  %1604 = vst [vmem:[%s1522] ss:$9 sm:$0xff] %v1409
  %1606 = vst [vmem:[%s1525] ss:$9 sm:$0xff] %v1415
  %1608 = vst [vmem:[%s1527] ss:$9 sm:$0xff] %v1421
  %1610 = vst [vmem:[%s1530] ss:$9 sm:$0xff] %v1427
  %1612 = vst [vmem:[%s1533] ss:$9 sm:$0xff] %v1433
  %v1613 = vld [vmem:[#allocation1] sm:$0xff]
  %v1614 = vld [vmem:[#allocation1 + $0x9] sm:$0xff]
  %v1615 = vld [vmem:[#allocation1 + $0x12] sm:$0xff]
  %v1616 = vld [vmem:[#allocation1 + $0x1b] sm:$0xff]
  %v1617 = vld [vmem:[#allocation1 + $0x24] sm:$0xff]
  %v1723 = vunpack.c.l.b16 %v1434
  %v1724 = vunpack.c.h.b16 %v1434
  %v1725 = vunpack.c.l.b16 %v1435
  %v1726 = vunpack.c.h.b16 %v1435
  %v1727 = vunpack.c.l.b16 %v1436
  %v1728 = vunpack.c.h.b16 %v1436
  %v1729 = vunpack.c.l.b16 %v1437
  %v1730 = vunpack.c.h.b16 %v1437
  %v1731 = vunpack.c.l.b16 %v1438
  %v1732 = vunpack.c.h.b16 %v1438
  %v1733 = vunpack.c.l.b16 %v1439
  %v1734 = vunpack.c.h.b16 %v1439
  %v1735 = vunpack.c.l.b16 %v1440
  %v1736 = vunpack.c.h.b16 %v1440
  %v1737 = vunpack.c.l.b16 %v1441
  %v1738 = vunpack.c.h.b16 %v1441
  %v1739 = vunpack.c.l.b16 %v1442
  %v1740 = vunpack.c.h.b16 %v1442
  %v1741 = vunpack.c.l.b16 %v1443
  %v1742 = vunpack.c.h.b16 %v1443
  %v1743 = vunpack.c.l.b16 %v1444
  %v1744 = vunpack.c.h.b16 %v1444
  %v1745 = vunpack.c.l.b16 %v1445
  %v1746 = vunpack.c.h.b16 %v1445
  %v1747 = vunpack.c.l.b16 %v1446
  %v1748 = vunpack.c.h.b16 %v1446
  %v1749 = vunpack.c.l.b16 %v1447
  %v1750 = vunpack.c.h.b16 %v1447
  %v1751 = vunpack.c.l.b16 %v1448
  %v1752 = vunpack.c.h.b16 %v1448
  %v1753 = vunpack.c.l.b16 %v1449
  %v1754 = vunpack.c.h.b16 %v1449
  %v1755 = vunpack.c.l.b16 %v1450
  %v1756 = vunpack.c.h.b16 %v1450
  %v1757 = vunpack.c.l.b16 %v1451
  %v1758 = vunpack.c.h.b16 %v1451
  %v1759 = vunpack.c.l.b16 %v1452
  %v1760 = vunpack.c.h.b16 %v1452
  %v1761 = vunpack.c.l.b16 %v1453
  %v1762 = vunpack.c.h.b16 %v1453
  %v1763 = vunpack.c.l.b16 %v1454
  %v1764 = vunpack.c.h.b16 %v1454
  %v1765 = vunpack.c.l.b16 %v1455
  %v1766 = vunpack.c.h.b16 %v1455
  %v1767 = vunpack.c.l.b16 %v1456
  %v1768 = vunpack.c.h.b16 %v1456
  %v1769 = vunpack.c.l.b16 %v1457
  %v1770 = vunpack.c.h.b16 %v1457
  %v1771 = vunpack.c.l.b16 %v1458
  %v1772 = vunpack.c.h.b16 %v1458
  %v1773 = vunpack.c.l.b16 %v1459
  %v1774 = vunpack.c.h.b16 %v1459
  %v1775 = vunpack.c.l.b16 %v1460
  %v1776 = vunpack.c.h.b16 %v1460
  %v1777 = vunpack.c.l.b16 %v1461
  %v1778 = vunpack.c.h.b16 %v1461
  %v1779 = vunpack.c.l.b16 %v1462
  %v1780 = vunpack.c.h.b16 %v1462
  %v1781 = vunpack.c.l.b16 %v1463
  %v1782 = vunpack.c.h.b16 %v1463
  %v1783 = vunpack.c.l.b16 %v1464
  %v1784 = vunpack.c.h.b16 %v1464
  %v1785 = vunpack.c.l.b16 %v1465
  %v1786 = vunpack.c.h.b16 %v1465
  %v1787 = vunpack.c.l.b16 %v1466
  %v1788 = vunpack.c.h.b16 %v1466
  %v1789 = vunpack.c.l.b16 %v1467
  %v1790 = vunpack.c.h.b16 %v1467
  %v1791 = vunpack.c.l.b16 %v1468
  %v1792 = vunpack.c.h.b16 %v1468
  %v1793 = vunpack.c.l.b16 %v1469
  %v1794 = vunpack.c.h.b16 %v1469
  %v1795 = vunpack.c.l.b16 %v1470
  %v1796 = vunpack.c.h.b16 %v1470
  %v1797 = vunpack.c.l.b16 %v1471
  %v1798 = vunpack.c.h.b16 %v1471
  %v1799 = vunpack.c.l.b16 %v1472
  %v1800 = vunpack.c.h.b16 %v1472
  %v1801 = vunpack.c.l.b16 %v1473
  %v1802 = vunpack.c.h.b16 %v1473
  %v1803 = vunpack.c.l.b16 %v1474
  %v1804 = vunpack.c.h.b16 %v1474
  %v1805 = vunpack.c.l.b16 %v1475
  %v1806 = vunpack.c.h.b16 %v1475
  %v1807 = vunpack.c.l.b16 %v1476
  %v1808 = vunpack.c.h.b16 %v1476
  %v1809 = vunpack.c.l.b16 %v1477
  %v1810 = vunpack.c.h.b16 %v1477
  %v1811 = vunpack.c.l.b16 %v1478
  %v1812 = vunpack.c.h.b16 %v1478
  %v1813 = vunpack.c.l.b16 %v1479
  %v1814 = vunpack.c.h.b16 %v1479
  %v1815 = vunpack.c.l.b16 %v1480
  %v1816 = vunpack.c.h.b16 %v1480
  %v1817 = vunpack.c.l.b16 %v1481
  %v1818 = vunpack.c.h.b16 %v1481
  %v1819 = vunpack.c.l.b16 %v1482
  %v1820 = vunpack.c.h.b16 %v1482
  %v1821 = vunpack.c.l.b16 %v1483
  %v1822 = vunpack.c.h.b16 %v1483
  %v1823 = vunpack.c.l.b16 %v1484
  %v1824 = vunpack.c.h.b16 %v1484
  %v1825 = vunpack.c.l.b16 %v1485
  %v1826 = vunpack.c.h.b16 %v1485
  %v1827 = vunpack.c.l.b16 %v1486
  %v1828 = vunpack.c.h.b16 %v1486
  %v1829 = vunpack.c.l.b16 %v1487
  %v1830 = vunpack.c.h.b16 %v1487
  %v1831 = vunpack.c.l.b16 %v1488
  %v1832 = vunpack.c.h.b16 %v1488
  %v1833 = vunpack.c.l.b16 %v1489
  %v1834 = vunpack.c.h.b16 %v1489
  %v1835 = vunpack.c.l.b16 %v1490
  %v1836 = vunpack.c.h.b16 %v1490
  %v1837 = vunpack.c.l.b16 %v1491
  %v1838 = vunpack.c.h.b16 %v1491
  %v1839 = vunpack.c.l.b16 %v1492
  %v1840 = vunpack.c.h.b16 %v1492
  %v1841 = vunpack.c.l.b16 %v1493
  %v1842 = vunpack.c.h.b16 %v1493
  %v1843 = vunpack.c.l.b16 %v1494
  %v1844 = vunpack.c.h.b16 %v1494
  %v1845 = vunpack.c.l.b16 %v1495
  %v1846 = vunpack.c.h.b16 %v1495
  %v1847 = vunpack.c.l.b16 %v1496
  %v1848 = vunpack.c.h.b16 %v1496
  %v1849 = vunpack.c.l.b16 %v1497
  %v1850 = vunpack.c.h.b16 %v1497
  %v1851 = vunpack.c.l.b16 %v1498
  %v1852 = vunpack.c.h.b16 %v1498
  %v1853 = vunpack.c.l.b16 %v1499
  %v1854 = vunpack.c.h.b16 %v1499
  %v1855 = vunpack.c.l.b16 %v1500
  %v1856 = vunpack.c.h.b16 %v1500
  %v1857 = vunpack.c.l.b16 %v1501
  %v1858 = vunpack.c.h.b16 %v1501
  %v1859 = vunpack.c.l.b16 %v1502
  %v1860 = vunpack.c.h.b16 %v1502
  %v1861 = vunpack.c.l.b16 %v1503
  %v1862 = vunpack.c.h.b16 %v1503
  %v1863 = vunpack.c.l.b16 %v1504
  %v1864 = vunpack.c.h.b16 %v1504
  %v1865 = vunpack.c.l.b16 %v1505
  %v1866 = vunpack.c.h.b16 %v1505
  %v1867 = vunpack.c.l.b16 %v1506
  %v1868 = vunpack.c.h.b16 %v1506
  %v1869 = vunpack.c.l.b16 %v1507
  %v1870 = vunpack.c.h.b16 %v1507
  %v1871 = vunpack.c.l.b16 %v1508
  %v1872 = vunpack.c.h.b16 %v1508
  %v1873 = vunpack.c.l.b16 %v1509
  %v1874 = vunpack.c.h.b16 %v1509
  %v1875 = vunpack.c.l.b16 %v1510
  %v1876 = vunpack.c.h.b16 %v1510
  %v1877 = vunpack.c.l.b16 %v1511
  %v1878 = vunpack.c.h.b16 %v1511
  %v1879 = vunpack.c.l.b16 %v1512
  %v1880 = vunpack.c.h.b16 %v1512
  %v1881 = vunpack.c.l.b16 %v1513
  %v1882 = vunpack.c.h.b16 %v1513
  %v1883 = vpack.c.b16 %v1725, %v1723
  %v1884 = vpack.c.b16 %v1726, %v1724
  %v1885 = vpack.c.b16 %v1729, %v1727
  %v1886 = vpack.c.b16 %v1730, %v1728
  %v1887 = vpack.c.b16 %v1733, %v1731
  %v1888 = vpack.c.b16 %v1734, %v1732
  %v1889 = vpack.c.b16 %v1737, %v1735
  %v1890 = vpack.c.b16 %v1738, %v1736
  %v1891 = vpack.c.b16 %v1741, %v1739
  %v1892 = vpack.c.b16 %v1742, %v1740
  %v1893 = vpack.c.b16 %v1745, %v1743
  %v1894 = vpack.c.b16 %v1746, %v1744
  %v1895 = vpack.c.b16 %v1749, %v1747
  %v1896 = vpack.c.b16 %v1750, %v1748
  %v1897 = vpack.c.b16 %v1753, %v1751
  %v1898 = vpack.c.b16 %v1754, %v1752
  %v1899 = vpack.c.b16 %v1757, %v1755
  %v1900 = vpack.c.b16 %v1758, %v1756
  %v1901 = vpack.c.b16 %v1761, %v1759
  %v1902 = vpack.c.b16 %v1762, %v1760
  %v1903 = vpack.c.b16 %v1765, %v1763
  %v1904 = vpack.c.b16 %v1766, %v1764
  %v1905 = vpack.c.b16 %v1769, %v1767
  %v1906 = vpack.c.b16 %v1770, %v1768
  %v1907 = vpack.c.b16 %v1773, %v1771
  %v1908 = vpack.c.b16 %v1774, %v1772
  %v1909 = vpack.c.b16 %v1777, %v1775
  %v1910 = vpack.c.b16 %v1778, %v1776
  %v1911 = vpack.c.b16 %v1781, %v1779
  %v1912 = vpack.c.b16 %v1782, %v1780
  %v1913 = vpack.c.b16 %v1785, %v1783
  %v1914 = vpack.c.b16 %v1786, %v1784
  %v1915 = vpack.c.b16 %v1789, %v1787
  %v1916 = vpack.c.b16 %v1790, %v1788
  %v1917 = vpack.c.b16 %v1793, %v1791
  %v1918 = vpack.c.b16 %v1794, %v1792
  %v1919 = vpack.c.b16 %v1797, %v1795
  %v1920 = vpack.c.b16 %v1798, %v1796
  %v1921 = vpack.c.b16 %v1801, %v1799
  %v1922 = vpack.c.b16 %v1802, %v1800
  %v1923 = vpack.c.b16 %v1805, %v1803
  %v1924 = vpack.c.b16 %v1806, %v1804
  %v1925 = vpack.c.b16 %v1809, %v1807
  %v1926 = vpack.c.b16 %v1810, %v1808
  %v1927 = vpack.c.b16 %v1813, %v1811
  %v1928 = vpack.c.b16 %v1814, %v1812
  %v1929 = vpack.c.b16 %v1817, %v1815
  %v1930 = vpack.c.b16 %v1818, %v1816
  %v1931 = vpack.c.b16 %v1821, %v1819
  %v1932 = vpack.c.b16 %v1822, %v1820
  %v1933 = vpack.c.b16 %v1825, %v1823
  %v1934 = vpack.c.b16 %v1826, %v1824
  %v1935 = vpack.c.b16 %v1829, %v1827
  %v1936 = vpack.c.b16 %v1830, %v1828
  %v1937 = vpack.c.b16 %v1833, %v1831
  %v1938 = vpack.c.b16 %v1834, %v1832
  %v1939 = vpack.c.b16 %v1837, %v1835
  %v1940 = vpack.c.b16 %v1838, %v1836
  %v1941 = vpack.c.b16 %v1841, %v1839
  %v1942 = vpack.c.b16 %v1842, %v1840
  %v1943 = vpack.c.b16 %v1845, %v1843
  %v1944 = vpack.c.b16 %v1846, %v1844
  %v1945 = vpack.c.b16 %v1849, %v1847
  %v1946 = vpack.c.b16 %v1850, %v1848
  %v1947 = vpack.c.b16 %v1853, %v1851
  %v1948 = vpack.c.b16 %v1854, %v1852
  %v1949 = vpack.c.b16 %v1857, %v1855
  %v1950 = vpack.c.b16 %v1858, %v1856
  %v1951 = vpack.c.b16 %v1861, %v1859
  %v1952 = vpack.c.b16 %v1862, %v1860
  %v1953 = vpack.c.b16 %v1865, %v1863
  %v1954 = vpack.c.b16 %v1866, %v1864
  %v1955 = vpack.c.b16 %v1869, %v1867
  %v1956 = vpack.c.b16 %v1870, %v1868
  %v1957 = vpack.c.b16 %v1873, %v1871
  %v1958 = vpack.c.b16 %v1874, %v1872
  %v1959 = vpack.c.b16 %v1877, %v1875
  %v1960 = vpack.c.b16 %v1878, %v1876
  %v1961 = vpack.c.b16 %v1881, %v1879
  %v1962 = vpack.c.b16 %v1882, %v1880
  %2043 = vmatpush.bf16.msra.mxu0 %v1897
  %2044 = vmatpush.bf16.msra.mxu0 %v1895
  %2045 = vmatpush.bf16.msra.mxu0 %v1893
  %2046 = vmatpush.bf16.msra.mxu0 %v1891
  %2047 = vmatpush.bf16.msra.mxu0 %v1889
  %2048 = vmatpush.bf16.msra.mxu0 %v1887
  %2049 = vmatpush.bf16.msra.mxu0 %v1885
  %2050 = vmatpush.bf16.msra.mxu0 %v1883
  %2051 = vmatmul.bf16.gmra.mxu0 %v1535
  %v2052 = vpop.f32.mrf.mxu0
  %v2053 = vadd.f32 0.0, %v2052
  %v2054 = vpop.f32.mrf.mxu0
  %v2055 = vadd.f32 0.0, %v2054
  %2056 = vmatmul.bf16.gmra.mxu0 %v1554
  %v2057 = vpop.f32.mrf.mxu0
  %v2058 = vadd.f32 0.0, %v2057
  %v2059 = vpop.f32.mrf.mxu0
  %v2060 = vadd.f32 0.0, %v2059
  %2061 = vmatmul.bf16.gmra.mxu0 %v1574
  %v2062 = vpop.f32.mrf.mxu0
  %v2063 = vadd.f32 0.0, %v2062
  %v2064 = vpop.f32.mrf.mxu0
  %v2065 = vadd.f32 0.0, %v2064
  %2066 = vmatmul.bf16.gmra.mxu0 %v1593
  %v2067 = vpop.f32.mrf.mxu0
  %v2068 = vadd.f32 0.0, %v2067
  %v2069 = vpop.f32.mrf.mxu0
  %v2070 = vadd.f32 0.0, %v2069
  %2071 = vmatmul.bf16.gmra.mxu0 %v1613
  %v2072 = vpop.f32.mrf.mxu0
  %v2073 = vadd.f32 0.0, %v2072
  %v2074 = vpop.f32.mrf.mxu0
  %v2075 = vadd.f32 0.0, %v2074
  %2076 = vdwg.mxu0
  %2077 = vmatpush.bf16.msra.mxu0 %v1913
  %2078 = vmatpush.bf16.msra.mxu0 %v1911
  %2079 = vmatpush.bf16.msra.mxu0 %v1909
  %2080 = vmatpush.bf16.msra.mxu0 %v1907
  %2081 = vmatpush.bf16.msra.mxu0 %v1905
  %2082 = vmatpush.bf16.msra.mxu0 %v1903
  %2083 = vmatpush.bf16.msra.mxu0 %v1901
  %2084 = vmatpush.bf16.msra.mxu0 %v1899
  %2085 = vmatmul.bf16.gmra.mxu0 %v1536
  %v2086 = vpop.f32.mrf.mxu0
  %v2087 = vadd.f32 %v2053, %v2086
  %v2088 = vpop.f32.mrf.mxu0
  %v2089 = vadd.f32 %v2055, %v2088
  %2090 = vmatmul.bf16.gmra.mxu0 %v1555
  %v2091 = vpop.f32.mrf.mxu0
  %v2092 = vadd.f32 %v2058, %v2091
  %v2093 = vpop.f32.mrf.mxu0
  %v2094 = vadd.f32 %v2060, %v2093
  %2095 = vmatmul.bf16.gmra.mxu0 %v1575
  %v2096 = vpop.f32.mrf.mxu0
  %v2097 = vadd.f32 %v2063, %v2096
  %v2098 = vpop.f32.mrf.mxu0
  %v2099 = vadd.f32 %v2065, %v2098
  %2100 = vmatmul.bf16.gmra.mxu0 %v1594
  %v2101 = vpop.f32.mrf.mxu0
  %v2102 = vadd.f32 %v2068, %v2101
  %v2103 = vpop.f32.mrf.mxu0
  %v2104 = vadd.f32 %v2070, %v2103
  %2105 = vmatmul.bf16.gmra.mxu0 %v1614
  %v2106 = vpop.f32.mrf.mxu0
  %v2107 = vadd.f32 %v2073, %v2106
  %v2108 = vpop.f32.mrf.mxu0
  %v2109 = vadd.f32 %v2075, %v2108
  %2110 = vdwg.mxu0
  %2111 = vmatpush.bf16.msra.mxu0 %v1929
  %2112 = vmatpush.bf16.msra.mxu0 %v1927
  %2113 = vmatpush.bf16.msra.mxu0 %v1925
  %2114 = vmatpush.bf16.msra.mxu0 %v1923
  %2115 = vmatpush.bf16.msra.mxu0 %v1921
  %2116 = vmatpush.bf16.msra.mxu0 %v1919
  %2117 = vmatpush.bf16.msra.mxu0 %v1917
  %2118 = vmatpush.bf16.msra.mxu0 %v1915
  %2119 = vmatmul.bf16.gmra.mxu0 %v1537
  %v2120 = vpop.f32.mrf.mxu0
  %v2121 = vadd.f32 %v2087, %v2120
  %v2122 = vpop.f32.mrf.mxu0
  %v2123 = vadd.f32 %v2089, %v2122
  %2124 = vmatmul.bf16.gmra.mxu0 %v1556
  %v2125 = vpop.f32.mrf.mxu0
  %v2126 = vadd.f32 %v2092, %v2125
  %v2127 = vpop.f32.mrf.mxu0
  %v2128 = vadd.f32 %v2094, %v2127
  %2129 = vmatmul.bf16.gmra.mxu0 %v1576
  %v2130 = vpop.f32.mrf.mxu0
  %v2131 = vadd.f32 %v2097, %v2130
  %v2132 = vpop.f32.mrf.mxu0
  %v2133 = vadd.f32 %v2099, %v2132
  %2134 = vmatmul.bf16.gmra.mxu0 %v1595
  %v2135 = vpop.f32.mrf.mxu0
  %v2136 = vadd.f32 %v2102, %v2135
  %v2137 = vpop.f32.mrf.mxu0
  %v2138 = vadd.f32 %v2104, %v2137
  %2139 = vmatmul.bf16.gmra.mxu0 %v1615
  %v2140 = vpop.f32.mrf.mxu0
  %v2141 = vadd.f32 %v2107, %v2140
  %v2142 = vpop.f32.mrf.mxu0
  %v2143 = vadd.f32 %v2109, %v2142
  %2144 = vdwg.mxu0
  %2145 = vmatpush.bf16.msra.mxu0 %v1945
  %2146 = vmatpush.bf16.msra.mxu0 %v1943
  %2147 = vmatpush.bf16.msra.mxu0 %v1941
  %2148 = vmatpush.bf16.msra.mxu0 %v1939
  %2149 = vmatpush.bf16.msra.mxu0 %v1937
  %2150 = vmatpush.bf16.msra.mxu0 %v1935
  %2151 = vmatpush.bf16.msra.mxu0 %v1933
  %2152 = vmatpush.bf16.msra.mxu0 %v1931
  %2153 = vmatmul.bf16.gmra.mxu0 %v1538
  %v2154 = vpop.f32.mrf.mxu0
  %v2155 = vadd.f32 %v2121, %v2154
  %v2156 = vpop.f32.mrf.mxu0
  %v2157 = vadd.f32 %v2123, %v2156
  %2158 = vmatmul.bf16.gmra.mxu0 %v1557
  %v2159 = vpop.f32.mrf.mxu0
  %v2160 = vadd.f32 %v2126, %v2159
  %v2161 = vpop.f32.mrf.mxu0
  %v2162 = vadd.f32 %v2128, %v2161
  %2163 = vmatmul.bf16.gmra.mxu0 %v1577
  %v2164 = vpop.f32.mrf.mxu0
  %v2165 = vadd.f32 %v2131, %v2164
  %v2166 = vpop.f32.mrf.mxu0
  %v2167 = vadd.f32 %v2133, %v2166
  %2168 = vmatmul.bf16.gmra.mxu0 %v1596
  %v2169 = vpop.f32.mrf.mxu0
  %v2170 = vadd.f32 %v2136, %v2169
  %v2171 = vpop.f32.mrf.mxu0
  %v2172 = vadd.f32 %v2138, %v2171
  %2173 = vmatmul.bf16.gmra.mxu0 %v1616
  %v2174 = vpop.f32.mrf.mxu0
  %v2175 = vadd.f32 %v2141, %v2174
  %v2176 = vpop.f32.mrf.mxu0
  %v2177 = vadd.f32 %v2143, %v2176
  %2178 = vdwg.mxu0
  %2179 = vmatpush.bf16.msra.mxu0 %v1961
  %2180 = vmatpush.bf16.msra.mxu0 %v1959
  %2181 = vmatpush.bf16.msra.mxu0 %v1957
  %2182 = vmatpush.bf16.msra.mxu0 %v1955
  %2183 = vmatpush.bf16.msra.mxu0 %v1953
  %2184 = vmatpush.bf16.msra.mxu0 %v1951
  %2185 = vmatpush.bf16.msra.mxu0 %v1949
  %2186 = vmatpush.bf16.msra.mxu0 %v1947
  %2187 = vmatmul.bf16.gmra.mxu0 %v1539
  %v2188 = vpop.f32.mrf.mxu0
  %v2189 = vadd.f32 %v2155, %v2188
  %v2190 = vpop.f32.mrf.mxu0
  %v2191 = vadd.f32 %v2157, %v2190
  %2192 = vmatmul.bf16.gmra.mxu0 %v1558
  %v2193 = vpop.f32.mrf.mxu0
  %v2194 = vadd.f32 %v2160, %v2193
  %v2195 = vpop.f32.mrf.mxu0
  %v2196 = vadd.f32 %v2162, %v2195
  %2197 = vmatmul.bf16.gmra.mxu0 %v1578
  %v2198 = vpop.f32.mrf.mxu0
  %v2199 = vadd.f32 %v2165, %v2198
  %v2200 = vpop.f32.mrf.mxu0
  %v2201 = vadd.f32 %v2167, %v2200
  %2202 = vmatmul.bf16.gmra.mxu0 %v1597
  %v2203 = vpop.f32.mrf.mxu0
  %v2204 = vadd.f32 %v2170, %v2203
  %v2205 = vpop.f32.mrf.mxu0
  %v2206 = vadd.f32 %v2172, %v2205
  %2207 = vmatmul.bf16.gmra.mxu0 %v1617
  %v2208 = vpop.f32.mrf.mxu0
  %v2209 = vadd.f32 %v2175, %v2208
  %v2210 = vpop.f32.mrf.mxu0
  %v2211 = vadd.f32 %v2177, %v2210
  %2212 = vdwg.mxu0
  %2213 = vmatpush.bf16.msra.mxu0 %v1898
  %2214 = vmatpush.bf16.msra.mxu0 %v1896
  %2215 = vmatpush.bf16.msra.mxu0 %v1894
  %2216 = vmatpush.bf16.msra.mxu0 %v1892
  %2217 = vmatpush.bf16.msra.mxu0 %v1890
  %2218 = vmatpush.bf16.msra.mxu0 %v1888
  %2219 = vmatpush.bf16.msra.mxu0 %v1886
  %2220 = vmatpush.bf16.msra.mxu0 %v1884
  %2221 = vmatmul.bf16.gmra.mxu0 %v1535
  %v2222 = vpop.f32.mrf.mxu0
  %v2223 = vadd.f32 0.0, %v2222
  %v2224 = vpop.f32.mrf.mxu0
  %v2225 = vadd.f32 0.0, %v2224
  %2226 = vmatmul.bf16.gmra.mxu0 %v1554
  %v2227 = vpop.f32.mrf.mxu0
  %v2228 = vadd.f32 0.0, %v2227
  %v2229 = vpop.f32.mrf.mxu0
  %v2230 = vadd.f32 0.0, %v2229
  %2231 = vmatmul.bf16.gmra.mxu0 %v1574
  %v2232 = vpop.f32.mrf.mxu0
  %v2233 = vadd.f32 0.0, %v2232
  %v2234 = vpop.f32.mrf.mxu0
  %v2235 = vadd.f32 0.0, %v2234
  %2236 = vmatmul.bf16.gmra.mxu0 %v1593
  %v2237 = vpop.f32.mrf.mxu0
  %v2238 = vadd.f32 0.0, %v2237
  %v2239 = vpop.f32.mrf.mxu0
  %v2240 = vadd.f32 0.0, %v2239
  %2241 = vmatmul.bf16.gmra.mxu0 %v1613
  %v2242 = vpop.f32.mrf.mxu0
  %v2243 = vadd.f32 0.0, %v2242
  %v2244 = vpop.f32.mrf.mxu0
  %v2245 = vadd.f32 0.0, %v2244
  %2246 = vdwg.mxu0
  %2247 = vmatpush.bf16.msra.mxu0 %v1914
  %2248 = vmatpush.bf16.msra.mxu0 %v1912
  %2249 = vmatpush.bf16.msra.mxu0 %v1910
  %2250 = vmatpush.bf16.msra.mxu0 %v1908
  %2251 = vmatpush.bf16.msra.mxu0 %v1906
  %2252 = vmatpush.bf16.msra.mxu0 %v1904
  %2253 = vmatpush.bf16.msra.mxu0 %v1902
  %2254 = vmatpush.bf16.msra.mxu0 %v1900
  %2255 = vmatmul.bf16.gmra.mxu0 %v1536
  %v2256 = vpop.f32.mrf.mxu0
  %v2257 = vadd.f32 %v2223, %v2256
  %v2258 = vpop.f32.mrf.mxu0
  %v2259 = vadd.f32 %v2225, %v2258
  %2260 = vmatmul.bf16.gmra.mxu0 %v1555
  %v2261 = vpop.f32.mrf.mxu0
  %v2262 = vadd.f32 %v2228, %v2261
  %v2263 = vpop.f32.mrf.mxu0
  %v2264 = vadd.f32 %v2230, %v2263
  %2265 = vmatmul.bf16.gmra.mxu0 %v1575
  %v2266 = vpop.f32.mrf.mxu0
  %v2267 = vadd.f32 %v2233, %v2266
  %v2268 = vpop.f32.mrf.mxu0
  %v2269 = vadd.f32 %v2235, %v2268
  %2270 = vmatmul.bf16.gmra.mxu0 %v1594
  %v2271 = vpop.f32.mrf.mxu0
  %v2272 = vadd.f32 %v2238, %v2271
  %v2273 = vpop.f32.mrf.mxu0
  %v2274 = vadd.f32 %v2240, %v2273
  %2275 = vmatmul.bf16.gmra.mxu0 %v1614
  %v2276 = vpop.f32.mrf.mxu0
  %v2277 = vadd.f32 %v2243, %v2276
  %v2278 = vpop.f32.mrf.mxu0
  %v2279 = vadd.f32 %v2245, %v2278
  %2280 = vdwg.mxu0
  %2281 = vmatpush.bf16.msra.mxu0 %v1930
  %2282 = vmatpush.bf16.msra.mxu0 %v1928
  %2283 = vmatpush.bf16.msra.mxu0 %v1926
  %2284 = vmatpush.bf16.msra.mxu0 %v1924
  %2285 = vmatpush.bf16.msra.mxu0 %v1922
  %2286 = vmatpush.bf16.msra.mxu0 %v1920
  %2287 = vmatpush.bf16.msra.mxu0 %v1918
  %2288 = vmatpush.bf16.msra.mxu0 %v1916
  %2289 = vmatmul.bf16.gmra.mxu0 %v1537
  %v2290 = vpop.f32.mrf.mxu0
  %v2291 = vadd.f32 %v2257, %v2290
  %v2292 = vpop.f32.mrf.mxu0
  %v2293 = vadd.f32 %v2259, %v2292
  %2294 = vmatmul.bf16.gmra.mxu0 %v1556
  %v2295 = vpop.f32.mrf.mxu0
  %v2296 = vadd.f32 %v2262, %v2295
  %v2297 = vpop.f32.mrf.mxu0
  %v2298 = vadd.f32 %v2264, %v2297
  %2299 = vmatmul.bf16.gmra.mxu0 %v1576
  %v2300 = vpop.f32.mrf.mxu0
  %v2301 = vadd.f32 %v2267, %v2300
  %v2302 = vpop.f32.mrf.mxu0
  %v2303 = vadd.f32 %v2269, %v2302
  %2304 = vmatmul.bf16.gmra.mxu0 %v1595
  %v2305 = vpop.f32.mrf.mxu0
  %v2306 = vadd.f32 %v2272, %v2305
  %v2307 = vpop.f32.mrf.mxu0
  %v2308 = vadd.f32 %v2274, %v2307
  %2309 = vmatmul.bf16.gmra.mxu0 %v1615
  %v2310 = vpop.f32.mrf.mxu0
  %v2311 = vadd.f32 %v2277, %v2310
  %v2312 = vpop.f32.mrf.mxu0
  %v2313 = vadd.f32 %v2279, %v2312
  %2314 = vdwg.mxu0
  %2315 = vmatpush.bf16.msra.mxu0 %v1946
  %2316 = vmatpush.bf16.msra.mxu0 %v1944
  %2317 = vmatpush.bf16.msra.mxu0 %v1942
  %2318 = vmatpush.bf16.msra.mxu0 %v1940
  %2319 = vmatpush.bf16.msra.mxu0 %v1938
  %2320 = vmatpush.bf16.msra.mxu0 %v1936
  %2321 = vmatpush.bf16.msra.mxu0 %v1934
  %2322 = vmatpush.bf16.msra.mxu0 %v1932
  %2323 = vmatmul.bf16.gmra.mxu0 %v1538
  %v2324 = vpop.f32.mrf.mxu0
  %v2325 = vadd.f32 %v2291, %v2324
  %v2326 = vpop.f32.mrf.mxu0
  %v2327 = vadd.f32 %v2293, %v2326
  %2328 = vmatmul.bf16.gmra.mxu0 %v1557
  %v2329 = vpop.f32.mrf.mxu0
  %v2330 = vadd.f32 %v2296, %v2329
  %v2331 = vpop.f32.mrf.mxu0
  %v2332 = vadd.f32 %v2298, %v2331
  %2333 = vmatmul.bf16.gmra.mxu0 %v1577
  %v2334 = vpop.f32.mrf.mxu0
  %v2335 = vadd.f32 %v2301, %v2334
  %v2336 = vpop.f32.mrf.mxu0
  %v2337 = vadd.f32 %v2303, %v2336
  %2338 = vmatmul.bf16.gmra.mxu0 %v1596
  %v2339 = vpop.f32.mrf.mxu0
  %v2340 = vadd.f32 %v2306, %v2339
  %v2341 = vpop.f32.mrf.mxu0
  %v2342 = vadd.f32 %v2308, %v2341
  %2343 = vmatmul.bf16.gmra.mxu0 %v1616
  %v2344 = vpop.f32.mrf.mxu0
  %v2345 = vadd.f32 %v2311, %v2344
  %v2346 = vpop.f32.mrf.mxu0
  %v2347 = vadd.f32 %v2313, %v2346
  %2348 = vdwg.mxu0
  %2349 = vmatpush.bf16.msra.mxu0 %v1962
  %2350 = vmatpush.bf16.msra.mxu0 %v1960
  %2351 = vmatpush.bf16.msra.mxu0 %v1958
  %2352 = vmatpush.bf16.msra.mxu0 %v1956
  %2353 = vmatpush.bf16.msra.mxu0 %v1954
  %2354 = vmatpush.bf16.msra.mxu0 %v1952
  %2355 = vmatpush.bf16.msra.mxu0 %v1950
  %2356 = vmatpush.bf16.msra.mxu0 %v1948
  %2357 = vmatmul.bf16.gmra.mxu0 %v1539
  %v2358 = vpop.f32.mrf.mxu0
  %v2359 = vadd.f32 %v2325, %v2358
  %v2360 = vpop.f32.mrf.mxu0
  %v2361 = vadd.f32 %v2327, %v2360
  %2362 = vmatmul.bf16.gmra.mxu0 %v1558
  %v2363 = vpop.f32.mrf.mxu0
  %v2364 = vadd.f32 %v2330, %v2363
  %v2365 = vpop.f32.mrf.mxu0
  %v2366 = vadd.f32 %v2332, %v2365
  %2367 = vmatmul.bf16.gmra.mxu0 %v1578
  %v2368 = vpop.f32.mrf.mxu0
  %v2369 = vadd.f32 %v2335, %v2368
  %v2370 = vpop.f32.mrf.mxu0
  %v2371 = vadd.f32 %v2337, %v2370
  %2372 = vmatmul.bf16.gmra.mxu0 %v1597
  %v2373 = vpop.f32.mrf.mxu0
  %v2374 = vadd.f32 %v2340, %v2373
  %v2375 = vpop.f32.mrf.mxu0
  %v2376 = vadd.f32 %v2342, %v2375
  %2377 = vmatmul.bf16.gmra.mxu0 %v1617
  %v2378 = vpop.f32.mrf.mxu0
  %v2379 = vadd.f32 %v2345, %v2378
  %v2380 = vpop.f32.mrf.mxu0
  %v2381 = vadd.f32 %v2347, %v2380
  %2382 = vdwg.mxu0
  %v2403 = vrot.slane %v2359, 6
  %v2404 = vrot.slane %v2361, 6
  %v2405 = vrot.slane %v2364, 6
  %v2406 = vrot.slane %v2366, 6
  %v2407 = vrot.slane %v2369, 6
  %v2408 = vrot.slane %v2371, 6
  %v2409 = vrot.slane %v2374, 6
  %v2410 = vrot.slane %v2376, 6
  %v2411 = vrot.slane %v2379, 6
  %v2412 = vrot.slane %v2381, 6
  %v2413 = vsel %vm1166, %v2189, %v2403
  %v2414 = vsel %vm1184, %v2189, %v2403
  %v2415 = vrot.slane %v2414, 2
  %v2416 = vsel %vm1202, %v2189, %v2403
  %v2417 = vrot.slane %v2416, 4
  %vm2418 = vcmask 1045504
  %v2419 = vsel %vm2418, %v2403, %v2189
  %v2420 = vrot.slane %v2419, 6
  %v2421 = vsel %vm1166, %v2191, %v2404
  %v2422 = vsel %vm1184, %v2191, %v2404
  %v2423 = vrot.slane %v2422, 2
  %v2424 = vsel %vm1202, %v2191, %v2404
  %v2425 = vrot.slane %v2424, 4
  %v2426 = vsel %vm2418, %v2404, %v2191
  %v2427 = vrot.slane %v2426, 6
  %v2428 = vsel %vm1166, %v2194, %v2405
  %v2429 = vsel %vm1184, %v2194, %v2405
  %v2430 = vrot.slane %v2429, 2
  %v2431 = vsel %vm1202, %v2194, %v2405
  %v2432 = vrot.slane %v2431, 4
  %v2433 = vsel %vm2418, %v2405, %v2194
  %v2434 = vrot.slane %v2433, 6
  %v2435 = vsel %vm1166, %v2196, %v2406
  %v2436 = vsel %vm1184, %v2196, %v2406
  %v2437 = vrot.slane %v2436, 2
  %v2438 = vsel %vm1202, %v2196, %v2406
  %v2439 = vrot.slane %v2438, 4
  %v2440 = vsel %vm2418, %v2406, %v2196
  %v2441 = vrot.slane %v2440, 6
  %v2442 = vsel %vm1166, %v2199, %v2407
  %v2443 = vsel %vm1184, %v2199, %v2407
  %v2444 = vrot.slane %v2443, 2
  %v2445 = vsel %vm1202, %v2199, %v2407
  %v2446 = vrot.slane %v2445, 4
  %v2447 = vsel %vm2418, %v2407, %v2199
  %v2448 = vrot.slane %v2447, 6
  %v2449 = vsel %vm1166, %v2201, %v2408
  %v2450 = vsel %vm1184, %v2201, %v2408
  %v2451 = vrot.slane %v2450, 2
  %v2452 = vsel %vm1202, %v2201, %v2408
  %v2453 = vrot.slane %v2452, 4
  %v2454 = vsel %vm2418, %v2408, %v2201
  %v2455 = vrot.slane %v2454, 6
  %v2456 = vsel %vm1166, %v2204, %v2409
  %v2457 = vsel %vm1184, %v2204, %v2409
  %v2458 = vrot.slane %v2457, 2
  %v2459 = vsel %vm1202, %v2204, %v2409
  %v2460 = vrot.slane %v2459, 4
  %v2461 = vsel %vm2418, %v2409, %v2204
  %v2462 = vrot.slane %v2461, 6
  %v2463 = vsel %vm1166, %v2206, %v2410
  %v2464 = vsel %vm1184, %v2206, %v2410
  %v2465 = vrot.slane %v2464, 2
  %v2466 = vsel %vm1202, %v2206, %v2410
  %v2467 = vrot.slane %v2466, 4
  %v2468 = vsel %vm2418, %v2410, %v2206
  %v2469 = vrot.slane %v2468, 6
  %v2470 = vsel %vm1166, %v2209, %v2411
  %v2471 = vsel %vm1184, %v2209, %v2411
  %v2472 = vrot.slane %v2471, 2
  %v2473 = vsel %vm1202, %v2209, %v2411
  %v2474 = vrot.slane %v2473, 4
  %v2475 = vsel %vm2418, %v2411, %v2209
  %v2476 = vrot.slane %v2475, 6
  %v2477 = vsel %vm1166, %v2211, %v2412
  %v2478 = vsel %vm1184, %v2211, %v2412
  %v2479 = vrot.slane %v2478, 2
  %v2480 = vsel %vm1202, %v2211, %v2412
  %v2481 = vrot.slane %v2480, 4
  %v2482 = vsel %vm2418, %v2412, %v2211
  %v2483 = vrot.slane %v2482, 6
  %2484 = vst [vmem:[#allocation1] ss:$4 sm:$0xff] %v2413
  %v2485 = vld.sshfl [vmem:[#allocation1] sm:$0xff pattern:$0x73625140]
  %v2486 = vld.sshfl [vmem:[#allocation1 + $0x8] sm:$0xff pattern:$0x73625140]
  %s2487 = scalar_lea.vmem [#allocation1], 32
  %2488 = vst [vmem:[%s2487] ss:$4 sm:$0xff] %v2415
  %v2489 = vld.sshfl [vmem:[#allocation1 + $0x20] sm:$0xff pattern:$0x73625140]
  %v2490 = vld.sshfl [vmem:[#allocation1 + $0x28] sm:$0xff pattern:$0x73625140]
  %2491 = vst [vmem:[#allocation1] ss:$4 sm:$0xff] %v2417
  %v2492 = vld.sshfl [vmem:[#allocation1] sm:$0xff pattern:$0x73625140]
  %v2493 = vld.sshfl [vmem:[#allocation1 + $0x8] sm:$0xff pattern:$0x73625140]
  %2494 = vst [vmem:[%s2487] ss:$4 sm:$0xff] %v2420
  %v2495 = vld.sshfl [vmem:[#allocation1 + $0x20] sm:$0xff pattern:$0x73625140]
  %v2496 = vld.sshfl [vmem:[#allocation1 + $0x28] sm:$0xff pattern:$0x73625140]
  %2497 = vst [vmem:[#allocation1] ss:$4 sm:$0xff] %v2421
  %v2498 = vld.sshfl [vmem:[#allocation1] sm:$0xff pattern:$0x73625140]
  %v2499 = vld.sshfl [vmem:[#allocation1 + $0x8] sm:$0xff pattern:$0x73625140]
  %2500 = vst [vmem:[%s2487] ss:$4 sm:$0xff] %v2423
  %v2501 = vld.sshfl [vmem:[#allocation1 + $0x20] sm:$0xff pattern:$0x73625140]
  %v2502 = vld.sshfl [vmem:[#allocation1 + $0x28] sm:$0xff pattern:$0x73625140]
  %2503 = vst [vmem:[#allocation1] ss:$4 sm:$0xff] %v2425
  %v2504 = vld.sshfl [vmem:[#allocation1] sm:$0xff pattern:$0x73625140]
  %v2505 = vld.sshfl [vmem:[#allocation1 + $0x8] sm:$0xff pattern:$0x73625140]
  %2506 = vst [vmem:[%s2487] ss:$4 sm:$0xff] %v2427
  %v2507 = vld.sshfl [vmem:[#allocation1 + $0x20] sm:$0xff pattern:$0x73625140]
  %v2508 = vld.sshfl [vmem:[#allocation1 + $0x28] sm:$0xff pattern:$0x73625140]
  %2509 = vst [vmem:[#allocation1] ss:$4 sm:$0xff] %v2428
  %v2510 = vld.sshfl [vmem:[#allocation1] sm:$0xff pattern:$0x73625140]
  %v2511 = vld.sshfl [vmem:[#allocation1 + $0x8] sm:$0xff pattern:$0x73625140]
  %2512 = vst [vmem:[%s2487] ss:$4 sm:$0xff] %v2430
  %v2513 = vld.sshfl [vmem:[#allocation1 + $0x20] sm:$0xff pattern:$0x73625140]
  %v2514 = vld.sshfl [vmem:[#allocation1 + $0x28] sm:$0xff pattern:$0x73625140]
  %2515 = vst [vmem:[#allocation1] ss:$4 sm:$0xff] %v2432
  %v2516 = vld.sshfl [vmem:[#allocation1] sm:$0xff pattern:$0x73625140]
  %v2517 = vld.sshfl [vmem:[#allocation1 + $0x8] sm:$0xff pattern:$0x73625140]
  %2518 = vst [vmem:[%s2487] ss:$4 sm:$0xff] %v2434
  %v2519 = vld.sshfl [vmem:[#allocation1 + $0x20] sm:$0xff pattern:$0x73625140]
  %v2520 = vld.sshfl [vmem:[#allocation1 + $0x28] sm:$0xff pattern:$0x73625140]
  %2521 = vst [vmem:[#allocation1] ss:$4 sm:$0xff] %v2435
  %v2522 = vld.sshfl [vmem:[#allocation1] sm:$0xff pattern:$0x73625140]
  %v2523 = vld.sshfl [vmem:[#allocation1 + $0x8] sm:$0xff pattern:$0x73625140]
  %2524 = vst [vmem:[%s2487] ss:$4 sm:$0xff] %v2437
  %v2525 = vld.sshfl [vmem:[#allocation1 + $0x20] sm:$0xff pattern:$0x73625140]
  %v2526 = vld.sshfl [vmem:[#allocation1 + $0x28] sm:$0xff pattern:$0x73625140]
  %2527 = vst [vmem:[#allocation1] ss:$4 sm:$0xff] %v2439
  %v2528 = vld.sshfl [vmem:[#allocation1] sm:$0xff pattern:$0x73625140]
  %v2529 = vld.sshfl [vmem:[#allocation1 + $0x8] sm:$0xff pattern:$0x73625140]
  %2530 = vst [vmem:[%s2487] ss:$4 sm:$0xff] %v2441
  %v2531 = vld.sshfl [vmem:[#allocation1 + $0x20] sm:$0xff pattern:$0x73625140]
  %v2532 = vld.sshfl [vmem:[#allocation1 + $0x28] sm:$0xff pattern:$0x73625140]
  %2533 = vst [vmem:[#allocation1] ss:$4 sm:$0xff] %v2442
  %v2534 = vld.sshfl [vmem:[#allocation1] sm:$0xff pattern:$0x73625140]
  %v2535 = vld.sshfl [vmem:[#allocation1 + $0x8] sm:$0xff pattern:$0x73625140]
  %2536 = vst [vmem:[%s2487] ss:$4 sm:$0xff] %v2444
  %v2537 = vld.sshfl [vmem:[#allocation1 + $0x20] sm:$0xff pattern:$0x73625140]
  %v2538 = vld.sshfl [vmem:[#allocation1 + $0x28] sm:$0xff pattern:$0x73625140]
  %2539 = vst [vmem:[#allocation1] ss:$4 sm:$0xff] %v2446
  %v2540 = vld.sshfl [vmem:[#allocation1] sm:$0xff pattern:$0x73625140]
  %v2541 = vld.sshfl [vmem:[#allocation1 + $0x8] sm:$0xff pattern:$0x73625140]
  %2542 = vst [vmem:[%s2487] ss:$4 sm:$0xff] %v2448
  %v2543 = vld.sshfl [vmem:[#allocation1 + $0x20] sm:$0xff pattern:$0x73625140]
  %v2544 = vld.sshfl [vmem:[#allocation1 + $0x28] sm:$0xff pattern:$0x73625140]
  %2545 = vst [vmem:[#allocation1] ss:$4 sm:$0xff] %v2449
  %v2546 = vld.sshfl [vmem:[#allocation1] sm:$0xff pattern:$0x73625140]
  %v2547 = vld.sshfl [vmem:[#allocation1 + $0x8] sm:$0xff pattern:$0x73625140]
  %2548 = vst [vmem:[%s2487] ss:$4 sm:$0xff] %v2451
  %v2549 = vld.sshfl [vmem:[#allocation1 + $0x20] sm:$0xff pattern:$0x73625140]
  %v2550 = vld.sshfl [vmem:[#allocation1 + $0x28] sm:$0xff pattern:$0x73625140]
  %2551 = vst [vmem:[#allocation1] ss:$4 sm:$0xff] %v2453
  %v2552 = vld.sshfl [vmem:[#allocation1] sm:$0xff pattern:$0x73625140]
  %v2553 = vld.sshfl [vmem:[#allocation1 + $0x8] sm:$0xff pattern:$0x73625140]
  %2554 = vst [vmem:[%s2487] ss:$4 sm:$0xff] %v2455
  %v2555 = vld.sshfl [vmem:[#allocation1 + $0x20] sm:$0xff pattern:$0x73625140]
  %v2556 = vld.sshfl [vmem:[#allocation1 + $0x28] sm:$0xff pattern:$0x73625140]
  %2557 = vst [vmem:[#allocation1] ss:$4 sm:$0xff] %v2456
  %v2558 = vld.sshfl [vmem:[#allocation1] sm:$0xff pattern:$0x73625140]
  %v2559 = vld.sshfl [vmem:[#allocation1 + $0x8] sm:$0xff pattern:$0x73625140]
  %2560 = vst [vmem:[%s2487] ss:$4 sm:$0xff] %v2458
  %v2561 = vld.sshfl [vmem:[#allocation1 + $0x20] sm:$0xff pattern:$0x73625140]
  %v2562 = vld.sshfl [vmem:[#allocation1 + $0x28] sm:$0xff pattern:$0x73625140]
  %2563 = vst [vmem:[#allocation1] ss:$4 sm:$0xff] %v2460
  %v2564 = vld.sshfl [vmem:[#allocation1] sm:$0xff pattern:$0x73625140]
  %v2565 = vld.sshfl [vmem:[#allocation1 + $0x8] sm:$0xff pattern:$0x73625140]
  %2566 = vst [vmem:[%s2487] ss:$4 sm:$0xff] %v2462
  %v2567 = vld.sshfl [vmem:[#allocation1 + $0x20] sm:$0xff pattern:$0x73625140]
  %v2568 = vld.sshfl [vmem:[#allocation1 + $0x28] sm:$0xff pattern:$0x73625140]
  %2569 = vst [vmem:[#allocation1] ss:$4 sm:$0xff] %v2463
  %v2570 = vld.sshfl [vmem:[#allocation1] sm:$0xff pattern:$0x73625140]
  %v2571 = vld.sshfl [vmem:[#allocation1 + $0x8] sm:$0xff pattern:$0x73625140]
  %2572 = vst [vmem:[%s2487] ss:$4 sm:$0xff] %v2465
  %v2573 = vld.sshfl [vmem:[#allocation1 + $0x20] sm:$0xff pattern:$0x73625140]
  %v2574 = vld.sshfl [vmem:[#allocation1 + $0x28] sm:$0xff pattern:$0x73625140]
  %2575 = vst [vmem:[#allocation1] ss:$4 sm:$0xff] %v2467
  %v2576 = vld.sshfl [vmem:[#allocation1] sm:$0xff pattern:$0x73625140]
  %v2577 = vld.sshfl [vmem:[#allocation1 + $0x8] sm:$0xff pattern:$0x73625140]
  %2578 = vst [vmem:[%s2487] ss:$4 sm:$0xff] %v2469
  %v2579 = vld.sshfl [vmem:[#allocation1 + $0x20] sm:$0xff pattern:$0x73625140]
  %v2580 = vld.sshfl [vmem:[#allocation1 + $0x28] sm:$0xff pattern:$0x73625140]
  %2581 = vst [vmem:[#allocation1] ss:$4 sm:$0xff] %v2470
  %v2582 = vld.sshfl [vmem:[#allocation1] sm:$0xff pattern:$0x73625140]
  %v2583 = vld.sshfl [vmem:[#allocation1 + $0x8] sm:$0xff pattern:$0x73625140]
  %2584 = vst [vmem:[%s2487] ss:$4 sm:$0xff] %v2472
  %v2585 = vld.sshfl [vmem:[#allocation1 + $0x20] sm:$0xff pattern:$0x73625140]
  %v2586 = vld.sshfl [vmem:[#allocation1 + $0x28] sm:$0xff pattern:$0x73625140]
  %2587 = vst [vmem:[#allocation1] ss:$4 sm:$0xff] %v2474
  %v2588 = vld.sshfl [vmem:[#allocation1] sm:$0xff pattern:$0x73625140]
  %v2589 = vld.sshfl [vmem:[#allocation1 + $0x8] sm:$0xff pattern:$0x73625140]
  %2590 = vst [vmem:[%s2487] ss:$4 sm:$0xff] %v2476
  %v2591 = vld.sshfl [vmem:[#allocation1 + $0x20] sm:$0xff pattern:$0x73625140]
  %v2592 = vld.sshfl [vmem:[#allocation1 + $0x28] sm:$0xff pattern:$0x73625140]
  %2593 = vst [vmem:[#allocation1] ss:$4 sm:$0xff] %v2477
  %v2594 = vld.sshfl [vmem:[#allocation1] sm:$0xff pattern:$0x73625140]
  %v2595 = vld.sshfl [vmem:[#allocation1 + $0x8] sm:$0xff pattern:$0x73625140]
  %2596 = vst [vmem:[%s2487] ss:$4 sm:$0xff] %v2479
  %v2597 = vld.sshfl [vmem:[#allocation1 + $0x20] sm:$0xff pattern:$0x73625140]
  %v2598 = vld.sshfl [vmem:[#allocation1 + $0x28] sm:$0xff pattern:$0x73625140]
  %2599 = vst [vmem:[#allocation1] ss:$4 sm:$0xff] %v2481
  %v2600 = vld.sshfl [vmem:[#allocation1] sm:$0xff pattern:$0x73625140]
  %v2601 = vld.sshfl [vmem:[#allocation1 + $0x8] sm:$0xff pattern:$0x73625140]
  %2602 = vst [vmem:[%s2487] ss:$4 sm:$0xff] %v2483
  %v2603 = vld.sshfl [vmem:[#allocation1 + $0x20] sm:$0xff pattern:$0x73625140]
  %v2604 = vld.sshfl [vmem:[#allocation1 + $0x28] sm:$0xff pattern:$0x73625140]
  %v2685 = vsel %vm1166, %v2485, -inf
  %v2686 = vrot.slane %v2685, 4
  %v2687 = vmax.f32 %v2685, %v2686
  %v2688 = vrot.slane %v2687, 2
  %v2689 = vmax.f32 %v2687, %v2688
  %v2690 = vrot.slane %v2689, 1
  %v2691 = vmax.f32 %v2689, %v2690
  %v2692 = vsel %vm1166, %v2486, -inf
  %v2693 = vrot.slane %v2692, 4
  %v2694 = vmax.f32 %v2692, %v2693
  %v2695 = vrot.slane %v2694, 2
  %v2696 = vmax.f32 %v2694, %v2695
  %v2697 = vrot.slane %v2696, 1
  %v2698 = vmax.f32 %v2696, %v2697
  %v2699 = vsel %vm1166, %v2489, -inf
  %v2700 = vrot.slane %v2699, 4
  %v2701 = vmax.f32 %v2699, %v2700
  %v2702 = vrot.slane %v2701, 2
  %v2703 = vmax.f32 %v2701, %v2702
  %v2704 = vrot.slane %v2703, 1
  %v2705 = vmax.f32 %v2703, %v2704
  %v2706 = vsel %vm1166, %v2490, -inf
  %v2707 = vrot.slane %v2706, 4
  %v2708 = vmax.f32 %v2706, %v2707
  %v2709 = vrot.slane %v2708, 2
  %v2710 = vmax.f32 %v2708, %v2709
  %v2711 = vrot.slane %v2710, 1
  %v2712 = vmax.f32 %v2710, %v2711
  %v2713 = vsel %vm1166, %v2492, -inf
  %v2714 = vrot.slane %v2713, 4
  %v2715 = vmax.f32 %v2713, %v2714
  %v2716 = vrot.slane %v2715, 2
  %v2717 = vmax.f32 %v2715, %v2716
  %v2718 = vrot.slane %v2717, 1
  %v2719 = vmax.f32 %v2717, %v2718
  %v2720 = vsel %vm1166, %v2493, -inf
  %v2721 = vrot.slane %v2720, 4
  %v2722 = vmax.f32 %v2720, %v2721
  %v2723 = vrot.slane %v2722, 2
  %v2724 = vmax.f32 %v2722, %v2723
  %v2725 = vrot.slane %v2724, 1
  %v2726 = vmax.f32 %v2724, %v2725
  %v2727 = vsel %vm1166, %v2495, -inf
  %v2728 = vrot.slane %v2727, 4
  %v2729 = vmax.f32 %v2727, %v2728
  %v2730 = vrot.slane %v2729, 2
  %v2731 = vmax.f32 %v2729, %v2730
  %v2732 = vrot.slane %v2731, 1
  %v2733 = vmax.f32 %v2731, %v2732
  %v2734 = vsel %vm1166, %v2496, -inf
  %v2735 = vrot.slane %v2734, 4
  %v2736 = vmax.f32 %v2734, %v2735
  %v2737 = vrot.slane %v2736, 2
  %v2738 = vmax.f32 %v2736, %v2737
  %v2739 = vrot.slane %v2738, 1
  %v2740 = vmax.f32 %v2738, %v2739
  %v2741 = vsel %vm1166, %v2498, -inf
  %v2742 = vrot.slane %v2741, 4
  %v2743 = vmax.f32 %v2741, %v2742
  %v2744 = vrot.slane %v2743, 2
  %v2745 = vmax.f32 %v2743, %v2744
  %v2746 = vrot.slane %v2745, 1
  %v2747 = vmax.f32 %v2745, %v2746
  %v2748 = vsel %vm1166, %v2499, -inf
  %v2749 = vrot.slane %v2748, 4
  %v2750 = vmax.f32 %v2748, %v2749
  %v2751 = vrot.slane %v2750, 2
  %v2752 = vmax.f32 %v2750, %v2751
  %v2753 = vrot.slane %v2752, 1
  %v2754 = vmax.f32 %v2752, %v2753
  %v2755 = vsel %vm1166, %v2501, -inf
  %v2756 = vrot.slane %v2755, 4
  %v2757 = vmax.f32 %v2755, %v2756
  %v2758 = vrot.slane %v2757, 2
  %v2759 = vmax.f32 %v2757, %v2758
  %v2760 = vrot.slane %v2759, 1
  %v2761 = vmax.f32 %v2759, %v2760
  %v2762 = vsel %vm1166, %v2502, -inf
  %v2763 = vrot.slane %v2762, 4
  %v2764 = vmax.f32 %v2762, %v2763
  %v2765 = vrot.slane %v2764, 2
  %v2766 = vmax.f32 %v2764, %v2765
  %v2767 = vrot.slane %v2766, 1
  %v2768 = vmax.f32 %v2766, %v2767
  %v2769 = vsel %vm1166, %v2504, -inf
  %v2770 = vrot.slane %v2769, 4
  %v2771 = vmax.f32 %v2769, %v2770
  %v2772 = vrot.slane %v2771, 2
  %v2773 = vmax.f32 %v2771, %v2772
  %v2774 = vrot.slane %v2773, 1
  %v2775 = vmax.f32 %v2773, %v2774
  %v2776 = vsel %vm1166, %v2505, -inf
  %v2777 = vrot.slane %v2776, 4
  %v2778 = vmax.f32 %v2776, %v2777
  %v2779 = vrot.slane %v2778, 2
  %v2780 = vmax.f32 %v2778, %v2779
  %v2781 = vrot.slane %v2780, 1
  %v2782 = vmax.f32 %v2780, %v2781
  %v2783 = vsel %vm1166, %v2507, -inf
  %v2784 = vrot.slane %v2783, 4
  %v2785 = vmax.f32 %v2783, %v2784
  %v2786 = vrot.slane %v2785, 2
  %v2787 = vmax.f32 %v2785, %v2786
  %v2788 = vrot.slane %v2787, 1
  %v2789 = vmax.f32 %v2787, %v2788
  %v2790 = vsel %vm1166, %v2508, -inf
  %v2791 = vrot.slane %v2790, 4
  %v2792 = vmax.f32 %v2790, %v2791
  %v2793 = vrot.slane %v2792, 2
  %v2794 = vmax.f32 %v2792, %v2793
  %v2795 = vrot.slane %v2794, 1
  %v2796 = vmax.f32 %v2794, %v2795
  %v2797 = vsel %vm1166, %v2510, -inf
  %v2798 = vrot.slane %v2797, 4
  %v2799 = vmax.f32 %v2797, %v2798
  %v2800 = vrot.slane %v2799, 2
  %v2801 = vmax.f32 %v2799, %v2800
  %v2802 = vrot.slane %v2801, 1
  %v2803 = vmax.f32 %v2801, %v2802
  %v2804 = vsel %vm1166, %v2511, -inf
  %v2805 = vrot.slane %v2804, 4
  %v2806 = vmax.f32 %v2804, %v2805
  %v2807 = vrot.slane %v2806, 2
  %v2808 = vmax.f32 %v2806, %v2807
  %v2809 = vrot.slane %v2808, 1
  %v2810 = vmax.f32 %v2808, %v2809
  %v2811 = vsel %vm1166, %v2513, -inf
  %v2812 = vrot.slane %v2811, 4
  %v2813 = vmax.f32 %v2811, %v2812
  %v2814 = vrot.slane %v2813, 2
  %v2815 = vmax.f32 %v2813, %v2814
  %v2816 = vrot.slane %v2815, 1
  %v2817 = vmax.f32 %v2815, %v2816
  %v2818 = vsel %vm1166, %v2514, -inf
  %v2819 = vrot.slane %v2818, 4
  %v2820 = vmax.f32 %v2818, %v2819
  %v2821 = vrot.slane %v2820, 2
  %v2822 = vmax.f32 %v2820, %v2821
  %v2823 = vrot.slane %v2822, 1
  %v2824 = vmax.f32 %v2822, %v2823
  %v2825 = vsel %vm1166, %v2516, -inf
  %v2826 = vrot.slane %v2825, 4
  %v2827 = vmax.f32 %v2825, %v2826
  %v2828 = vrot.slane %v2827, 2
  %v2829 = vmax.f32 %v2827, %v2828
  %v2830 = vrot.slane %v2829, 1
  %v2831 = vmax.f32 %v2829, %v2830
  %v2832 = vsel %vm1166, %v2517, -inf
  %v2833 = vrot.slane %v2832, 4
  %v2834 = vmax.f32 %v2832, %v2833
  %v2835 = vrot.slane %v2834, 2
  %v2836 = vmax.f32 %v2834, %v2835
  %v2837 = vrot.slane %v2836, 1
  %v2838 = vmax.f32 %v2836, %v2837
  %v2839 = vsel %vm1166, %v2519, -inf
  %v2840 = vrot.slane %v2839, 4
  %v2841 = vmax.f32 %v2839, %v2840
  %v2842 = vrot.slane %v2841, 2
  %v2843 = vmax.f32 %v2841, %v2842
  %v2844 = vrot.slane %v2843, 1
  %v2845 = vmax.f32 %v2843, %v2844
  %v2846 = vsel %vm1166, %v2520, -inf
  %v2847 = vrot.slane %v2846, 4
  %v2848 = vmax.f32 %v2846, %v2847
  %v2849 = vrot.slane %v2848, 2
  %v2850 = vmax.f32 %v2848, %v2849
  %v2851 = vrot.slane %v2850, 1
  %v2852 = vmax.f32 %v2850, %v2851
  %v2853 = vsel %vm1166, %v2522, -inf
  %v2854 = vrot.slane %v2853, 4
  %v2855 = vmax.f32 %v2853, %v2854
  %v2856 = vrot.slane %v2855, 2
  %v2857 = vmax.f32 %v2855, %v2856
  %v2858 = vrot.slane %v2857, 1
  %v2859 = vmax.f32 %v2857, %v2858
  %v2860 = vsel %vm1166, %v2523, -inf
  %v2861 = vrot.slane %v2860, 4
  %v2862 = vmax.f32 %v2860, %v2861
  %v2863 = vrot.slane %v2862, 2
  %v2864 = vmax.f32 %v2862, %v2863
  %v2865 = vrot.slane %v2864, 1
  %v2866 = vmax.f32 %v2864, %v2865
  %v2867 = vsel %vm1166, %v2525, -inf
  %v2868 = vrot.slane %v2867, 4
  %v2869 = vmax.f32 %v2867, %v2868
  %v2870 = vrot.slane %v2869, 2
  %v2871 = vmax.f32 %v2869, %v2870
  %v2872 = vrot.slane %v2871, 1
  %v2873 = vmax.f32 %v2871, %v2872
  %v2874 = vsel %vm1166, %v2526, -inf
  %v2875 = vrot.slane %v2874, 4
  %v2876 = vmax.f32 %v2874, %v2875
  %v2877 = vrot.slane %v2876, 2
  %v2878 = vmax.f32 %v2876, %v2877
  %v2879 = vrot.slane %v2878, 1
  %v2880 = vmax.f32 %v2878, %v2879
  %v2881 = vsel %vm1166, %v2528, -inf
  %v2882 = vrot.slane %v2881, 4
  %v2883 = vmax.f32 %v2881, %v2882
  %v2884 = vrot.slane %v2883, 2
  %v2885 = vmax.f32 %v2883, %v2884
  %v2886 = vrot.slane %v2885, 1
  %v2887 = vmax.f32 %v2885, %v2886
  %v2888 = vsel %vm1166, %v2529, -inf
  %v2889 = vrot.slane %v2888, 4
  %v2890 = vmax.f32 %v2888, %v2889
  %v2891 = vrot.slane %v2890, 2
  %v2892 = vmax.f32 %v2890, %v2891
  %v2893 = vrot.slane %v2892, 1
  %v2894 = vmax.f32 %v2892, %v2893
  %v2895 = vsel %vm1166, %v2531, -inf
  %v2896 = vrot.slane %v2895, 4
  %v2897 = vmax.f32 %v2895, %v2896
  %v2898 = vrot.slane %v2897, 2
  %v2899 = vmax.f32 %v2897, %v2898
  %v2900 = vrot.slane %v2899, 1
  %v2901 = vmax.f32 %v2899, %v2900
  %v2902 = vsel %vm1166, %v2532, -inf
  %v2903 = vrot.slane %v2902, 4
  %v2904 = vmax.f32 %v2902, %v2903
  %v2905 = vrot.slane %v2904, 2
  %v2906 = vmax.f32 %v2904, %v2905
  %v2907 = vrot.slane %v2906, 1
  %v2908 = vmax.f32 %v2906, %v2907
  %v2909 = vsel %vm1166, %v2534, -inf
  %v2910 = vrot.slane %v2909, 4
  %v2911 = vmax.f32 %v2909, %v2910
  %v2912 = vrot.slane %v2911, 2
  %v2913 = vmax.f32 %v2911, %v2912
  %v2914 = vrot.slane %v2913, 1
  %v2915 = vmax.f32 %v2913, %v2914
  %v2916 = vsel %vm1166, %v2535, -inf
  %v2917 = vrot.slane %v2916, 4
  %v2918 = vmax.f32 %v2916, %v2917
  %v2919 = vrot.slane %v2918, 2
  %v2920 = vmax.f32 %v2918, %v2919
  %v2921 = vrot.slane %v2920, 1
  %v2922 = vmax.f32 %v2920, %v2921
  %v2923 = vsel %vm1166, %v2537, -inf
  %v2924 = vrot.slane %v2923, 4
  %v2925 = vmax.f32 %v2923, %v2924
  %v2926 = vrot.slane %v2925, 2
  %v2927 = vmax.f32 %v2925, %v2926
  %v2928 = vrot.slane %v2927, 1
  %v2929 = vmax.f32 %v2927, %v2928
  %v2930 = vsel %vm1166, %v2538, -inf
  %v2931 = vrot.slane %v2930, 4
  %v2932 = vmax.f32 %v2930, %v2931
  %v2933 = vrot.slane %v2932, 2
  %v2934 = vmax.f32 %v2932, %v2933
  %v2935 = vrot.slane %v2934, 1
  %v2936 = vmax.f32 %v2934, %v2935
  %v2937 = vsel %vm1166, %v2540, -inf
  %v2938 = vrot.slane %v2937, 4
  %v2939 = vmax.f32 %v2937, %v2938
  %v2940 = vrot.slane %v2939, 2
  %v2941 = vmax.f32 %v2939, %v2940
  %v2942 = vrot.slane %v2941, 1
  %v2943 = vmax.f32 %v2941, %v2942
  %v2944 = vsel %vm1166, %v2541, -inf
  %v2945 = vrot.slane %v2944, 4
  %v2946 = vmax.f32 %v2944, %v2945
  %v2947 = vrot.slane %v2946, 2
  %v2948 = vmax.f32 %v2946, %v2947
  %v2949 = vrot.slane %v2948, 1
  %v2950 = vmax.f32 %v2948, %v2949
  %v2951 = vsel %vm1166, %v2543, -inf
  %v2952 = vrot.slane %v2951, 4
  %v2953 = vmax.f32 %v2951, %v2952
  %v2954 = vrot.slane %v2953, 2
  %v2955 = vmax.f32 %v2953, %v2954
  %v2956 = vrot.slane %v2955, 1
  %v2957 = vmax.f32 %v2955, %v2956
  %v2958 = vsel %vm1166, %v2544, -inf
  %v2959 = vrot.slane %v2958, 4
  %v2960 = vmax.f32 %v2958, %v2959
  %v2961 = vrot.slane %v2960, 2
  %v2962 = vmax.f32 %v2960, %v2961
  %v2963 = vrot.slane %v2962, 1
  %v2964 = vmax.f32 %v2962, %v2963
  %v2965 = vsel %vm1166, %v2546, -inf
  %v2966 = vrot.slane %v2965, 4
  %v2967 = vmax.f32 %v2965, %v2966
  %v2968 = vrot.slane %v2967, 2
  %v2969 = vmax.f32 %v2967, %v2968
  %v2970 = vrot.slane %v2969, 1
  %v2971 = vmax.f32 %v2969, %v2970
  %v2972 = vsel %vm1166, %v2547, -inf
  %v2973 = vrot.slane %v2972, 4
  %v2974 = vmax.f32 %v2972, %v2973
  %v2975 = vrot.slane %v2974, 2
  %v2976 = vmax.f32 %v2974, %v2975
  %v2977 = vrot.slane %v2976, 1
  %v2978 = vmax.f32 %v2976, %v2977
  %v2979 = vsel %vm1166, %v2549, -inf
  %v2980 = vrot.slane %v2979, 4
  %v2981 = vmax.f32 %v2979, %v2980
  %v2982 = vrot.slane %v2981, 2
  %v2983 = vmax.f32 %v2981, %v2982
  %v2984 = vrot.slane %v2983, 1
  %v2985 = vmax.f32 %v2983, %v2984
  %v2986 = vsel %vm1166, %v2550, -inf
  %v2987 = vrot.slane %v2986, 4
  %v2988 = vmax.f32 %v2986, %v2987
  %v2989 = vrot.slane %v2988, 2
  %v2990 = vmax.f32 %v2988, %v2989
  %v2991 = vrot.slane %v2990, 1
  %v2992 = vmax.f32 %v2990, %v2991
  %v2993 = vsel %vm1166, %v2552, -inf
  %v2994 = vrot.slane %v2993, 4
  %v2995 = vmax.f32 %v2993, %v2994
  %v2996 = vrot.slane %v2995, 2
  %v2997 = vmax.f32 %v2995, %v2996
  %v2998 = vrot.slane %v2997, 1
  %v2999 = vmax.f32 %v2997, %v2998
  %v3000 = vsel %vm1166, %v2553, -inf
  %v3001 = vrot.slane %v3000, 4
  %v3002 = vmax.f32 %v3000, %v3001
  %v3003 = vrot.slane %v3002, 2
  %v3004 = vmax.f32 %v3002, %v3003
  %v3005 = vrot.slane %v3004, 1
  %v3006 = vmax.f32 %v3004, %v3005
  %v3007 = vsel %vm1166, %v2555, -inf
  %v3008 = vrot.slane %v3007, 4
  %v3009 = vmax.f32 %v3007, %v3008
  %v3010 = vrot.slane %v3009, 2
  %v3011 = vmax.f32 %v3009, %v3010
  %v3012 = vrot.slane %v3011, 1
  %v3013 = vmax.f32 %v3011, %v3012
  %v3014 = vsel %vm1166, %v2556, -inf
  %v3015 = vrot.slane %v3014, 4
  %v3016 = vmax.f32 %v3014, %v3015
  %v3017 = vrot.slane %v3016, 2
  %v3018 = vmax.f32 %v3016, %v3017
  %v3019 = vrot.slane %v3018, 1
  %v3020 = vmax.f32 %v3018, %v3019
  %v3021 = vsel %vm1166, %v2558, -inf
  %v3022 = vrot.slane %v3021, 4
  %v3023 = vmax.f32 %v3021, %v3022
  %v3024 = vrot.slane %v3023, 2
  %v3025 = vmax.f32 %v3023, %v3024
  %v3026 = vrot.slane %v3025, 1
  %v3027 = vmax.f32 %v3025, %v3026
  %v3028 = vsel %vm1166, %v2559, -inf
  %v3029 = vrot.slane %v3028, 4
  %v3030 = vmax.f32 %v3028, %v3029
  %v3031 = vrot.slane %v3030, 2
  %v3032 = vmax.f32 %v3030, %v3031
  %v3033 = vrot.slane %v3032, 1
  %v3034 = vmax.f32 %v3032, %v3033
  %v3035 = vsel %vm1166, %v2561, -inf
  %v3036 = vrot.slane %v3035, 4
  %v3037 = vmax.f32 %v3035, %v3036
  %v3038 = vrot.slane %v3037, 2
  %v3039 = vmax.f32 %v3037, %v3038
  %v3040 = vrot.slane %v3039, 1
  %v3041 = vmax.f32 %v3039, %v3040
  %v3042 = vsel %vm1166, %v2562, -inf
  %v3043 = vrot.slane %v3042, 4
  %v3044 = vmax.f32 %v3042, %v3043
  %v3045 = vrot.slane %v3044, 2
  %v3046 = vmax.f32 %v3044, %v3045
  %v3047 = vrot.slane %v3046, 1
  %v3048 = vmax.f32 %v3046, %v3047
  %v3049 = vsel %vm1166, %v2564, -inf
  %v3050 = vrot.slane %v3049, 4
  %v3051 = vmax.f32 %v3049, %v3050
  %v3052 = vrot.slane %v3051, 2
  %v3053 = vmax.f32 %v3051, %v3052
  %v3054 = vrot.slane %v3053, 1
  %v3055 = vmax.f32 %v3053, %v3054
  %v3056 = vsel %vm1166, %v2565, -inf
  %v3057 = vrot.slane %v3056, 4
  %v3058 = vmax.f32 %v3056, %v3057
  %v3059 = vrot.slane %v3058, 2
  %v3060 = vmax.f32 %v3058, %v3059
  %v3061 = vrot.slane %v3060, 1
  %v3062 = vmax.f32 %v3060, %v3061
  %v3063 = vsel %vm1166, %v2567, -inf
  %v3064 = vrot.slane %v3063, 4
  %v3065 = vmax.f32 %v3063, %v3064
  %v3066 = vrot.slane %v3065, 2
  %v3067 = vmax.f32 %v3065, %v3066
  %v3068 = vrot.slane %v3067, 1
  %v3069 = vmax.f32 %v3067, %v3068
  %v3070 = vsel %vm1166, %v2568, -inf
  %v3071 = vrot.slane %v3070, 4
  %v3072 = vmax.f32 %v3070, %v3071
  %v3073 = vrot.slane %v3072, 2
  %v3074 = vmax.f32 %v3072, %v3073
  %v3075 = vrot.slane %v3074, 1
  %v3076 = vmax.f32 %v3074, %v3075
  %v3077 = vsel %vm1166, %v2570, -inf
  %v3078 = vrot.slane %v3077, 4
  %v3079 = vmax.f32 %v3077, %v3078
  %v3080 = vrot.slane %v3079, 2
  %v3081 = vmax.f32 %v3079, %v3080
  %v3082 = vrot.slane %v3081, 1
  %v3083 = vmax.f32 %v3081, %v3082
  %v3084 = vsel %vm1166, %v2571, -inf
  %v3085 = vrot.slane %v3084, 4
  %v3086 = vmax.f32 %v3084, %v3085
  %v3087 = vrot.slane %v3086, 2
  %v3088 = vmax.f32 %v3086, %v3087
  %v3089 = vrot.slane %v3088, 1
  %v3090 = vmax.f32 %v3088, %v3089
  %v3091 = vsel %vm1166, %v2573, -inf
  %v3092 = vrot.slane %v3091, 4
  %v3093 = vmax.f32 %v3091, %v3092
  %v3094 = vrot.slane %v3093, 2
  %v3095 = vmax.f32 %v3093, %v3094
  %v3096 = vrot.slane %v3095, 1
  %v3097 = vmax.f32 %v3095, %v3096
  %v3098 = vsel %vm1166, %v2574, -inf
  %v3099 = vrot.slane %v3098, 4
  %v3100 = vmax.f32 %v3098, %v3099
  %v3101 = vrot.slane %v3100, 2
  %v3102 = vmax.f32 %v3100, %v3101
  %v3103 = vrot.slane %v3102, 1
  %v3104 = vmax.f32 %v3102, %v3103
  %v3105 = vsel %vm1166, %v2576, -inf
  %v3106 = vrot.slane %v3105, 4
  %v3107 = vmax.f32 %v3105, %v3106
  %v3108 = vrot.slane %v3107, 2
  %v3109 = vmax.f32 %v3107, %v3108
  %v3110 = vrot.slane %v3109, 1
  %v3111 = vmax.f32 %v3109, %v3110
  %v3112 = vsel %vm1166, %v2577, -inf
  %v3113 = vrot.slane %v3112, 4
  %v3114 = vmax.f32 %v3112, %v3113
  %v3115 = vrot.slane %v3114, 2
  %v3116 = vmax.f32 %v3114, %v3115
  %v3117 = vrot.slane %v3116, 1
  %v3118 = vmax.f32 %v3116, %v3117
  %v3119 = vsel %vm1166, %v2579, -inf
  %v3120 = vrot.slane %v3119, 4
  %v3121 = vmax.f32 %v3119, %v3120
  %v3122 = vrot.slane %v3121, 2
  %v3123 = vmax.f32 %v3121, %v3122
  %v3124 = vrot.slane %v3123, 1
  %v3125 = vmax.f32 %v3123, %v3124
  %v3126 = vsel %vm1166, %v2580, -inf
  %v3127 = vrot.slane %v3126, 4
  %v3128 = vmax.f32 %v3126, %v3127
  %v3129 = vrot.slane %v3128, 2
  %v3130 = vmax.f32 %v3128, %v3129
  %v3131 = vrot.slane %v3130, 1
  %v3132 = vmax.f32 %v3130, %v3131
  %v3133 = vsel %vm1166, %v2582, -inf
  %v3134 = vrot.slane %v3133, 4
  %v3135 = vmax.f32 %v3133, %v3134
  %v3136 = vrot.slane %v3135, 2
  %v3137 = vmax.f32 %v3135, %v3136
  %v3138 = vrot.slane %v3137, 1
  %v3139 = vmax.f32 %v3137, %v3138
  %v3140 = vsel %vm1166, %v2583, -inf
  %v3141 = vrot.slane %v3140, 4
  %v3142 = vmax.f32 %v3140, %v3141
  %v3143 = vrot.slane %v3142, 2
  %v3144 = vmax.f32 %v3142, %v3143
  %v3145 = vrot.slane %v3144, 1
  %v3146 = vmax.f32 %v3144, %v3145
  %v3147 = vsel %vm1166, %v2585, -inf
  %v3148 = vrot.slane %v3147, 4
  %v3149 = vmax.f32 %v3147, %v3148
  %v3150 = vrot.slane %v3149, 2
  %v3151 = vmax.f32 %v3149, %v3150
  %v3152 = vrot.slane %v3151, 1
  %v3153 = vmax.f32 %v3151, %v3152
  %v3154 = vsel %vm1166, %v2586, -inf
  %v3155 = vrot.slane %v3154, 4
  %v3156 = vmax.f32 %v3154, %v3155
  %v3157 = vrot.slane %v3156, 2
  %v3158 = vmax.f32 %v3156, %v3157
  %v3159 = vrot.slane %v3158, 1
  %v3160 = vmax.f32 %v3158, %v3159
  %v3161 = vsel %vm1166, %v2588, -inf
  %v3162 = vrot.slane %v3161, 4
  %v3163 = vmax.f32 %v3161, %v3162
  %v3164 = vrot.slane %v3163, 2
  %v3165 = vmax.f32 %v3163, %v3164
  %v3166 = vrot.slane %v3165, 1
  %v3167 = vmax.f32 %v3165, %v3166
  %v3168 = vsel %vm1166, %v2589, -inf
  %v3169 = vrot.slane %v3168, 4
  %v3170 = vmax.f32 %v3168, %v3169
  %v3171 = vrot.slane %v3170, 2
  %v3172 = vmax.f32 %v3170, %v3171
  %v3173 = vrot.slane %v3172, 1
  %v3174 = vmax.f32 %v3172, %v3173
  %v3175 = vsel %vm1166, %v2591, -inf
  %v3176 = vrot.slane %v3175, 4
  %v3177 = vmax.f32 %v3175, %v3176
  %v3178 = vrot.slane %v3177, 2
  %v3179 = vmax.f32 %v3177, %v3178
  %v3180 = vrot.slane %v3179, 1
  %v3181 = vmax.f32 %v3179, %v3180
  %v3182 = vsel %vm1166, %v2592, -inf
  %v3183 = vrot.slane %v3182, 4
  %v3184 = vmax.f32 %v3182, %v3183
  %v3185 = vrot.slane %v3184, 2
  %v3186 = vmax.f32 %v3184, %v3185
  %v3187 = vrot.slane %v3186, 1
  %v3188 = vmax.f32 %v3186, %v3187
  %v3189 = vsel %vm1166, %v2594, -inf
  %v3190 = vrot.slane %v3189, 4
  %v3191 = vmax.f32 %v3189, %v3190
  %v3192 = vrot.slane %v3191, 2
  %v3193 = vmax.f32 %v3191, %v3192
  %v3194 = vrot.slane %v3193, 1
  %v3195 = vmax.f32 %v3193, %v3194
  %v3196 = vsel %vm1166, %v2595, -inf
  %v3197 = vrot.slane %v3196, 4
  %v3198 = vmax.f32 %v3196, %v3197
  %v3199 = vrot.slane %v3198, 2
  %v3200 = vmax.f32 %v3198, %v3199
  %v3201 = vrot.slane %v3200, 1
  %v3202 = vmax.f32 %v3200, %v3201
  %v3203 = vsel %vm1166, %v2597, -inf
  %v3204 = vrot.slane %v3203, 4
  %v3205 = vmax.f32 %v3203, %v3204
  %v3206 = vrot.slane %v3205, 2
  %v3207 = vmax.f32 %v3205, %v3206
  %v3208 = vrot.slane %v3207, 1
  %v3209 = vmax.f32 %v3207, %v3208
  %v3210 = vsel %vm1166, %v2598, -inf
  %v3211 = vrot.slane %v3210, 4
  %v3212 = vmax.f32 %v3210, %v3211
  %v3213 = vrot.slane %v3212, 2
  %v3214 = vmax.f32 %v3212, %v3213
  %v3215 = vrot.slane %v3214, 1
  %v3216 = vmax.f32 %v3214, %v3215
  %v3217 = vsel %vm1166, %v2600, -inf
  %v3218 = vrot.slane %v3217, 4
  %v3219 = vmax.f32 %v3217, %v3218
  %v3220 = vrot.slane %v3219, 2
  %v3221 = vmax.f32 %v3219, %v3220
  %v3222 = vrot.slane %v3221, 1
  %v3223 = vmax.f32 %v3221, %v3222
  %v3224 = vsel %vm1166, %v2601, -inf
  %v3225 = vrot.slane %v3224, 4
  %v3226 = vmax.f32 %v3224, %v3225
  %v3227 = vrot.slane %v3226, 2
  %v3228 = vmax.f32 %v3226, %v3227
  %v3229 = vrot.slane %v3228, 1
  %v3230 = vmax.f32 %v3228, %v3229
  %v3231 = vsel %vm1166, %v2603, -inf
  %v3232 = vrot.slane %v3231, 4
  %v3233 = vmax.f32 %v3231, %v3232
  %v3234 = vrot.slane %v3233, 2
  %v3235 = vmax.f32 %v3233, %v3234
  %v3236 = vrot.slane %v3235, 1
  %v3237 = vmax.f32 %v3235, %v3236
  %v3238 = vsel %vm1166, %v2604, -inf
  %v3239 = vrot.slane %v3238, 4
  %v3240 = vmax.f32 %v3238, %v3239
  %v3241 = vrot.slane %v3240, 2
  %v3242 = vmax.f32 %v3240, %v3241
  %v3243 = vrot.slane %v3242, 1
  %v3244 = vmax.f32 %v3242, %v3243
  %v3245 = vmax.f32 %v2691, %v2698
  %v3246 = vmax.f32 %v2705, %v2712
  %v3247 = vmax.f32 %v2719, %v2726
  %v3248 = vmax.f32 %v2733, %v2740
  %v3249 = vmax.f32 %v2747, %v2754
  %v3250 = vmax.f32 %v2761, %v2768
  %v3251 = vmax.f32 %v2775, %v2782
  %v3252 = vmax.f32 %v2789, %v2796
  %v3253 = vmax.f32 %v2803, %v2810
  %v3254 = vmax.f32 %v2817, %v2824
  %v3255 = vmax.f32 %v2831, %v2838
  %v3256 = vmax.f32 %v2845, %v2852
  %v3257 = vmax.f32 %v2859, %v2866
  %v3258 = vmax.f32 %v2873, %v2880
  %v3259 = vmax.f32 %v2887, %v2894
  %v3260 = vmax.f32 %v2901, %v2908
  %v3261 = vmax.f32 %v2915, %v2922
  %v3262 = vmax.f32 %v2929, %v2936
  %v3263 = vmax.f32 %v2943, %v2950
  %v3264 = vmax.f32 %v2957, %v2964
  %v3265 = vmax.f32 %v2971, %v2978
  %v3266 = vmax.f32 %v2985, %v2992
  %v3267 = vmax.f32 %v2999, %v3006
  %v3268 = vmax.f32 %v3013, %v3020
  %v3269 = vmax.f32 %v3027, %v3034
  %v3270 = vmax.f32 %v3041, %v3048
  %v3271 = vmax.f32 %v3055, %v3062
  %v3272 = vmax.f32 %v3069, %v3076
  %v3273 = vmax.f32 %v3083, %v3090
  %v3274 = vmax.f32 %v3097, %v3104
  %v3275 = vmax.f32 %v3111, %v3118
  %v3276 = vmax.f32 %v3125, %v3132
  %v3277 = vmax.f32 %v3139, %v3146
  %v3278 = vmax.f32 %v3153, %v3160
  %v3279 = vmax.f32 %v3167, %v3174
  %v3280 = vmax.f32 %v3181, %v3188
  %v3281 = vmax.f32 %v3195, %v3202
  %v3282 = vmax.f32 %v3209, %v3216
  %v3283 = vmax.f32 %v3223, %v3230
  %v3284 = vmax.f32 %v3237, %v3244
  %v3285 = vpack.c.bf16 %v3245, %v3245
  %v3286 = vpack.c.bf16 %v3246, %v3246
  %v3287 = vpack.c.bf16 %v3247, %v3247
  %v3288 = vpack.c.bf16 %v3248, %v3248
  %v3289 = vpack.c.bf16 %v3249, %v3249
  %v3290 = vpack.c.bf16 %v3250, %v3250
  %v3291 = vpack.c.bf16 %v3251, %v3251
  %v3292 = vpack.c.bf16 %v3252, %v3252
  %v3293 = vpack.c.bf16 %v3253, %v3253
  %v3294 = vpack.c.bf16 %v3254, %v3254
  %v3295 = vpack.c.bf16 %v3255, %v3255
  %v3296 = vpack.c.bf16 %v3256, %v3256
  %v3297 = vpack.c.bf16 %v3257, %v3257
  %v3298 = vpack.c.bf16 %v3258, %v3258
  %v3299 = vpack.c.bf16 %v3259, %v3259
  %v3300 = vpack.c.bf16 %v3260, %v3260
  %v3301 = vpack.c.bf16 %v3261, %v3261
  %v3302 = vpack.c.bf16 %v3262, %v3262
  %v3303 = vpack.c.bf16 %v3263, %v3263
  %v3304 = vpack.c.bf16 %v3264, %v3264
  %v3305 = vpack.c.bf16 %v3265, %v3265
  %v3306 = vpack.c.bf16 %v3266, %v3266
  %v3307 = vpack.c.bf16 %v3267, %v3267
  %v3308 = vpack.c.bf16 %v3268, %v3268
  %v3309 = vpack.c.bf16 %v3269, %v3269
  %v3310 = vpack.c.bf16 %v3270, %v3270
  %v3311 = vpack.c.bf16 %v3271, %v3271
  %v3312 = vpack.c.bf16 %v3272, %v3272
  %v3313 = vpack.c.bf16 %v3273, %v3273
  %v3314 = vpack.c.bf16 %v3274, %v3274
  %v3315 = vpack.c.bf16 %v3275, %v3275
  %v3316 = vpack.c.bf16 %v3276, %v3276
  %v3317 = vpack.c.bf16 %v3277, %v3277
  %v3318 = vpack.c.bf16 %v3278, %v3278
  %v3319 = vpack.c.bf16 %v3279, %v3279
  %v3320 = vpack.c.bf16 %v3280, %v3280
  %v3321 = vpack.c.bf16 %v3281, %v3281
  %v3322 = vpack.c.bf16 %v3282, %v3282
  %v3323 = vpack.c.bf16 %v3283, %v3283
  %v3324 = vpack.c.bf16 %v3284, %v3284
  %v3333 = vperm.slane %v3285, 0
  %v3334 = vperm.slane %v3290, 0
  %v3335 = vperm.slane %v3295, 0
  %v3336 = vperm.slane %v3300, 0
  %v3337 = vperm.slane %v3305, 0
  %v3338 = vperm.slane %v3310, 0
  %v3339 = vperm.slane %v3315, 0
  %v3340 = vperm.slane %v3320, 0
  %v3341 = vunpack.c.l.b16 %v3333
  %v3342 = vunpack.c.l.b16 %v3334
  %v3343 = vunpack.c.l.b16 %v3335
  %v3344 = vunpack.c.l.b16 %v3336
  %v3345 = vunpack.c.l.b16 %v3337
  %v3346 = vunpack.c.l.b16 %v3338
  %v3347 = vunpack.c.l.b16 %v3339
  %v3348 = vunpack.c.l.b16 %v3340
  %v3349 = vsel %vm532, %v3342, %v3341
  %v3350 = vsel %vm536, %v3343, %v3349
  %v3351 = vsel %vm540, %v3344, %v3350
  %v3352 = vsel %vm1177, %v3345, %v3351
  %v3353 = vsel %vm1186, %v3346, %v3352
  %v3354 = vsel %vm1195, %v3347, %v3353
  %vm3355 = vcmask 1047559
  %v3356 = vsel %vm3355, %v3348, %v3354
  %v3357 = vpack.c.b16 %v3356, %v3356
  %v3367 = vperm.slane %v3286, 0
  %v3368 = vperm.slane %v3291, 0
  %v3369 = vperm.slane %v3296, 0
  %v3370 = vperm.slane %v3301, 0
  %v3371 = vperm.slane %v3306, 0
  %v3372 = vperm.slane %v3311, 0
  %v3373 = vperm.slane %v3316, 0
  %v3374 = vperm.slane %v3321, 0
  %v3375 = vunpack.c.l.b16 %v3367
  %v3376 = vunpack.c.l.b16 %v3368
  %v3377 = vunpack.c.l.b16 %v3369
  %v3378 = vunpack.c.l.b16 %v3370
  %v3379 = vunpack.c.l.b16 %v3371
  %v3380 = vunpack.c.l.b16 %v3372
  %v3381 = vunpack.c.l.b16 %v3373
  %v3382 = vunpack.c.l.b16 %v3374
  %v3383 = vsel %vm532, %v3376, %v3375
  %v3384 = vsel %vm536, %v3377, %v3383
  %v3385 = vsel %vm540, %v3378, %v3384
  %v3386 = vsel %vm1177, %v3379, %v3385
  %v3387 = vsel %vm1186, %v3380, %v3386
  %v3388 = vsel %vm1195, %v3381, %v3387
  %v3389 = vsel %vm3355, %v3382, %v3388
  %v3390 = vpack.c.b16 %v3389, %v3389
  %v3400 = vperm.slane %v3287, 0
  %v3401 = vperm.slane %v3292, 0
  %v3402 = vperm.slane %v3297, 0
  %v3403 = vperm.slane %v3302, 0
  %v3404 = vperm.slane %v3307, 0
  %v3405 = vperm.slane %v3312, 0
  %v3406 = vperm.slane %v3317, 0
  %v3407 = vperm.slane %v3322, 0
  %v3408 = vunpack.c.l.b16 %v3400
  %v3409 = vunpack.c.l.b16 %v3401
  %v3410 = vunpack.c.l.b16 %v3402
  %v3411 = vunpack.c.l.b16 %v3403
  %v3412 = vunpack.c.l.b16 %v3404
  %v3413 = vunpack.c.l.b16 %v3405
  %v3414 = vunpack.c.l.b16 %v3406
  %v3415 = vunpack.c.l.b16 %v3407
  %v3416 = vsel %vm532, %v3409, %v3408
  %v3417 = vsel %vm536, %v3410, %v3416
  %v3418 = vsel %vm540, %v3411, %v3417
  %v3419 = vsel %vm1177, %v3412, %v3418
  %v3420 = vsel %vm1186, %v3413, %v3419
  %v3421 = vsel %vm1195, %v3414, %v3420
  %v3422 = vsel %vm3355, %v3415, %v3421
  %v3423 = vpack.c.b16 %v3422, %v3422
  %v3433 = vperm.slane %v3288, 0
  %v3434 = vperm.slane %v3293, 0
  %v3435 = vperm.slane %v3298, 0
  %v3436 = vperm.slane %v3303, 0
  %v3437 = vperm.slane %v3308, 0
  %v3438 = vperm.slane %v3313, 0
  %v3439 = vperm.slane %v3318, 0
  %v3440 = vperm.slane %v3323, 0
  %v3441 = vunpack.c.l.b16 %v3433
  %v3442 = vunpack.c.l.b16 %v3434
  %v3443 = vunpack.c.l.b16 %v3435
  %v3444 = vunpack.c.l.b16 %v3436
  %v3445 = vunpack.c.l.b16 %v3437
  %v3446 = vunpack.c.l.b16 %v3438
  %v3447 = vunpack.c.l.b16 %v3439
  %v3448 = vunpack.c.l.b16 %v3440
  %v3449 = vsel %vm532, %v3442, %v3441
  %v3450 = vsel %vm536, %v3443, %v3449
  %v3451 = vsel %vm540, %v3444, %v3450
  %v3452 = vsel %vm1177, %v3445, %v3451
  %v3453 = vsel %vm1186, %v3446, %v3452
  %v3454 = vsel %vm1195, %v3447, %v3453
  %v3455 = vsel %vm3355, %v3448, %v3454
  %v3456 = vpack.c.b16 %v3455, %v3455
  %v3466 = vperm.slane %v3289, 0
  %v3467 = vperm.slane %v3294, 0
  %v3468 = vperm.slane %v3299, 0
  %v3469 = vperm.slane %v3304, 0
  %v3470 = vperm.slane %v3309, 0
  %v3471 = vperm.slane %v3314, 0
  %v3472 = vperm.slane %v3319, 0
  %v3473 = vperm.slane %v3324, 0
  %v3474 = vunpack.c.l.b16 %v3466
  %v3475 = vunpack.c.l.b16 %v3467
  %v3476 = vunpack.c.l.b16 %v3468
  %v3477 = vunpack.c.l.b16 %v3469
  %v3478 = vunpack.c.l.b16 %v3470
  %v3479 = vunpack.c.l.b16 %v3471
  %v3480 = vunpack.c.l.b16 %v3472
  %v3481 = vunpack.c.l.b16 %v3473
  %v3482 = vsel %vm532, %v3475, %v3474
  %v3483 = vsel %vm536, %v3476, %v3482
  %v3484 = vsel %vm540, %v3477, %v3483
  %v3485 = vsel %vm1177, %v3478, %v3484
  %v3486 = vsel %vm1186, %v3479, %v3485
  %v3487 = vsel %vm1195, %v3480, %v3486
  %v3488 = vsel %vm3355, %v3481, %v3487
  %v3489 = vpack.c.b16 %v3488, %v3488
  %v3491 = vld [vmem:[%s3] sm:$0xf]
  %v3492 = vld [vmem:[%s3 + $0x4] sm:$0xf]
  %v3493 = vld [vmem:[%s3 + $0x8] sm:$0xf]
  %v3494 = vld [vmem:[%s3 + $0xc] sm:$0xf]
  %v3495 = vld [vmem:[%s3 + $0x10] sm:$0xf]
  %v3496 = vld [vmem:[%s3 + $0x14] sm:$0xf]
  %v3497 = vld [vmem:[%s3 + $0x18] sm:$0xf]
  %v3498 = vld [vmem:[%s3 + $0x1c] sm:$0xf]
  %v3499 = vld [vmem:[%s3 + $0x20] sm:$0xf]
  %v3500 = vld [vmem:[%s3 + $0x24] sm:$0xf]
  %v3501 = vld [vmem:[%s3 + $0x28] sm:$0xf]
  %v3502 = vld [vmem:[%s3 + $0x2c] sm:$0xf]
  %v3503 = vld [vmem:[%s3 + $0x30] sm:$0xf]
  %v3504 = vld [vmem:[%s3 + $0x34] sm:$0xf]
  %v3505 = vld [vmem:[%s3 + $0x38] sm:$0xf]
  %v3506 = vld [vmem:[%s3 + $0x3c] sm:$0xf]
  %v3507 = vld [vmem:[%s3 + $0x40] sm:$0xf]
  %v3508 = vld [vmem:[%s3 + $0x44] sm:$0xf]
  %v3509 = vld [vmem:[%s3 + $0x48] sm:$0xf]
  %v3510 = vld [vmem:[%s3 + $0x4c] sm:$0xf]
  %v3511 = vld [vmem:[%s3 + $0x50] sm:$0xf]
  %v3512 = vld [vmem:[%s3 + $0x54] sm:$0xf]
  %v3513 = vld [vmem:[%s3 + $0x58] sm:$0xf]
  %v3514 = vld [vmem:[%s3 + $0x5c] sm:$0xf]
  %v3515 = vld [vmem:[%s3 + $0x60] sm:$0xf]
  %v3516 = vld [vmem:[%s3 + $0x64] sm:$0xf]
  %v3517 = vld [vmem:[%s3 + $0x68] sm:$0xf]
  %v3518 = vld [vmem:[%s3 + $0x6c] sm:$0xf]
  %v3519 = vld [vmem:[%s3 + $0x70] sm:$0xf]
  %v3520 = vld [vmem:[%s3 + $0x74] sm:$0xf]
  %v3521 = vld [vmem:[%s3 + $0x78] sm:$0xf]
  %v3522 = vld [vmem:[%s3 + $0x7c] sm:$0xf]
  %v3523 = vld [vmem:[%s3 + $0x80] sm:$0xf]
  %v3524 = vld [vmem:[%s3 + $0x84] sm:$0xf]
  %v3525 = vld [vmem:[%s3 + $0x88] sm:$0xf]
  %v3526 = vld [vmem:[%s3 + $0x8c] sm:$0xf]
  %v3527 = vld [vmem:[%s3 + $0x90] sm:$0xf]
  %v3528 = vld [vmem:[%s3 + $0x94] sm:$0xf]
  %v3529 = vld [vmem:[%s3 + $0x98] sm:$0xf]
  %v3530 = vld [vmem:[%s3 + $0x9c] sm:$0xf]
  %v3531 = vld [vmem:[%s3 + $0xa0] sm:$0xf]
  %v3532 = vld [vmem:[%s3 + $0xa4] sm:$0xf]
  %v3533 = vld [vmem:[%s3 + $0xa8] sm:$0xf]
  %v3534 = vld [vmem:[%s3 + $0xac] sm:$0xf]
  %v3535 = vld [vmem:[%s3 + $0xb0] sm:$0xf]
  %v3536 = vld [vmem:[%s3 + $0xb4] sm:$0xf]
  %v3537 = vld [vmem:[%s3 + $0xb8] sm:$0xf]
  %v3538 = vld [vmem:[%s3 + $0xbc] sm:$0xf]
  %v3539 = vld [vmem:[%s3 + $0xc0] sm:$0xf]
  %v3540 = vld [vmem:[%s3 + $0xc4] sm:$0xf]
  %v3541 = vld [vmem:[%s3 + $0xc8] sm:$0xf]
  %v3542 = vld [vmem:[%s3 + $0xcc] sm:$0xf]
  %v3543 = vld [vmem:[%s3 + $0xd0] sm:$0xf]
  %v3544 = vld [vmem:[%s3 + $0xd4] sm:$0xf]
  %v3545 = vld [vmem:[%s3 + $0xd8] sm:$0xf]
  %v3546 = vld [vmem:[%s3 + $0xdc] sm:$0xf]
  %v3547 = vld [vmem:[%s3 + $0xe0] sm:$0xf]
  %v3548 = vld [vmem:[%s3 + $0xe4] sm:$0xf]
  %v3549 = vld [vmem:[%s3 + $0xe8] sm:$0xf]
  %v3550 = vld [vmem:[%s3 + $0xec] sm:$0xf]
  %v3551 = vld [vmem:[%s3 + $0xf0] sm:$0xf]
  %v3552 = vld [vmem:[%s3 + $0xf4] sm:$0xf]
  %v3553 = vld [vmem:[%s3 + $0xf8] sm:$0xf]
  %v3554 = vld [vmem:[%s3 + $0xfc] sm:$0xf]
  %v3555 = vld [vmem:[%s3 + $0x100] sm:$0xf]
  %v3556 = vld [vmem:[%s3 + $0x104] sm:$0xf]
  %v3557 = vld [vmem:[%s3 + $0x108] sm:$0xf]
  %v3558 = vld [vmem:[%s3 + $0x10c] sm:$0xf]
  %v3559 = vld [vmem:[%s3 + $0x110] sm:$0xf]
  %v3560 = vld [vmem:[%s3 + $0x114] sm:$0xf]
  %v3561 = vld [vmem:[%s3 + $0x118] sm:$0xf]
  %v3562 = vld [vmem:[%s3 + $0x11c] sm:$0xf]
  %v3563 = vld [vmem:[%s3 + $0x120] sm:$0xf]
  %v3564 = vld [vmem:[%s3 + $0x124] sm:$0xf]
  %v3565 = vld [vmem:[%s3 + $0x128] sm:$0xf]
  %v3566 = vld [vmem:[%s3 + $0x12c] sm:$0xf]
  %v3567 = vld [vmem:[%s3 + $0x130] sm:$0xf]
  %v3568 = vld [vmem:[%s3 + $0x134] sm:$0xf]
  %v3569 = vld [vmem:[%s3 + $0x138] sm:$0xf]
  %v3570 = vld [vmem:[%s3 + $0x13c] sm:$0xf]
  %v3571 = vld [vmem:[%s4] sm:$0x1]
  %v3573 = vperm.slane %v3571, 0
  %v3655 = vunpack.c.l.b16 %v3491
  %v3656 = vunpack.c.l.b16 %v3492
  %v3657 = vunpack.c.l.b16 %v3493
  %v3658 = vunpack.c.l.b16 %v3494
  %v3659 = vunpack.c.l.b16 %v3495
  %v3660 = vunpack.c.l.b16 %v3496
  %v3661 = vunpack.c.l.b16 %v3497
  %v3662 = vunpack.c.l.b16 %v3498
  %v3663 = vunpack.c.l.b16 %v3499
  %v3664 = vunpack.c.l.b16 %v3500
  %v3665 = vunpack.c.l.b16 %v3501
  %v3666 = vunpack.c.l.b16 %v3502
  %v3667 = vunpack.c.l.b16 %v3503
  %v3668 = vunpack.c.l.b16 %v3504
  %v3669 = vunpack.c.l.b16 %v3505
  %v3670 = vunpack.c.l.b16 %v3506
  %v3671 = vunpack.c.l.b16 %v3507
  %v3672 = vunpack.c.l.b16 %v3508
  %v3673 = vunpack.c.l.b16 %v3509
  %v3674 = vunpack.c.l.b16 %v3510
  %v3675 = vunpack.c.l.b16 %v3511
  %v3676 = vunpack.c.l.b16 %v3512
  %v3677 = vunpack.c.l.b16 %v3513
  %v3678 = vunpack.c.l.b16 %v3514
  %v3679 = vunpack.c.l.b16 %v3515
  %v3680 = vunpack.c.l.b16 %v3516
  %v3681 = vunpack.c.l.b16 %v3517
  %v3682 = vunpack.c.l.b16 %v3518
  %v3683 = vunpack.c.l.b16 %v3519
  %v3684 = vunpack.c.l.b16 %v3520
  %v3685 = vunpack.c.l.b16 %v3521
  %v3686 = vunpack.c.l.b16 %v3522
  %v3687 = vunpack.c.l.b16 %v3523
  %v3688 = vunpack.c.l.b16 %v3524
  %v3689 = vunpack.c.l.b16 %v3525
  %v3690 = vunpack.c.l.b16 %v3526
  %v3691 = vunpack.c.l.b16 %v3527
  %v3692 = vunpack.c.l.b16 %v3528
  %v3693 = vunpack.c.l.b16 %v3529
  %v3694 = vunpack.c.l.b16 %v3530
  %v3695 = vunpack.c.l.b16 %v3531
  %v3696 = vunpack.c.l.b16 %v3532
  %v3697 = vunpack.c.l.b16 %v3533
  %v3698 = vunpack.c.l.b16 %v3534
  %v3699 = vunpack.c.l.b16 %v3535
  %v3700 = vunpack.c.l.b16 %v3536
  %v3701 = vunpack.c.l.b16 %v3537
  %v3702 = vunpack.c.l.b16 %v3538
  %v3703 = vunpack.c.l.b16 %v3539
  %v3704 = vunpack.c.l.b16 %v3540
  %v3705 = vunpack.c.l.b16 %v3541
  %v3706 = vunpack.c.l.b16 %v3542
  %v3707 = vunpack.c.l.b16 %v3543
  %v3708 = vunpack.c.l.b16 %v3544
  %v3709 = vunpack.c.l.b16 %v3545
  %v3710 = vunpack.c.l.b16 %v3546
  %v3711 = vunpack.c.l.b16 %v3547
  %v3712 = vunpack.c.l.b16 %v3548
  %v3713 = vunpack.c.l.b16 %v3549
  %v3714 = vunpack.c.l.b16 %v3550
  %v3715 = vunpack.c.l.b16 %v3551
  %v3716 = vunpack.c.l.b16 %v3552
  %v3717 = vunpack.c.l.b16 %v3553
  %v3718 = vunpack.c.l.b16 %v3554
  %v3719 = vunpack.c.l.b16 %v3555
  %v3720 = vunpack.c.l.b16 %v3556
  %v3721 = vunpack.c.l.b16 %v3557
  %v3722 = vunpack.c.l.b16 %v3558
  %v3723 = vunpack.c.l.b16 %v3559
  %v3724 = vunpack.c.l.b16 %v3560
  %v3725 = vunpack.c.l.b16 %v3561
  %v3726 = vunpack.c.l.b16 %v3562
  %v3727 = vunpack.c.l.b16 %v3563
  %v3728 = vunpack.c.l.b16 %v3564
  %v3729 = vunpack.c.l.b16 %v3565
  %v3730 = vunpack.c.l.b16 %v3566
  %v3731 = vunpack.c.l.b16 %v3567
  %v3732 = vunpack.c.l.b16 %v3568
  %v3733 = vunpack.c.l.b16 %v3569
  %v3734 = vunpack.c.l.b16 %v3570
  %v3735 = vpack.c.b16 %v3656, %v3655
  %v3736 = vpack.c.b16 %v3658, %v3657
  %v3737 = vpack.c.b16 %v3660, %v3659
  %v3738 = vpack.c.b16 %v3662, %v3661
  %v3739 = vpack.c.b16 %v3664, %v3663
  %v3740 = vpack.c.b16 %v3666, %v3665
  %v3741 = vpack.c.b16 %v3668, %v3667
  %v3742 = vpack.c.b16 %v3670, %v3669
  %v3743 = vpack.c.b16 %v3672, %v3671
  %v3744 = vpack.c.b16 %v3674, %v3673
  %v3745 = vpack.c.b16 %v3676, %v3675
  %v3746 = vpack.c.b16 %v3678, %v3677
  %v3747 = vpack.c.b16 %v3680, %v3679
  %v3748 = vpack.c.b16 %v3682, %v3681
  %v3749 = vpack.c.b16 %v3684, %v3683
  %v3750 = vpack.c.b16 %v3686, %v3685
  %v3751 = vpack.c.b16 %v3688, %v3687
  %v3752 = vpack.c.b16 %v3690, %v3689
  %v3753 = vpack.c.b16 %v3692, %v3691
  %v3754 = vpack.c.b16 %v3694, %v3693
  %v3755 = vpack.c.b16 %v3696, %v3695
  %v3756 = vpack.c.b16 %v3698, %v3697
  %v3757 = vpack.c.b16 %v3700, %v3699
  %v3758 = vpack.c.b16 %v3702, %v3701
  %v3759 = vpack.c.b16 %v3704, %v3703
  %v3760 = vpack.c.b16 %v3706, %v3705
  %v3761 = vpack.c.b16 %v3708, %v3707
  %v3762 = vpack.c.b16 %v3710, %v3709
  %v3763 = vpack.c.b16 %v3712, %v3711
  %v3764 = vpack.c.b16 %v3714, %v3713
  %v3765 = vpack.c.b16 %v3716, %v3715
  %v3766 = vpack.c.b16 %v3718, %v3717
  %v3767 = vpack.c.b16 %v3720, %v3719
  %v3768 = vpack.c.b16 %v3722, %v3721
  %v3769 = vpack.c.b16 %v3724, %v3723
  %v3770 = vpack.c.b16 %v3726, %v3725
  %v3771 = vpack.c.b16 %v3728, %v3727
  %v3772 = vpack.c.b16 %v3730, %v3729
  %v3773 = vpack.c.b16 %v3732, %v3731
  %v3774 = vpack.c.b16 %v3734, %v3733
  %3815 = vmatpush.bf16.msra.mxu0 %v3742
  %3816 = vmatpush.bf16.msra.mxu0 %v3741
  %3817 = vmatpush.bf16.msra.mxu0 %v3740
  %3818 = vmatpush.bf16.msra.mxu0 %v3739
  %3819 = vmatpush.bf16.msra.mxu0 %v3738
  %3820 = vmatpush.bf16.msra.mxu0 %v3737
  %3821 = vmatpush.bf16.msra.mxu0 %v3736
  %3822 = vmatpush.bf16.msra.mxu0 %v3735
  %3823 = vmatmul.bf16.gmra.mxu0 %v3357
  %v3824 = vpop.f32.mrf.mxu0
  %v3825 = vadd.f32 %v3573, %v3824
  %v3826 = vpop.f32.mrf.mxu0
  %3827 = vdwg.mxu0
  %3828 = vmatpush.bf16.msra.mxu0 %v3750
  %3829 = vmatpush.bf16.msra.mxu0 %v3749
  %3830 = vmatpush.bf16.msra.mxu0 %v3748
  %3831 = vmatpush.bf16.msra.mxu0 %v3747
  %3832 = vmatpush.bf16.msra.mxu0 %v3746
  %3833 = vmatpush.bf16.msra.mxu0 %v3745
  %3834 = vmatpush.bf16.msra.mxu0 %v3744
  %3835 = vmatpush.bf16.msra.mxu0 %v3743
  %3836 = vmatmul.bf16.gmra.mxu0 %v3390
  %v3837 = vpop.f32.mrf.mxu0
  %v3838 = vadd.f32 %v3825, %v3837
  %v3839 = vpop.f32.mrf.mxu0
  %3840 = vdwg.mxu0
  %3841 = vmatpush.bf16.msra.mxu0 %v3758
  %3842 = vmatpush.bf16.msra.mxu0 %v3757
  %3843 = vmatpush.bf16.msra.mxu0 %v3756
  %3844 = vmatpush.bf16.msra.mxu0 %v3755
  %3845 = vmatpush.bf16.msra.mxu0 %v3754
  %3846 = vmatpush.bf16.msra.mxu0 %v3753
  %3847 = vmatpush.bf16.msra.mxu0 %v3752
  %3848 = vmatpush.bf16.msra.mxu0 %v3751
  %3849 = vmatmul.bf16.gmra.mxu0 %v3423
  %v3850 = vpop.f32.mrf.mxu0
  %v3851 = vadd.f32 %v3838, %v3850
  %v3852 = vpop.f32.mrf.mxu0
  %3853 = vdwg.mxu0
  %3854 = vmatpush.bf16.msra.mxu0 %v3766
  %3855 = vmatpush.bf16.msra.mxu0 %v3765
  %3856 = vmatpush.bf16.msra.mxu0 %v3764
  %3857 = vmatpush.bf16.msra.mxu0 %v3763
  %3858 = vmatpush.bf16.msra.mxu0 %v3762
  %3859 = vmatpush.bf16.msra.mxu0 %v3761
  %3860 = vmatpush.bf16.msra.mxu0 %v3760
  %3861 = vmatpush.bf16.msra.mxu0 %v3759
  %3862 = vmatmul.bf16.gmra.mxu0 %v3456
  %v3863 = vpop.f32.mrf.mxu0
  %v3864 = vadd.f32 %v3851, %v3863
  %v3865 = vpop.f32.mrf.mxu0
  %3866 = vdwg.mxu0
  %3867 = vmatpush.bf16.msra.mxu0 %v3774
  %3868 = vmatpush.bf16.msra.mxu0 %v3773
  %3869 = vmatpush.bf16.msra.mxu0 %v3772
  %3870 = vmatpush.bf16.msra.mxu0 %v3771
  %3871 = vmatpush.bf16.msra.mxu0 %v3770
  %3872 = vmatpush.bf16.msra.mxu0 %v3769
  %3873 = vmatpush.bf16.msra.mxu0 %v3768
  %3874 = vmatpush.bf16.msra.mxu0 %v3767
  %3875 = vmatmul.bf16.gmra.mxu0 %v3489
  %v3876 = vpop.f32.mrf.mxu0
  %v3877 = vadd.f32 %v3864, %v3876
  %v3878 = vpop.f32.mrf.mxu0
  %3879 = vdwg.mxu0
  %3880 = vst [vmem:[%s5] sm:$0xff] %v3877
  // Predicated region
  $region22: #{lenet_forward.1} parent=0 // pred_check
    _
  $region23: #{lenet_forward.1} parent=0 // pred_check_branch
    %3882 = sbr.rel (0) target = $region25
  $region24: #{lenet_forward.1} parent=0 // pred_region
    _
  $region25: #{lenet_forward.1} parent=0 // pred_fallthru
    _
  // Predicated region
  $region26: #{lenet_forward.1} parent=0 // pred_check
    _
  $region27: #{lenet_forward.1} parent=0 // pred_check_branch
    %3884 = sbr.rel (0) target = $region29
  $region28: #{lenet_forward.1} parent=0 // pred_region
    _
  $region29: #{lenet_forward.1} parent=0 // pred_fallthru
    _

</llo_original>
